<compile_context>
chip_gen: v6e
topology: v6e:2x2x1
jax: 0.10.0
libtpu: 0.0.40
codegen_flags: <defaults>
</compile_context>

<pallas_src>
import jax
import jax.numpy as jnp
from jax.experimental import pallas as pl
from jax.experimental.pallas import tpu as pltpu


HIDDEN = 768
B_TILE = 128      # MXU-friendly M tile (matches 128x128 v5e MXU tile)
LANE = 128        # lane-dense output width


def _head_kernel(cls_ref, w1_ref, b1_ref, w2_ref, b2_ref, out_ref):
    # cls_ref: (B_TILE, H) bf16 — CLS rows for this grid step.
    cls = cls_ref[...]

    # pre_classifier: Linear(768, 768), bf16 inputs, f32 accumulation.
    h = jnp.dot(cls, w1_ref[...], preferred_element_type=jnp.float32) + b1_ref[...]
    # tanh activation in f32 (EUP).
    h = jnp.tanh(h)
    # dropout: inference-mode semantics (identity). Training-mode masking would use
    # pltpu.prng_random_bits with 1/(1-p) scaling.
    # classifier: Linear(768, n_out_padded), bf16 inputs, f32 accumulation.
    out = jnp.dot(h.astype(jnp.bfloat16), w2_ref[...],
                  preferred_element_type=jnp.float32) + b2_ref[...]
    out_ref[...] = out.astype(out_ref.dtype)


def multi_class_only_head(hidden_state, w1, b1, w2, b2):
    """hidden_state: (B, S, 768) f32; w1:(768,768) b1:(1,768) w2:(768,n_out) b2:(1,n_out).

    Returns logits (B, n_out) f32.
    """
    B, S, H = hidden_state.shape
    n_out = w2.shape[1]

    # --- CLS extraction + bf16 cast in the wrapper: only B x H moves HBM->VMEM ---
    cls = hidden_state[:, 0, :].astype(jnp.bfloat16)                 # (B, H)

    # --- pad batch to a multiple of the M tile ---
    n_blocks = pl.cdiv(B, B_TILE)
    b_pad = n_blocks * B_TILE
    if b_pad != B:
        cls = jnp.pad(cls, ((0, b_pad - B), (0, 0)))

    # --- lane-dense output: zero-pad n_out up to a multiple of 128 ---
    n_pad = pl.cdiv(n_out, LANE) * LANE
    w1_bf = w1.astype(jnp.bfloat16)
    b1_f = b1.astype(jnp.float32)
    w2_bf = jnp.pad(w2, ((0, 0), (0, n_pad - n_out))).astype(jnp.bfloat16)
    b2_f = jnp.pad(b2, ((0, 0), (0, n_pad - n_out))).astype(jnp.float32)

    grid_spec = pl.GridSpec(
        grid=(n_blocks,),
        in_specs=[
            pl.BlockSpec((B_TILE, H), lambda i: (i, 0)),   # CLS rows: tiled over B
            pl.BlockSpec((H, H), lambda i: (0, 0)),        # W1: resident
            pl.BlockSpec((1, H), lambda i: (0, 0)),        # b1: resident
            pl.BlockSpec((H, n_pad), lambda i: (0, 0)),    # W2 (padded): resident
            pl.BlockSpec((1, n_pad), lambda i: (0, 0)),    # b2 (padded): resident
        ],
        out_specs=pl.BlockSpec((B_TILE, n_pad), lambda i: (i, 0)),
    )

    out_padded = pl.pallas_call(
        _head_kernel,
        out_shape=jax.ShapeDtypeStruct((b_pad, n_pad), jnp.float32),
        grid_spec=grid_spec,
        compiler_params=pltpu.CompilerParams(
            # B axis is independent -> shardable across v7x's two TensorCores.
            dimension_semantics=("parallel",),
        ),
    )(cls, w1_bf, b1_f, w2_bf, b2_f)

    # Slice away batch padding and lane padding.
    return out_padded[:B, :n_out]


if __name__ == "__main__":
    key = jax.random.PRNGKey(0)
    k_emb, k_w1, k_b1, k_w2, k_b2, k_ids = jax.random.split(key, 6)

    B, S = 2, 8          # small batch / sequence
    VOCAB = 128
    N_OUT = 8            # n_out for the multi-class head
    DROPOUT = 0.1        # unused at inference (identity)

    # --- synthetic deterministic "BERT" hidden states (backbone not translated) ---
    input_ids = jax.random.randint(k_ids, (B, S), 0, VOCAB)
    emb_table = jax.random.normal(k_emb, (VOCAB, HIDDEN), dtype=jnp.float32) * 0.02
    hidden_state = emb_table[input_ids]                      # (B, S, 768)

    # --- head parameters (deterministic init, (in, out) layout) ---
    w1 = jax.random.normal(k_w1, (HIDDEN, HIDDEN), dtype=jnp.float32) * 0.02
    b1 = jax.random.normal(k_b1, (1, HIDDEN), dtype=jnp.float32) * 0.02
    w2 = jax.random.normal(k_w2, (HIDDEN, N_OUT), dtype=jnp.float32) * 0.02
    b2 = jax.random.normal(k_b2, (1, N_OUT), dtype=jnp.float32) * 0.02

    logits = multi_class_only_head(hidden_state, w1, b1, w2, b2)
    logits = jax.block_until_ready(logits)

    # reference check in plain-JAX f32 (kernel uses bf16 MXU inputs -> loose tol)
    cls_ref = hidden_state[:, 0, :]
    ref = jnp.tanh(cls_ref @ w1 + b1) @ w2 + b2
    assert logits.shape == (B, N_OUT)
    assert jnp.allclose(logits, ref, atol=2e-2, rtol=2e-2), (
        jnp.max(jnp.abs(logits - ref)))

    print("KERNEL_OK")
</pallas_src>

<mosaic_0001>
module attributes {stable_mosaic.version = 11 : i64} {
  func.func @_head_kernel(%arg0: i32, %arg1: memref<128x768xbf16, #tpu.memory_space<vmem>>, %arg2: memref<768x768xbf16, #tpu.memory_space<vmem>>, %arg3: memref<1x768xf32, #tpu.memory_space<vmem>>, %arg4: memref<768x128xbf16, #tpu.memory_space<vmem>>, %arg5: memref<1x128xf32, #tpu.memory_space<vmem>>, %arg6: memref<128x128xf32, #tpu.memory_space<vmem>>) attributes {dimension_semantics = [#tpu.dimension_semantics<parallel>], iteration_bounds = array<i64: 1>, scalar_prefetch = 0 : i64, scratch_operands = 0 : i64, tpu.core_type = #tpu.core_type<tc>, window_params = [{transform_indices = @transform_0, window_bounds = array<i64: 128, 768>}, {pipeline_mode = #tpu.pipeline_mode<synchronous>, transform_indices = @transform_1, window_bounds = array<i64: 768, 768>}, {pipeline_mode = #tpu.pipeline_mode<synchronous>, transform_indices = @transform_2, window_bounds = array<i64: 1, 768>}, {pipeline_mode = #tpu.pipeline_mode<synchronous>, transform_indices = @transform_3, window_bounds = array<i64: 768, 128>}, {pipeline_mode = #tpu.pipeline_mode<synchronous>, transform_indices = @transform_4, window_bounds = array<i64: 1, 128>}, {transform_indices = @transform_5, window_bounds = array<i64: 128, 128>}]} {
    %c0 = arith.constant 0 : index
    %c0_0 = arith.constant 0 : index
    %0 = vector.load %arg1[%c0, %c0_0] : memref<128x768xbf16, #tpu.memory_space<vmem>>, vector<128x768xbf16>
    %c0_1 = arith.constant 0 : index
    %c0_2 = arith.constant 0 : index
    %1 = vector.load %arg2[%c0_1, %c0_2] : memref<768x768xbf16, #tpu.memory_space<vmem>>, vector<768x768xbf16>
    %cst = arith.constant dense<0.000000e+00> : vector<128x768xf32>
    %2 = tpu.matmul %0, %1, %cst {dimension_numbers = #tpu.dot_dimension_numbers<[1], [0], [0], [1], [0, 0, 1, 1], [], []>} : vector<128x768xbf16>, vector<768x768xbf16>, vector<128x768xf32> -> vector<128x768xf32>
    %c0_3 = arith.constant 0 : index
    %c0_4 = arith.constant 0 : index
    %3 = vector.load %arg3[%c0_3, %c0_4] : memref<1x768xf32, #tpu.memory_space<vmem>>, vector<1x768xf32>
    %4 = vector.broadcast %3 : vector<1x768xf32> to vector<128x768xf32>
    %5 = arith.addf %2, %4 : vector<128x768xf32>
    %6 = math.tanh %5 : vector<128x768xf32>
    %7 = arith.truncf %6 : vector<128x768xf32> to vector<128x768xbf16>
    %c0_5 = arith.constant 0 : index
    %c0_6 = arith.constant 0 : index
    %8 = vector.load %arg4[%c0_5, %c0_6] : memref<768x128xbf16, #tpu.memory_space<vmem>>, vector<768x128xbf16>
    %cst_7 = arith.constant dense<0.000000e+00> : vector<128x128xf32>
    %9 = tpu.matmul %7, %8, %cst_7 {dimension_numbers = #tpu.dot_dimension_numbers<[1], [0], [0], [1], [0, 0, 1, 1], [], []>} : vector<128x768xbf16>, vector<768x128xbf16>, vector<128x128xf32> -> vector<128x128xf32>
    %c0_8 = arith.constant 0 : index
    %c0_9 = arith.constant 0 : index
    %10 = vector.load %arg5[%c0_8, %c0_9] : memref<1x128xf32, #tpu.memory_space<vmem>>, vector<1x128xf32>
    %11 = vector.broadcast %10 : vector<1x128xf32> to vector<128x128xf32>
    %12 = arith.addf %9, %11 : vector<128x128xf32>
    %c0_10 = arith.constant 0 : index
    %c0_11 = arith.constant 0 : index
    %13 = vector.load %arg6[%c0_10, %c0_11] : memref<128x128xf32, #tpu.memory_space<vmem>>, vector<128x128xf32>
    tpu.vector_store %arg6[%c0_10, %c0_11], %12 {strides = array<i32>} : memref<128x128xf32, #tpu.memory_space<vmem>>, vector<128x128xf32>,
    return
  }
  func.func @transform_0(%arg0: i32) -> (i32, i32) {
    %c0_i32 = arith.constant 0 : i32
    %c0_i32_0 = arith.constant 0 : i32
    return %arg0, %c0_i32 : i32, i32
  }
  func.func @transform_1(%arg0: i32) -> (i32, i32) {
    %c0_i32 = arith.constant 0 : i32
    %c0_i32_0 = arith.constant 0 : i32
    %c0_i32_1 = arith.constant 0 : i32
    return %c0_i32, %c0_i32_0 : i32, i32
  }
  func.func @transform_2(%arg0: i32) -> (i32, i32) {
    %c0_i32 = arith.constant 0 : i32
    %c0_i32_0 = arith.constant 0 : i32
    %c0_i32_1 = arith.constant 0 : i32
    return %c0_i32, %c0_i32_0 : i32, i32
  }
  func.func @transform_3(%arg0: i32) -> (i32, i32) {
    %c0_i32 = arith.constant 0 : i32
    %c0_i32_0 = arith.constant 0 : i32
    %c0_i32_1 = arith.constant 0 : i32
    return %c0_i32, %c0_i32_0 : i32, i32
  }
  func.func @transform_4(%arg0: i32) -> (i32, i32) {
    %c0_i32 = arith.constant 0 : i32
    %c0_i32_0 = arith.constant 0 : i32
    %c0_i32_1 = arith.constant 0 : i32
    return %c0_i32, %c0_i32_0 : i32, i32
  }
  func.func @transform_5(%arg0: i32) -> (i32, i32) {
    %c0_i32 = arith.constant 0 : i32
    %c0_i32_0 = arith.constant 0 : i32
    return %arg0, %c0_i32 : i32, i32
  }
}

</mosaic_0001>

<llo_original>
// kernel: tpu_custom_call.1
$region0: #{tpu_custom_call.1}
  #allocation0 [shape = 'u32[]', space=smem, size = 0x4, offset = 0x4, fixed_abs, tag = 'smem constant byte address 0x4 - core index']
  #allocation1 [shape = 'u32[144,128]{1,0:T(1,128)}', space=vmem, size = 0x12000, scoped, tag = 'internal scratch']
  %s0 = inlined_call_operand.hbm [shape: bf16[128,768], index: 0, kind: input, shape index: {}]
  %s1 = inlined_call_operand.hbm [shape: bf16[768,768], index: 1, kind: input, shape index: {}]
  %s2 = inlined_call_operand.hbm [shape: f32[1,768], index: 2, kind: input, shape index: {}]
  %s3 = inlined_call_operand.hbm [shape: bf16[768,128], index: 3, kind: input, shape index: {}]
  %s4 = inlined_call_operand.hbm [shape: f32[1,128], index: 4, kind: input, shape index: {}]
  %s5 = inlined_call_operand.hbm [shape: f32[128,128], index: 5, kind: output, shape index: {}]
  %s6 = sld [smem:[#allocation0]]
  $region50: #{tpu_custom_call.1} parent=0
    _
  %s8 = ssub.s32 1, %s6
  %s9 = scalar_select 0, %s8, %s6
  $region1: #{tpu_custom_call.1} parent=0
    #allocation2 [shape = 'u8[196608]{0}', space=vmem, size = 0x30000, scoped, tag = 'input window, operand 0, single buffered']
    #allocation3 [shape = 's32[1]{0}', space=sflag, size = 0x4, scoped, tag = 'scoped memory for tpu_custom_call.1']
    #allocation4 [shape = 's32[1]{0}', space=sflag, size = 0x4, scoped, tag = 'scoped memory for tpu_custom_call.1']
    #allocation5 [shape = 'u8[1179648]{0}', space=vmem, size = 0x120000, scoped, tag = 'input window, operand 1, single buffered']
    #allocation6 [shape = 's32[1]{0}', space=sflag, size = 0x4, scoped, tag = 'scoped memory for tpu_custom_call.1']
    #allocation7 [shape = 'u8[3072]{0}', space=vmem, size = 0xc00, scoped, tag = 'input window, operand 2, single buffered']
    #allocation8 [shape = 'u8[196608]{0}', space=vmem, size = 0x30000, scoped, tag = 'input window, operand 3, single buffered']
    #allocation9 [shape = 's32[1]{0}', space=sflag, size = 0x4, scoped, tag = 'scoped memory for tpu_custom_call.1']
    #allocation10 [shape = 'u8[512]{0}', space=vmem, size = 0x400, scoped, tag = 'input window, operand 4, single buffered']
    #allocation11 [shape = 'u8[65536]{0}', space=vmem, size = 0x10000, scoped, tag = 'output window, operand 0, single buffered']
    %10 = vsyncpa [#allocation3], 0
    %11 = vsyncpa [#allocation6], 0
    %12 = vsyncpa [#allocation9], 0
    %13 = vsyncpa [#allocation4], 0
    // Predicated region
    $region2: #{tpu_custom_call.1} parent=1 // pred_check
      _
    $region3: #{tpu_custom_call.1} parent=1 // pred_check_branch
      %15 = sbr.rel (0) target = $region5
    $region4: #{tpu_custom_call.1} parent=1 // pred_region
      %s17 = ssub.s32 6144, 6144
      %18 = vsyncadd [#allocation3], %s17
      %s19 = sshll.u32 [#allocation2], 4
      %s20 = int_to_ptr.vmem [resolvable:$true] %s19
      %25 = dma.hbm_to_vmem [thread:$0]  %s0, 6144, %s20, [#allocation3], 384, 384, 24
    $region5: #{tpu_custom_call.1} parent=1 // pred_fallthru
      _
    // Predicated region
    $region6: #{tpu_custom_call.1} parent=1 // pred_check
      _
    $region7: #{tpu_custom_call.1} parent=1 // pred_check_branch
      %27 = sbr.rel (0) target = $region9
    $region8: #{tpu_custom_call.1} parent=1 // pred_region
      %s29 = ssub.s32 36864, 36864
      %30 = vsyncadd [#allocation6], %s29
      %s31 = sshll.u32 [#allocation5], 4
      %s32 = int_to_ptr.vmem [resolvable:$true] %s31
      %37 = dma.hbm_to_vmem [thread:$0]  %s1, 36864, %s32, [#allocation6], 384, 384, 24
    $region9: #{tpu_custom_call.1} parent=1 // pred_fallthru
      _
    // Predicated region
    $region10: #{tpu_custom_call.1} parent=1 // pred_check
      _
    $region11: #{tpu_custom_call.1} parent=1 // pred_check_branch
      %39 = sbr.rel (0) target = $region13
    $region12: #{tpu_custom_call.1} parent=1 // pred_region
      %s41 = ssub.s32 96, 96
      %42 = vsyncadd [#allocation6], %s41
      %s44 = sshll.u32 [#allocation7], 4
      %s45 = int_to_ptr.vmem [resolvable:$true] %s44
      %47 = dma.hbm_to_vmem [thread:$0]  %s2, 96, %s45, [#allocation6]
    $region13: #{tpu_custom_call.1} parent=1 // pred_fallthru
      _
    // Predicated region
    $region14: #{tpu_custom_call.1} parent=1 // pred_check
      _
    $region15: #{tpu_custom_call.1} parent=1 // pred_check_branch
      %49 = sbr.rel (0) target = $region17
    $region16: #{tpu_custom_call.1} parent=1 // pred_region
      %s51 = ssub.s32 6144, 6144
      %52 = vsyncadd [#allocation9], %s51
      %s53 = sshll.u32 [#allocation8], 4
      %s54 = int_to_ptr.vmem [resolvable:$true] %s53
      %59 = dma.hbm_to_vmem [thread:$0]  %s3, 6144, %s54, [#allocation9], 64, 64, 4
    $region17: #{tpu_custom_call.1} parent=1 // pred_fallthru
      _
    // Predicated region
    $region18: #{tpu_custom_call.1} parent=1 // pred_check
      _
    $region19: #{tpu_custom_call.1} parent=1 // pred_check_branch
      %61 = sbr.rel (0) target = $region21
    $region20: #{tpu_custom_call.1} parent=1 // pred_region
      %s63 = ssub.s32 16, 16
      %64 = vsyncadd [#allocation9], %s63
      %s66 = sshll.u32 [#allocation10], 4
      %s67 = int_to_ptr.vmem [resolvable:$true] %s66
      %69 = dma.hbm_to_vmem [thread:$0]  %s4, 16, %s67, [#allocation9]
    $region21: #{tpu_custom_call.1} parent=1 // pred_fallthru
      _
    // Predicated region
    $region22: #{tpu_custom_call.1} parent=1 // pred_check
      _
    $region23: #{tpu_custom_call.1} parent=1 // pred_check_branch
      %71 = sbr.rel (0) target = $region25
    $region24: #{tpu_custom_call.1} parent=1 // pred_region
      %72 = dma.done [#allocation3], 6144
    $region25: #{tpu_custom_call.1} parent=1 // pred_fallthru
      _
    // Predicated region
    $region26: #{tpu_custom_call.1} parent=1 // pred_check
      _
    $region27: #{tpu_custom_call.1} parent=1 // pred_check_branch
      %74 = sbr.rel (0) target = $region29
    $region28: #{tpu_custom_call.1} parent=1 // pred_region
      %75 = dma.done [#allocation6], 36864
    $region29: #{tpu_custom_call.1} parent=1 // pred_fallthru
      _
    // Predicated region
    $region30: #{tpu_custom_call.1} parent=1 // pred_check
      _
    $region31: #{tpu_custom_call.1} parent=1 // pred_check_branch
      %77 = sbr.rel (0) target = $region33
    $region32: #{tpu_custom_call.1} parent=1 // pred_region
      %78 = dma.done [#allocation6], 96
    $region33: #{tpu_custom_call.1} parent=1 // pred_fallthru
      _
    // Predicated region
    $region34: #{tpu_custom_call.1} parent=1 // pred_check
      _
    $region35: #{tpu_custom_call.1} parent=1 // pred_check_branch
      %80 = sbr.rel (0) target = $region37
    $region36: #{tpu_custom_call.1} parent=1 // pred_region
      %81 = dma.done [#allocation9], 6144
    $region37: #{tpu_custom_call.1} parent=1 // pred_fallthru
      _
    // Predicated region
    $region38: #{tpu_custom_call.1} parent=1 // pred_check
      _
    $region39: #{tpu_custom_call.1} parent=1 // pred_check_branch
      %83 = sbr.rel (0) target = $region41
    $region40: #{tpu_custom_call.1} parent=1 // pred_region
      %84 = dma.done [#allocation9], 16
    $region41: #{tpu_custom_call.1} parent=1 // pred_fallthru
      _
    %v86 = vld [vmem:[#allocation2] sm:$0xff]
    %v87 = vld [vmem:[#allocation2 + $0x8] sm:$0xff]
    %v88 = vld [vmem:[#allocation2 + $0x10] sm:$0xff]
    %v89 = vld [vmem:[#allocation2 + $0x18] sm:$0xff]
    %v90 = vld [vmem:[#allocation2 + $0x20] sm:$0xff]
    %v91 = vld [vmem:[#allocation2 + $0x28] sm:$0xff]
    %v92 = vld [vmem:[#allocation2 + $0x30] sm:$0xff]
    %v93 = vld [vmem:[#allocation2 + $0x38] sm:$0xff]
    %v94 = vld [vmem:[#allocation2 + $0x40] sm:$0xff]
    %v95 = vld [vmem:[#allocation2 + $0x48] sm:$0xff]
    %v96 = vld [vmem:[#allocation2 + $0x50] sm:$0xff]
    %v97 = vld [vmem:[#allocation2 + $0x58] sm:$0xff]
    %v98 = vld [vmem:[#allocation2 + $0x60] sm:$0xff]
    %v99 = vld [vmem:[#allocation2 + $0x68] sm:$0xff]
    %v100 = vld [vmem:[#allocation2 + $0x70] sm:$0xff]
    %v101 = vld [vmem:[#allocation2 + $0x78] sm:$0xff]
    %v102 = vld [vmem:[#allocation2 + $0x80] sm:$0xff]
    %v103 = vld [vmem:[#allocation2 + $0x88] sm:$0xff]
    %v104 = vld [vmem:[#allocation2 + $0x90] sm:$0xff]
    %v105 = vld [vmem:[#allocation2 + $0x98] sm:$0xff]
    %v106 = vld [vmem:[#allocation2 + $0xa0] sm:$0xff]
    %v107 = vld [vmem:[#allocation2 + $0xa8] sm:$0xff]
    %v108 = vld [vmem:[#allocation2 + $0xb0] sm:$0xff]
    %v109 = vld [vmem:[#allocation2 + $0xb8] sm:$0xff]
    %v110 = vld [vmem:[#allocation2 + $0xc0] sm:$0xff]
    %v111 = vld [vmem:[#allocation2 + $0xc8] sm:$0xff]
    %v112 = vld [vmem:[#allocation2 + $0xd0] sm:$0xff]
    %v113 = vld [vmem:[#allocation2 + $0xd8] sm:$0xff]
    %v114 = vld [vmem:[#allocation2 + $0xe0] sm:$0xff]
    %v115 = vld [vmem:[#allocation2 + $0xe8] sm:$0xff]
    %v116 = vld [vmem:[#allocation2 + $0xf0] sm:$0xff]
    %v117 = vld [vmem:[#allocation2 + $0xf8] sm:$0xff]
    %v118 = vld [vmem:[#allocation2 + $0x100] sm:$0xff]
    %v119 = vld [vmem:[#allocation2 + $0x108] sm:$0xff]
    %v120 = vld [vmem:[#allocation2 + $0x110] sm:$0xff]
    %v121 = vld [vmem:[#allocation2 + $0x118] sm:$0xff]
    %v122 = vld [vmem:[#allocation2 + $0x120] sm:$0xff]
    %v123 = vld [vmem:[#allocation2 + $0x128] sm:$0xff]
    %v124 = vld [vmem:[#allocation2 + $0x130] sm:$0xff]
    %v125 = vld [vmem:[#allocation2 + $0x138] sm:$0xff]
    %v126 = vld [vmem:[#allocation2 + $0x140] sm:$0xff]
    %v127 = vld [vmem:[#allocation2 + $0x148] sm:$0xff]
    %v128 = vld [vmem:[#allocation2 + $0x150] sm:$0xff]
    %v129 = vld [vmem:[#allocation2 + $0x158] sm:$0xff]
    %v130 = vld [vmem:[#allocation2 + $0x160] sm:$0xff]
    %v131 = vld [vmem:[#allocation2 + $0x168] sm:$0xff]
    %v132 = vld [vmem:[#allocation2 + $0x170] sm:$0xff]
    %v133 = vld [vmem:[#allocation2 + $0x178] sm:$0xff]
    %v134 = vld [vmem:[#allocation5] sm:$0xff]
    %v135 = vld [vmem:[#allocation5 + $0x8] sm:$0xff]
    %v136 = vld [vmem:[#allocation5 + $0x10] sm:$0xff]
    %v137 = vld [vmem:[#allocation5 + $0x18] sm:$0xff]
    %v138 = vld [vmem:[#allocation5 + $0x20] sm:$0xff]
    %v139 = vld [vmem:[#allocation5 + $0x28] sm:$0xff]
    %v140 = vld [vmem:[#allocation5 + $0x30] sm:$0xff]
    %v141 = vld [vmem:[#allocation5 + $0x38] sm:$0xff]
    %v142 = vld [vmem:[#allocation5 + $0x40] sm:$0xff]
    %v143 = vld [vmem:[#allocation5 + $0x48] sm:$0xff]
    %v144 = vld [vmem:[#allocation5 + $0x50] sm:$0xff]
    %v145 = vld [vmem:[#allocation5 + $0x58] sm:$0xff]
    %v146 = vld [vmem:[#allocation5 + $0x60] sm:$0xff]
    %v147 = vld [vmem:[#allocation5 + $0x68] sm:$0xff]
    %v148 = vld [vmem:[#allocation5 + $0x70] sm:$0xff]
    %v149 = vld [vmem:[#allocation5 + $0x78] sm:$0xff]
    %v150 = vld [vmem:[#allocation5 + $0x80] sm:$0xff]
    %v151 = vld [vmem:[#allocation5 + $0x88] sm:$0xff]
    %v152 = vld [vmem:[#allocation5 + $0x90] sm:$0xff]
    %v153 = vld [vmem:[#allocation5 + $0x98] sm:$0xff]
    %v154 = vld [vmem:[#allocation5 + $0xa0] sm:$0xff]
    %v155 = vld [vmem:[#allocation5 + $0xa8] sm:$0xff]
    %v156 = vld [vmem:[#allocation5 + $0xb0] sm:$0xff]
    %v157 = vld [vmem:[#allocation5 + $0xb8] sm:$0xff]
    %v158 = vld [vmem:[#allocation5 + $0xc0] sm:$0xff]
    %v159 = vld [vmem:[#allocation5 + $0xc8] sm:$0xff]
    %v160 = vld [vmem:[#allocation5 + $0xd0] sm:$0xff]
    %v161 = vld [vmem:[#allocation5 + $0xd8] sm:$0xff]
    %v162 = vld [vmem:[#allocation5 + $0xe0] sm:$0xff]
    %v163 = vld [vmem:[#allocation5 + $0xe8] sm:$0xff]
    %v164 = vld [vmem:[#allocation5 + $0xf0] sm:$0xff]
    %v165 = vld [vmem:[#allocation5 + $0xf8] sm:$0xff]
    %v166 = vld [vmem:[#allocation5 + $0x100] sm:$0xff]
    %v167 = vld [vmem:[#allocation5 + $0x108] sm:$0xff]
    %v168 = vld [vmem:[#allocation5 + $0x110] sm:$0xff]
    %v169 = vld [vmem:[#allocation5 + $0x118] sm:$0xff]
    %v170 = vld [vmem:[#allocation5 + $0x120] sm:$0xff]
    %v171 = vld [vmem:[#allocation5 + $0x128] sm:$0xff]
    %v172 = vld [vmem:[#allocation5 + $0x130] sm:$0xff]
    %v173 = vld [vmem:[#allocation5 + $0x138] sm:$0xff]
    %v174 = vld [vmem:[#allocation5 + $0x140] sm:$0xff]
    %v175 = vld [vmem:[#allocation5 + $0x148] sm:$0xff]
    %v176 = vld [vmem:[#allocation5 + $0x150] sm:$0xff]
    %v177 = vld [vmem:[#allocation5 + $0x158] sm:$0xff]
    %v178 = vld [vmem:[#allocation5 + $0x160] sm:$0xff]
    %v179 = vld [vmem:[#allocation5 + $0x168] sm:$0xff]
    %v180 = vld [vmem:[#allocation5 + $0x170] sm:$0xff]
    %v181 = vld [vmem:[#allocation5 + $0x178] sm:$0xff]
    %v182 = vld [vmem:[#allocation5 + $0x180] sm:$0xff]
    %v183 = vld [vmem:[#allocation5 + $0x188] sm:$0xff]
    %v184 = vld [vmem:[#allocation5 + $0x190] sm:$0xff]
    %v185 = vld [vmem:[#allocation5 + $0x198] sm:$0xff]
    %v186 = vld [vmem:[#allocation5 + $0x1a0] sm:$0xff]
    %v187 = vld [vmem:[#allocation5 + $0x1a8] sm:$0xff]
    %v188 = vld [vmem:[#allocation5 + $0x1b0] sm:$0xff]
    %v189 = vld [vmem:[#allocation5 + $0x1b8] sm:$0xff]
    %v190 = vld [vmem:[#allocation5 + $0x1c0] sm:$0xff]
    %v191 = vld [vmem:[#allocation5 + $0x1c8] sm:$0xff]
    %v192 = vld [vmem:[#allocation5 + $0x1d0] sm:$0xff]
    %v193 = vld [vmem:[#allocation5 + $0x1d8] sm:$0xff]
    %v194 = vld [vmem:[#allocation5 + $0x1e0] sm:$0xff]
    %v195 = vld [vmem:[#allocation5 + $0x1e8] sm:$0xff]
    %v196 = vld [vmem:[#allocation5 + $0x1f0] sm:$0xff]
    %v197 = vld [vmem:[#allocation5 + $0x1f8] sm:$0xff]
    %v198 = vld [vmem:[#allocation5 + $0x200] sm:$0xff]
    %v199 = vld [vmem:[#allocation5 + $0x208] sm:$0xff]
    %v200 = vld [vmem:[#allocation5 + $0x210] sm:$0xff]
    %v201 = vld [vmem:[#allocation5 + $0x218] sm:$0xff]
    %v202 = vld [vmem:[#allocation5 + $0x220] sm:$0xff]
    %v203 = vld [vmem:[#allocation5 + $0x228] sm:$0xff]
    %v204 = vld [vmem:[#allocation5 + $0x230] sm:$0xff]
    %v205 = vld [vmem:[#allocation5 + $0x238] sm:$0xff]
    %v206 = vld [vmem:[#allocation5 + $0x240] sm:$0xff]
    %v207 = vld [vmem:[#allocation5 + $0x248] sm:$0xff]
    %v208 = vld [vmem:[#allocation5 + $0x250] sm:$0xff]
    %v209 = vld [vmem:[#allocation5 + $0x258] sm:$0xff]
    %v210 = vld [vmem:[#allocation5 + $0x260] sm:$0xff]
    %v211 = vld [vmem:[#allocation5 + $0x268] sm:$0xff]
    %v212 = vld [vmem:[#allocation5 + $0x270] sm:$0xff]
    %v213 = vld [vmem:[#allocation5 + $0x278] sm:$0xff]
    %v214 = vld [vmem:[#allocation5 + $0x280] sm:$0xff]
    %v215 = vld [vmem:[#allocation5 + $0x288] sm:$0xff]
    %v216 = vld [vmem:[#allocation5 + $0x290] sm:$0xff]
    %v217 = vld [vmem:[#allocation5 + $0x298] sm:$0xff]
    %v218 = vld [vmem:[#allocation5 + $0x2a0] sm:$0xff]
    %v219 = vld [vmem:[#allocation5 + $0x2a8] sm:$0xff]
    %v220 = vld [vmem:[#allocation5 + $0x2b0] sm:$0xff]
    %v221 = vld [vmem:[#allocation5 + $0x2b8] sm:$0xff]
    %v222 = vld [vmem:[#allocation5 + $0x2c0] sm:$0xff]
    %v223 = vld [vmem:[#allocation5 + $0x2c8] sm:$0xff]
    %v224 = vld [vmem:[#allocation5 + $0x2d0] sm:$0xff]
    %v225 = vld [vmem:[#allocation5 + $0x2d8] sm:$0xff]
    %v226 = vld [vmem:[#allocation5 + $0x2e0] sm:$0xff]
    %v227 = vld [vmem:[#allocation5 + $0x2e8] sm:$0xff]
    %v228 = vld [vmem:[#allocation5 + $0x2f0] sm:$0xff]
    %v229 = vld [vmem:[#allocation5 + $0x2f8] sm:$0xff]
    %v230 = vld [vmem:[#allocation5 + $0x300] sm:$0xff]
    %v231 = vld [vmem:[#allocation5 + $0x308] sm:$0xff]
    %v232 = vld [vmem:[#allocation5 + $0x310] sm:$0xff]
    %v233 = vld [vmem:[#allocation5 + $0x318] sm:$0xff]
    %v234 = vld [vmem:[#allocation5 + $0x320] sm:$0xff]
    %v235 = vld [vmem:[#allocation5 + $0x328] sm:$0xff]
    %v236 = vld [vmem:[#allocation5 + $0x330] sm:$0xff]
    %v237 = vld [vmem:[#allocation5 + $0x338] sm:$0xff]
    %v238 = vld [vmem:[#allocation5 + $0x340] sm:$0xff]
    %v239 = vld [vmem:[#allocation5 + $0x348] sm:$0xff]
    %v240 = vld [vmem:[#allocation5 + $0x350] sm:$0xff]
    %v241 = vld [vmem:[#allocation5 + $0x358] sm:$0xff]
    %v242 = vld [vmem:[#allocation5 + $0x360] sm:$0xff]
    %v243 = vld [vmem:[#allocation5 + $0x368] sm:$0xff]
    %v244 = vld [vmem:[#allocation5 + $0x370] sm:$0xff]
    %v245 = vld [vmem:[#allocation5 + $0x378] sm:$0xff]
    %v246 = vld [vmem:[#allocation5 + $0x380] sm:$0xff]
    %v247 = vld [vmem:[#allocation5 + $0x388] sm:$0xff]
    %v248 = vld [vmem:[#allocation5 + $0x390] sm:$0xff]
    %v249 = vld [vmem:[#allocation5 + $0x398] sm:$0xff]
    %v250 = vld [vmem:[#allocation5 + $0x3a0] sm:$0xff]
    %v251 = vld [vmem:[#allocation5 + $0x3a8] sm:$0xff]
    %v252 = vld [vmem:[#allocation5 + $0x3b0] sm:$0xff]
    %v253 = vld [vmem:[#allocation5 + $0x3b8] sm:$0xff]
    %v254 = vld [vmem:[#allocation5 + $0x3c0] sm:$0xff]
    %v255 = vld [vmem:[#allocation5 + $0x3c8] sm:$0xff]
    %v256 = vld [vmem:[#allocation5 + $0x3d0] sm:$0xff]
    %v257 = vld [vmem:[#allocation5 + $0x3d8] sm:$0xff]
    %v258 = vld [vmem:[#allocation5 + $0x3e0] sm:$0xff]
    %v259 = vld [vmem:[#allocation5 + $0x3e8] sm:$0xff]
    %v260 = vld [vmem:[#allocation5 + $0x3f0] sm:$0xff]
    %v261 = vld [vmem:[#allocation5 + $0x3f8] sm:$0xff]
    %v262 = vld [vmem:[#allocation5 + $0x400] sm:$0xff]
    %v263 = vld [vmem:[#allocation5 + $0x408] sm:$0xff]
    %v264 = vld [vmem:[#allocation5 + $0x410] sm:$0xff]
    %v265 = vld [vmem:[#allocation5 + $0x418] sm:$0xff]
    %v266 = vld [vmem:[#allocation5 + $0x420] sm:$0xff]
    %v267 = vld [vmem:[#allocation5 + $0x428] sm:$0xff]
    %v268 = vld [vmem:[#allocation5 + $0x430] sm:$0xff]
    %v269 = vld [vmem:[#allocation5 + $0x438] sm:$0xff]
    %v270 = vld [vmem:[#allocation5 + $0x440] sm:$0xff]
    %v271 = vld [vmem:[#allocation5 + $0x448] sm:$0xff]
    %v272 = vld [vmem:[#allocation5 + $0x450] sm:$0xff]
    %v273 = vld [vmem:[#allocation5 + $0x458] sm:$0xff]
    %v274 = vld [vmem:[#allocation5 + $0x460] sm:$0xff]
    %v275 = vld [vmem:[#allocation5 + $0x468] sm:$0xff]
    %v276 = vld [vmem:[#allocation5 + $0x470] sm:$0xff]
    %v277 = vld [vmem:[#allocation5 + $0x478] sm:$0xff]
    %v278 = vld [vmem:[#allocation5 + $0x480] sm:$0xff]
    %v279 = vld [vmem:[#allocation5 + $0x488] sm:$0xff]
    %v280 = vld [vmem:[#allocation5 + $0x490] sm:$0xff]
    %v281 = vld [vmem:[#allocation5 + $0x498] sm:$0xff]
    %v282 = vld [vmem:[#allocation5 + $0x4a0] sm:$0xff]
    %v283 = vld [vmem:[#allocation5 + $0x4a8] sm:$0xff]
    %v284 = vld [vmem:[#allocation5 + $0x4b0] sm:$0xff]
    %v285 = vld [vmem:[#allocation5 + $0x4b8] sm:$0xff]
    %v286 = vld [vmem:[#allocation5 + $0x4c0] sm:$0xff]
    %v287 = vld [vmem:[#allocation5 + $0x4c8] sm:$0xff]
    %v288 = vld [vmem:[#allocation5 + $0x4d0] sm:$0xff]
    %v289 = vld [vmem:[#allocation5 + $0x4d8] sm:$0xff]
    %v290 = vld [vmem:[#allocation5 + $0x4e0] sm:$0xff]
    %v291 = vld [vmem:[#allocation5 + $0x4e8] sm:$0xff]
    %v292 = vld [vmem:[#allocation5 + $0x4f0] sm:$0xff]
    %v293 = vld [vmem:[#allocation5 + $0x4f8] sm:$0xff]
    %v294 = vld [vmem:[#allocation5 + $0x500] sm:$0xff]
    %v295 = vld [vmem:[#allocation5 + $0x508] sm:$0xff]
    %v296 = vld [vmem:[#allocation5 + $0x510] sm:$0xff]
    %v297 = vld [vmem:[#allocation5 + $0x518] sm:$0xff]
    %v298 = vld [vmem:[#allocation5 + $0x520] sm:$0xff]
    %v299 = vld [vmem:[#allocation5 + $0x528] sm:$0xff]
    %v300 = vld [vmem:[#allocation5 + $0x530] sm:$0xff]
    %v301 = vld [vmem:[#allocation5 + $0x538] sm:$0xff]
    %v302 = vld [vmem:[#allocation5 + $0x540] sm:$0xff]
    %v303 = vld [vmem:[#allocation5 + $0x548] sm:$0xff]
    %v304 = vld [vmem:[#allocation5 + $0x550] sm:$0xff]
    %v305 = vld [vmem:[#allocation5 + $0x558] sm:$0xff]
    %v306 = vld [vmem:[#allocation5 + $0x560] sm:$0xff]
    %v307 = vld [vmem:[#allocation5 + $0x568] sm:$0xff]
    %v308 = vld [vmem:[#allocation5 + $0x570] sm:$0xff]
    %v309 = vld [vmem:[#allocation5 + $0x578] sm:$0xff]
    %v310 = vld [vmem:[#allocation5 + $0x580] sm:$0xff]
    %v311 = vld [vmem:[#allocation5 + $0x588] sm:$0xff]
    %v312 = vld [vmem:[#allocation5 + $0x590] sm:$0xff]
    %v313 = vld [vmem:[#allocation5 + $0x598] sm:$0xff]
    %v314 = vld [vmem:[#allocation5 + $0x5a0] sm:$0xff]
    %v315 = vld [vmem:[#allocation5 + $0x5a8] sm:$0xff]
    %v316 = vld [vmem:[#allocation5 + $0x5b0] sm:$0xff]
    %v317 = vld [vmem:[#allocation5 + $0x5b8] sm:$0xff]
    %v318 = vld [vmem:[#allocation5 + $0x5c0] sm:$0xff]
    %v319 = vld [vmem:[#allocation5 + $0x5c8] sm:$0xff]
    %v320 = vld [vmem:[#allocation5 + $0x5d0] sm:$0xff]
    %v321 = vld [vmem:[#allocation5 + $0x5d8] sm:$0xff]
    %v322 = vld [vmem:[#allocation5 + $0x5e0] sm:$0xff]
    %v323 = vld [vmem:[#allocation5 + $0x5e8] sm:$0xff]
    %v324 = vld [vmem:[#allocation5 + $0x5f0] sm:$0xff]
    %v325 = vld [vmem:[#allocation5 + $0x5f8] sm:$0xff]
    %v326 = vld [vmem:[#allocation5 + $0x600] sm:$0xff]
    %v327 = vld [vmem:[#allocation5 + $0x608] sm:$0xff]
    %v328 = vld [vmem:[#allocation5 + $0x610] sm:$0xff]
    %v329 = vld [vmem:[#allocation5 + $0x618] sm:$0xff]
    %v330 = vld [vmem:[#allocation5 + $0x620] sm:$0xff]
    %v331 = vld [vmem:[#allocation5 + $0x628] sm:$0xff]
    %v332 = vld [vmem:[#allocation5 + $0x630] sm:$0xff]
    %v333 = vld [vmem:[#allocation5 + $0x638] sm:$0xff]
    %v334 = vld [vmem:[#allocation5 + $0x640] sm:$0xff]
    %v335 = vld [vmem:[#allocation5 + $0x648] sm:$0xff]
    %v336 = vld [vmem:[#allocation5 + $0x650] sm:$0xff]
    %v337 = vld [vmem:[#allocation5 + $0x658] sm:$0xff]
    %v338 = vld [vmem:[#allocation5 + $0x660] sm:$0xff]
    %v339 = vld [vmem:[#allocation5 + $0x668] sm:$0xff]
    %v340 = vld [vmem:[#allocation5 + $0x670] sm:$0xff]
    %v341 = vld [vmem:[#allocation5 + $0x678] sm:$0xff]
    %v342 = vld [vmem:[#allocation5 + $0x680] sm:$0xff]
    %v343 = vld [vmem:[#allocation5 + $0x688] sm:$0xff]
    %v344 = vld [vmem:[#allocation5 + $0x690] sm:$0xff]
    %v345 = vld [vmem:[#allocation5 + $0x698] sm:$0xff]
    %v346 = vld [vmem:[#allocation5 + $0x6a0] sm:$0xff]
    %v347 = vld [vmem:[#allocation5 + $0x6a8] sm:$0xff]
    %v348 = vld [vmem:[#allocation5 + $0x6b0] sm:$0xff]
    %v349 = vld [vmem:[#allocation5 + $0x6b8] sm:$0xff]
    %v350 = vld [vmem:[#allocation5 + $0x6c0] sm:$0xff]
    %v351 = vld [vmem:[#allocation5 + $0x6c8] sm:$0xff]
    %v352 = vld [vmem:[#allocation5 + $0x6d0] sm:$0xff]
    %v353 = vld [vmem:[#allocation5 + $0x6d8] sm:$0xff]
    %v354 = vld [vmem:[#allocation5 + $0x6e0] sm:$0xff]
    %v355 = vld [vmem:[#allocation5 + $0x6e8] sm:$0xff]
    %v356 = vld [vmem:[#allocation5 + $0x6f0] sm:$0xff]
    %v357 = vld [vmem:[#allocation5 + $0x6f8] sm:$0xff]
    %v358 = vld [vmem:[#allocation5 + $0x700] sm:$0xff]
    %v359 = vld [vmem:[#allocation5 + $0x708] sm:$0xff]
    %v360 = vld [vmem:[#allocation5 + $0x710] sm:$0xff]
    %v361 = vld [vmem:[#allocation5 + $0x718] sm:$0xff]
    %v362 = vld [vmem:[#allocation5 + $0x720] sm:$0xff]
    %v363 = vld [vmem:[#allocation5 + $0x728] sm:$0xff]
    %v364 = vld [vmem:[#allocation5 + $0x730] sm:$0xff]
    %v365 = vld [vmem:[#allocation5 + $0x738] sm:$0xff]
    %v366 = vld [vmem:[#allocation5 + $0x740] sm:$0xff]
    %v367 = vld [vmem:[#allocation5 + $0x748] sm:$0xff]
    %v368 = vld [vmem:[#allocation5 + $0x750] sm:$0xff]
    %v369 = vld [vmem:[#allocation5 + $0x758] sm:$0xff]
    %v370 = vld [vmem:[#allocation5 + $0x760] sm:$0xff]
    %v371 = vld [vmem:[#allocation5 + $0x768] sm:$0xff]
    %v372 = vld [vmem:[#allocation5 + $0x770] sm:$0xff]
    %v373 = vld [vmem:[#allocation5 + $0x778] sm:$0xff]
    %v374 = vld [vmem:[#allocation5 + $0x780] sm:$0xff]
    %v375 = vld [vmem:[#allocation5 + $0x788] sm:$0xff]
    %v376 = vld [vmem:[#allocation5 + $0x790] sm:$0xff]
    %v377 = vld [vmem:[#allocation5 + $0x798] sm:$0xff]
    %v378 = vld [vmem:[#allocation5 + $0x7a0] sm:$0xff]
    %v379 = vld [vmem:[#allocation5 + $0x7a8] sm:$0xff]
    %v380 = vld [vmem:[#allocation5 + $0x7b0] sm:$0xff]
    %v381 = vld [vmem:[#allocation5 + $0x7b8] sm:$0xff]
    %v382 = vld [vmem:[#allocation5 + $0x7c0] sm:$0xff]
    %v383 = vld [vmem:[#allocation5 + $0x7c8] sm:$0xff]
    %v384 = vld [vmem:[#allocation5 + $0x7d0] sm:$0xff]
    %v385 = vld [vmem:[#allocation5 + $0x7d8] sm:$0xff]
    %v386 = vld [vmem:[#allocation5 + $0x7e0] sm:$0xff]
    %v387 = vld [vmem:[#allocation5 + $0x7e8] sm:$0xff]
    %v388 = vld [vmem:[#allocation5 + $0x7f0] sm:$0xff]
    %v389 = vld [vmem:[#allocation5 + $0x7f8] sm:$0xff]
    %v390 = vld [vmem:[#allocation5 + $0x800] sm:$0xff]
    %v391 = vld [vmem:[#allocation5 + $0x808] sm:$0xff]
    %v392 = vld [vmem:[#allocation5 + $0x810] sm:$0xff]
    %v393 = vld [vmem:[#allocation5 + $0x818] sm:$0xff]
    %v394 = vld [vmem:[#allocation5 + $0x820] sm:$0xff]
    %v395 = vld [vmem:[#allocation5 + $0x828] sm:$0xff]
    %v396 = vld [vmem:[#allocation5 + $0x830] sm:$0xff]
    %v397 = vld [vmem:[#allocation5 + $0x838] sm:$0xff]
    %v398 = vld [vmem:[#allocation5 + $0x840] sm:$0xff]
    %v399 = vld [vmem:[#allocation5 + $0x848] sm:$0xff]
    %v400 = vld [vmem:[#allocation5 + $0x850] sm:$0xff]
    %v401 = vld [vmem:[#allocation5 + $0x858] sm:$0xff]
    %v402 = vld [vmem:[#allocation5 + $0x860] sm:$0xff]
    %v403 = vld [vmem:[#allocation5 + $0x868] sm:$0xff]
    %v404 = vld [vmem:[#allocation5 + $0x870] sm:$0xff]
    %v405 = vld [vmem:[#allocation5 + $0x878] sm:$0xff]
    %v406 = vld [vmem:[#allocation5 + $0x880] sm:$0xff]
    %v407 = vld [vmem:[#allocation5 + $0x888] sm:$0xff]
    %v408 = vld [vmem:[#allocation5 + $0x890] sm:$0xff]
    %v409 = vld [vmem:[#allocation5 + $0x898] sm:$0xff]
    %v410 = vld [vmem:[#allocation5 + $0x8a0] sm:$0xff]
    %v411 = vld [vmem:[#allocation5 + $0x8a8] sm:$0xff]
    %v412 = vld [vmem:[#allocation5 + $0x8b0] sm:$0xff]
    %v413 = vld [vmem:[#allocation5 + $0x8b8] sm:$0xff]
    %v414 = vld [vmem:[#allocation5 + $0x8c0] sm:$0xff]
    %v415 = vld [vmem:[#allocation5 + $0x8c8] sm:$0xff]
    %v416 = vld [vmem:[#allocation5 + $0x8d0] sm:$0xff]
    %v417 = vld [vmem:[#allocation5 + $0x8d8] sm:$0xff]
    %v418 = vld [vmem:[#allocation5 + $0x8e0] sm:$0xff]
    %v419 = vld [vmem:[#allocation5 + $0x8e8] sm:$0xff]
    %v420 = vld [vmem:[#allocation5 + $0x8f0] sm:$0xff]
    %v421 = vld [vmem:[#allocation5 + $0x8f8] sm:$0xff]
    %v422 = vld [vmem:[#allocation7] sm:$0x3f]
    %v424 = vlaneseq
    %v425 = vshrl.u32 %v424, 7
    %v426 = vsub.s32 0, %v425
    %v427 = vrot.slane %v422, %v426
    %v428 = vlaneseq
    %v429 = vshrl.u32 %v428, 7
    %v430 = vsub.s32 1, %v429
    %v431 = vrot.slane %v422, %v430
    %v432 = vlaneseq
    %v433 = vshrl.u32 %v432, 7
    %v434 = vsub.s32 2, %v433
    %v435 = vrot.slane %v422, %v434
    %v436 = vlaneseq
    %v437 = vshrl.u32 %v436, 7
    %v438 = vsub.s32 3, %v437
    %v439 = vrot.slane %v422, %v438
    %v440 = vlaneseq
    %v441 = vshrl.u32 %v440, 7
    %v442 = vsub.s32 4, %v441
    %v443 = vrot.slane %v422, %v442
    %v444 = vlaneseq
    %v445 = vshrl.u32 %v444, 7
    %v446 = vsub.s32 5, %v445
    %v447 = vrot.slane %v422, %v446
    %v502 = vunpack.c.l.b16 %v86
    %v503 = vunpack.c.h.b16 %v86
    %v504 = vunpack.c.l.b16 %v87
    %v505 = vunpack.c.h.b16 %v87
    %v506 = vunpack.c.l.b16 %v88
    %v507 = vunpack.c.h.b16 %v88
    %v508 = vunpack.c.l.b16 %v89
    %v509 = vunpack.c.h.b16 %v89
    %v510 = vunpack.c.l.b16 %v90
    %v511 = vunpack.c.h.b16 %v90
    %v512 = vunpack.c.l.b16 %v91
    %v513 = vunpack.c.h.b16 %v91
    %v514 = vunpack.c.l.b16 %v92
    %v515 = vunpack.c.h.b16 %v92
    %v516 = vunpack.c.l.b16 %v93
    %v517 = vunpack.c.h.b16 %v93
    %v518 = vunpack.c.l.b16 %v94
    %v519 = vunpack.c.h.b16 %v94
    %v520 = vunpack.c.l.b16 %v95
    %v521 = vunpack.c.h.b16 %v95
    %v522 = vunpack.c.l.b16 %v96
    %v523 = vunpack.c.h.b16 %v96
    %v524 = vunpack.c.l.b16 %v97
    %v525 = vunpack.c.h.b16 %v97
    %v526 = vunpack.c.l.b16 %v98
    %v527 = vunpack.c.h.b16 %v98
    %v528 = vunpack.c.l.b16 %v99
    %v529 = vunpack.c.h.b16 %v99
    %v530 = vunpack.c.l.b16 %v100
    %v531 = vunpack.c.h.b16 %v100
    %v532 = vunpack.c.l.b16 %v101
    %v533 = vunpack.c.h.b16 %v101
    %v534 = vunpack.c.l.b16 %v102
    %v535 = vunpack.c.h.b16 %v102
    %v536 = vunpack.c.l.b16 %v103
    %v537 = vunpack.c.h.b16 %v103
    %v538 = vunpack.c.l.b16 %v104
    %v539 = vunpack.c.h.b16 %v104
    %v540 = vunpack.c.l.b16 %v105
    %v541 = vunpack.c.h.b16 %v105
    %v542 = vunpack.c.l.b16 %v106
    %v543 = vunpack.c.h.b16 %v106
    %v544 = vunpack.c.l.b16 %v107
    %v545 = vunpack.c.h.b16 %v107
    %v546 = vunpack.c.l.b16 %v108
    %v547 = vunpack.c.h.b16 %v108
    %v548 = vunpack.c.l.b16 %v109
    %v549 = vunpack.c.h.b16 %v109
    %v550 = vunpack.c.l.b16 %v110
    %v551 = vunpack.c.h.b16 %v110
    %v552 = vunpack.c.l.b16 %v111
    %v553 = vunpack.c.h.b16 %v111
    %v554 = vunpack.c.l.b16 %v112
    %v555 = vunpack.c.h.b16 %v112
    %v556 = vunpack.c.l.b16 %v113
    %v557 = vunpack.c.h.b16 %v113
    %v558 = vunpack.c.l.b16 %v114
    %v559 = vunpack.c.h.b16 %v114
    %v560 = vunpack.c.l.b16 %v115
    %v561 = vunpack.c.h.b16 %v115
    %v562 = vunpack.c.l.b16 %v116
    %v563 = vunpack.c.h.b16 %v116
    %v564 = vunpack.c.l.b16 %v117
    %v565 = vunpack.c.h.b16 %v117
    %v566 = vunpack.c.l.b16 %v118
    %v567 = vunpack.c.h.b16 %v118
    %v568 = vunpack.c.l.b16 %v119
    %v569 = vunpack.c.h.b16 %v119
    %v570 = vunpack.c.l.b16 %v120
    %v571 = vunpack.c.h.b16 %v120
    %v572 = vunpack.c.l.b16 %v121
    %v573 = vunpack.c.h.b16 %v121
    %v574 = vunpack.c.l.b16 %v122
    %v575 = vunpack.c.h.b16 %v122
    %v576 = vunpack.c.l.b16 %v123
    %v577 = vunpack.c.h.b16 %v123
    %v578 = vunpack.c.l.b16 %v124
    %v579 = vunpack.c.h.b16 %v124
    %v580 = vunpack.c.l.b16 %v125
    %v581 = vunpack.c.h.b16 %v125
    %v582 = vunpack.c.l.b16 %v126
    %v583 = vunpack.c.h.b16 %v126
    %v584 = vunpack.c.l.b16 %v127
    %v585 = vunpack.c.h.b16 %v127
    %v586 = vunpack.c.l.b16 %v128
    %v587 = vunpack.c.h.b16 %v128
    %v588 = vunpack.c.l.b16 %v129
    %v589 = vunpack.c.h.b16 %v129
    %v590 = vunpack.c.l.b16 %v130
    %v591 = vunpack.c.h.b16 %v130
    %v592 = vunpack.c.l.b16 %v131
    %v593 = vunpack.c.h.b16 %v131
    %v594 = vunpack.c.l.b16 %v132
    %v595 = vunpack.c.h.b16 %v132
    %v596 = vunpack.c.l.b16 %v133
    %v597 = vunpack.c.h.b16 %v133
    %v598 = vpack.c.b16 %v508, %v502
    %v599 = vpack.c.b16 %v509, %v503
    %v600 = vpack.c.b16 %v510, %v504
    %v601 = vpack.c.b16 %v511, %v505
    %v602 = vpack.c.b16 %v512, %v506
    %v603 = vpack.c.b16 %v513, %v507
    %v604 = vpack.c.b16 %v520, %v514
    %v605 = vpack.c.b16 %v521, %v515
    %v606 = vpack.c.b16 %v522, %v516
    %v607 = vpack.c.b16 %v523, %v517
    %v608 = vpack.c.b16 %v524, %v518
    %v609 = vpack.c.b16 %v525, %v519
    %v610 = vpack.c.b16 %v532, %v526
    %v611 = vpack.c.b16 %v533, %v527
    %v612 = vpack.c.b16 %v534, %v528
    %v613 = vpack.c.b16 %v535, %v529
    %v614 = vpack.c.b16 %v536, %v530
    %v615 = vpack.c.b16 %v537, %v531
    %v616 = vpack.c.b16 %v544, %v538
    %v617 = vpack.c.b16 %v545, %v539
    %v618 = vpack.c.b16 %v546, %v540
    %v619 = vpack.c.b16 %v547, %v541
    %v620 = vpack.c.b16 %v548, %v542
    %v621 = vpack.c.b16 %v549, %v543
    %v622 = vpack.c.b16 %v556, %v550
    %v623 = vpack.c.b16 %v557, %v551
    %v624 = vpack.c.b16 %v558, %v552
    %v625 = vpack.c.b16 %v559, %v553
    %v626 = vpack.c.b16 %v560, %v554
    %v627 = vpack.c.b16 %v561, %v555
    %v628 = vpack.c.b16 %v568, %v562
    %v629 = vpack.c.b16 %v569, %v563
    %v630 = vpack.c.b16 %v570, %v564
    %v631 = vpack.c.b16 %v571, %v565
    %v632 = vpack.c.b16 %v572, %v566
    %v633 = vpack.c.b16 %v573, %v567
    %v634 = vpack.c.b16 %v580, %v574
    %v635 = vpack.c.b16 %v581, %v575
    %v636 = vpack.c.b16 %v582, %v576
    %v637 = vpack.c.b16 %v583, %v577
    %v638 = vpack.c.b16 %v584, %v578
    %v639 = vpack.c.b16 %v585, %v579
    %v640 = vpack.c.b16 %v592, %v586
    %v641 = vpack.c.b16 %v593, %v587
    %v642 = vpack.c.b16 %v594, %v588
    %v643 = vpack.c.b16 %v595, %v589
    %v644 = vpack.c.b16 %v596, %v590
    %v645 = vpack.c.b16 %v597, %v591
    %v982 = vunpack.c.l.b16 %v134
    %v983 = vunpack.c.h.b16 %v134
    %v984 = vunpack.c.l.b16 %v135
    %v985 = vunpack.c.h.b16 %v135
    %v986 = vunpack.c.l.b16 %v136
    %v987 = vunpack.c.h.b16 %v136
    %v988 = vunpack.c.l.b16 %v137
    %v989 = vunpack.c.h.b16 %v137
    %v990 = vunpack.c.l.b16 %v138
    %v991 = vunpack.c.h.b16 %v138
    %v992 = vunpack.c.l.b16 %v139
    %v993 = vunpack.c.h.b16 %v139
    %v994 = vunpack.c.l.b16 %v140
    %v995 = vunpack.c.h.b16 %v140
    %v996 = vunpack.c.l.b16 %v141
    %v997 = vunpack.c.h.b16 %v141
    %v998 = vunpack.c.l.b16 %v142
    %v999 = vunpack.c.h.b16 %v142
    %v1000 = vunpack.c.l.b16 %v143
    %v1001 = vunpack.c.h.b16 %v143
    %v1002 = vunpack.c.l.b16 %v144
    %v1003 = vunpack.c.h.b16 %v144
    %v1004 = vunpack.c.l.b16 %v145
    %v1005 = vunpack.c.h.b16 %v145
    %v1006 = vunpack.c.l.b16 %v146
    %v1007 = vunpack.c.h.b16 %v146
    %v1008 = vunpack.c.l.b16 %v147
    %v1009 = vunpack.c.h.b16 %v147
    %v1010 = vunpack.c.l.b16 %v148
    %v1011 = vunpack.c.h.b16 %v148
    %v1012 = vunpack.c.l.b16 %v149
    %v1013 = vunpack.c.h.b16 %v149
    %v1014 = vunpack.c.l.b16 %v150
    %v1015 = vunpack.c.h.b16 %v150
    %v1016 = vunpack.c.l.b16 %v151
    %v1017 = vunpack.c.h.b16 %v151
    %v1018 = vunpack.c.l.b16 %v152
    %v1019 = vunpack.c.h.b16 %v152
    %v1020 = vunpack.c.l.b16 %v153
    %v1021 = vunpack.c.h.b16 %v153
    %v1022 = vunpack.c.l.b16 %v154
    %v1023 = vunpack.c.h.b16 %v154
    %v1024 = vunpack.c.l.b16 %v155
    %v1025 = vunpack.c.h.b16 %v155
    %v1026 = vunpack.c.l.b16 %v156
    %v1027 = vunpack.c.h.b16 %v156
    %v1028 = vunpack.c.l.b16 %v157
    %v1029 = vunpack.c.h.b16 %v157
    %v1030 = vunpack.c.l.b16 %v158
    %v1031 = vunpack.c.h.b16 %v158
    %v1032 = vunpack.c.l.b16 %v159
    %v1033 = vunpack.c.h.b16 %v159
    %v1034 = vunpack.c.l.b16 %v160
    %v1035 = vunpack.c.h.b16 %v160
    %v1036 = vunpack.c.l.b16 %v161
    %v1037 = vunpack.c.h.b16 %v161
    %v1038 = vunpack.c.l.b16 %v162
    %v1039 = vunpack.c.h.b16 %v162
    %v1040 = vunpack.c.l.b16 %v163
    %v1041 = vunpack.c.h.b16 %v163
    %v1042 = vunpack.c.l.b16 %v164
    %v1043 = vunpack.c.h.b16 %v164
    %v1044 = vunpack.c.l.b16 %v165
    %v1045 = vunpack.c.h.b16 %v165
    %v1046 = vunpack.c.l.b16 %v166
    %v1047 = vunpack.c.h.b16 %v166
    %v1048 = vunpack.c.l.b16 %v167
    %v1049 = vunpack.c.h.b16 %v167
    %v1050 = vunpack.c.l.b16 %v168
    %v1051 = vunpack.c.h.b16 %v168
    %v1052 = vunpack.c.l.b16 %v169
    %v1053 = vunpack.c.h.b16 %v169
    %v1054 = vunpack.c.l.b16 %v170
    %v1055 = vunpack.c.h.b16 %v170
    %v1056 = vunpack.c.l.b16 %v171
    %v1057 = vunpack.c.h.b16 %v171
    %v1058 = vunpack.c.l.b16 %v172
    %v1059 = vunpack.c.h.b16 %v172
    %v1060 = vunpack.c.l.b16 %v173
    %v1061 = vunpack.c.h.b16 %v173
    %v1062 = vunpack.c.l.b16 %v174
    %v1063 = vunpack.c.h.b16 %v174
    %v1064 = vunpack.c.l.b16 %v175
    %v1065 = vunpack.c.h.b16 %v175
    %v1066 = vunpack.c.l.b16 %v176
    %v1067 = vunpack.c.h.b16 %v176
    %v1068 = vunpack.c.l.b16 %v177
    %v1069 = vunpack.c.h.b16 %v177
    %v1070 = vunpack.c.l.b16 %v178
    %v1071 = vunpack.c.h.b16 %v178
    %v1072 = vunpack.c.l.b16 %v179
    %v1073 = vunpack.c.h.b16 %v179
    %v1074 = vunpack.c.l.b16 %v180
    %v1075 = vunpack.c.h.b16 %v180
    %v1076 = vunpack.c.l.b16 %v181
    %v1077 = vunpack.c.h.b16 %v181
    %v1078 = vunpack.c.l.b16 %v182
    %v1079 = vunpack.c.h.b16 %v182
    %v1080 = vunpack.c.l.b16 %v183
    %v1081 = vunpack.c.h.b16 %v183
    %v1082 = vunpack.c.l.b16 %v184
    %v1083 = vunpack.c.h.b16 %v184
    %v1084 = vunpack.c.l.b16 %v185
    %v1085 = vunpack.c.h.b16 %v185
    %v1086 = vunpack.c.l.b16 %v186
    %v1087 = vunpack.c.h.b16 %v186
    %v1088 = vunpack.c.l.b16 %v187
    %v1089 = vunpack.c.h.b16 %v187
    %v1090 = vunpack.c.l.b16 %v188
    %v1091 = vunpack.c.h.b16 %v188
    %v1092 = vunpack.c.l.b16 %v189
    %v1093 = vunpack.c.h.b16 %v189
    %v1094 = vunpack.c.l.b16 %v190
    %v1095 = vunpack.c.h.b16 %v190
    %v1096 = vunpack.c.l.b16 %v191
    %v1097 = vunpack.c.h.b16 %v191
    %v1098 = vunpack.c.l.b16 %v192
    %v1099 = vunpack.c.h.b16 %v192
    %v1100 = vunpack.c.l.b16 %v193
    %v1101 = vunpack.c.h.b16 %v193
    %v1102 = vunpack.c.l.b16 %v194
    %v1103 = vunpack.c.h.b16 %v194
    %v1104 = vunpack.c.l.b16 %v195
    %v1105 = vunpack.c.h.b16 %v195
    %v1106 = vunpack.c.l.b16 %v196
    %v1107 = vunpack.c.h.b16 %v196
    %v1108 = vunpack.c.l.b16 %v197
    %v1109 = vunpack.c.h.b16 %v197
    %v1110 = vunpack.c.l.b16 %v198
    %v1111 = vunpack.c.h.b16 %v198
    %v1112 = vunpack.c.l.b16 %v199
    %v1113 = vunpack.c.h.b16 %v199
    %v1114 = vunpack.c.l.b16 %v200
    %v1115 = vunpack.c.h.b16 %v200
    %v1116 = vunpack.c.l.b16 %v201
    %v1117 = vunpack.c.h.b16 %v201
    %v1118 = vunpack.c.l.b16 %v202
    %v1119 = vunpack.c.h.b16 %v202
    %v1120 = vunpack.c.l.b16 %v203
    %v1121 = vunpack.c.h.b16 %v203
    %v1122 = vunpack.c.l.b16 %v204
    %v1123 = vunpack.c.h.b16 %v204
    %v1124 = vunpack.c.l.b16 %v205
    %v1125 = vunpack.c.h.b16 %v205
    %v1126 = vunpack.c.l.b16 %v206
    %v1127 = vunpack.c.h.b16 %v206
    %v1128 = vunpack.c.l.b16 %v207
    %v1129 = vunpack.c.h.b16 %v207
    %v1130 = vunpack.c.l.b16 %v208
    %v1131 = vunpack.c.h.b16 %v208
    %v1132 = vunpack.c.l.b16 %v209
    %v1133 = vunpack.c.h.b16 %v209
    %v1134 = vunpack.c.l.b16 %v210
    %v1135 = vunpack.c.h.b16 %v210
    %v1136 = vunpack.c.l.b16 %v211
    %v1137 = vunpack.c.h.b16 %v211
    %v1138 = vunpack.c.l.b16 %v212
    %v1139 = vunpack.c.h.b16 %v212
    %v1140 = vunpack.c.l.b16 %v213
    %v1141 = vunpack.c.h.b16 %v213
    %v1142 = vunpack.c.l.b16 %v214
    %v1143 = vunpack.c.h.b16 %v214
    %v1144 = vunpack.c.l.b16 %v215
    %v1145 = vunpack.c.h.b16 %v215
    %v1146 = vunpack.c.l.b16 %v216
    %v1147 = vunpack.c.h.b16 %v216
    %v1148 = vunpack.c.l.b16 %v217
    %v1149 = vunpack.c.h.b16 %v217
    %v1150 = vunpack.c.l.b16 %v218
    %v1151 = vunpack.c.h.b16 %v218
    %v1152 = vunpack.c.l.b16 %v219
    %v1153 = vunpack.c.h.b16 %v219
    %v1154 = vunpack.c.l.b16 %v220
    %v1155 = vunpack.c.h.b16 %v220
    %v1156 = vunpack.c.l.b16 %v221
    %v1157 = vunpack.c.h.b16 %v221
    %v1158 = vunpack.c.l.b16 %v222
    %v1159 = vunpack.c.h.b16 %v222
    %v1160 = vunpack.c.l.b16 %v223
    %v1161 = vunpack.c.h.b16 %v223
    %v1162 = vunpack.c.l.b16 %v224
    %v1163 = vunpack.c.h.b16 %v224
    %v1164 = vunpack.c.l.b16 %v225
    %v1165 = vunpack.c.h.b16 %v225
    %v1166 = vunpack.c.l.b16 %v226
    %v1167 = vunpack.c.h.b16 %v226
    %v1168 = vunpack.c.l.b16 %v227
    %v1169 = vunpack.c.h.b16 %v227
    %v1170 = vunpack.c.l.b16 %v228
    %v1171 = vunpack.c.h.b16 %v228
    %v1172 = vunpack.c.l.b16 %v229
    %v1173 = vunpack.c.h.b16 %v229
    %v1174 = vunpack.c.l.b16 %v230
    %v1175 = vunpack.c.h.b16 %v230
    %v1176 = vunpack.c.l.b16 %v231
    %v1177 = vunpack.c.h.b16 %v231
    %v1178 = vunpack.c.l.b16 %v232
    %v1179 = vunpack.c.h.b16 %v232
    %v1180 = vunpack.c.l.b16 %v233
    %v1181 = vunpack.c.h.b16 %v233
    %v1182 = vunpack.c.l.b16 %v234
    %v1183 = vunpack.c.h.b16 %v234
    %v1184 = vunpack.c.l.b16 %v235
    %v1185 = vunpack.c.h.b16 %v235
    %v1186 = vunpack.c.l.b16 %v236
    %v1187 = vunpack.c.h.b16 %v236
    %v1188 = vunpack.c.l.b16 %v237
    %v1189 = vunpack.c.h.b16 %v237
    %v1190 = vunpack.c.l.b16 %v238
    %v1191 = vunpack.c.h.b16 %v238
    %v1192 = vunpack.c.l.b16 %v239
    %v1193 = vunpack.c.h.b16 %v239
    %v1194 = vunpack.c.l.b16 %v240
    %v1195 = vunpack.c.h.b16 %v240
    %v1196 = vunpack.c.l.b16 %v241
    %v1197 = vunpack.c.h.b16 %v241
    %v1198 = vunpack.c.l.b16 %v242
    %v1199 = vunpack.c.h.b16 %v242
    %v1200 = vunpack.c.l.b16 %v243
    %v1201 = vunpack.c.h.b16 %v243
    %v1202 = vunpack.c.l.b16 %v244
    %v1203 = vunpack.c.h.b16 %v244
    %v1204 = vunpack.c.l.b16 %v245
    %v1205 = vunpack.c.h.b16 %v245
    %v1206 = vunpack.c.l.b16 %v246
    %v1207 = vunpack.c.h.b16 %v246
    %v1208 = vunpack.c.l.b16 %v247
    %v1209 = vunpack.c.h.b16 %v247
    %v1210 = vunpack.c.l.b16 %v248
    %v1211 = vunpack.c.h.b16 %v248
    %v1212 = vunpack.c.l.b16 %v249
    %v1213 = vunpack.c.h.b16 %v249
    %v1214 = vunpack.c.l.b16 %v250
    %v1215 = vunpack.c.h.b16 %v250
    %v1216 = vunpack.c.l.b16 %v251
    %v1217 = vunpack.c.h.b16 %v251
    %v1218 = vunpack.c.l.b16 %v252
    %v1219 = vunpack.c.h.b16 %v252
    %v1220 = vunpack.c.l.b16 %v253
    %v1221 = vunpack.c.h.b16 %v253
    %v1222 = vunpack.c.l.b16 %v254
    %v1223 = vunpack.c.h.b16 %v254
    %v1224 = vunpack.c.l.b16 %v255
    %v1225 = vunpack.c.h.b16 %v255
    %v1226 = vunpack.c.l.b16 %v256
    %v1227 = vunpack.c.h.b16 %v256
    %v1228 = vunpack.c.l.b16 %v257
    %v1229 = vunpack.c.h.b16 %v257
    %v1230 = vunpack.c.l.b16 %v258
    %v1231 = vunpack.c.h.b16 %v258
    %v1232 = vunpack.c.l.b16 %v259
    %v1233 = vunpack.c.h.b16 %v259
    %v1234 = vunpack.c.l.b16 %v260
    %v1235 = vunpack.c.h.b16 %v260
    %v1236 = vunpack.c.l.b16 %v261
    %v1237 = vunpack.c.h.b16 %v261
    %v1238 = vunpack.c.l.b16 %v262
    %v1239 = vunpack.c.h.b16 %v262
    %v1240 = vunpack.c.l.b16 %v263
    %v1241 = vunpack.c.h.b16 %v263
    %v1242 = vunpack.c.l.b16 %v264
    %v1243 = vunpack.c.h.b16 %v264
    %v1244 = vunpack.c.l.b16 %v265
    %v1245 = vunpack.c.h.b16 %v265
    %v1246 = vunpack.c.l.b16 %v266
    %v1247 = vunpack.c.h.b16 %v266
    %v1248 = vunpack.c.l.b16 %v267
    %v1249 = vunpack.c.h.b16 %v267
    %v1250 = vunpack.c.l.b16 %v268
    %v1251 = vunpack.c.h.b16 %v268
    %v1252 = vunpack.c.l.b16 %v269
    %v1253 = vunpack.c.h.b16 %v269
    %v1254 = vunpack.c.l.b16 %v270
    %v1255 = vunpack.c.h.b16 %v270
    %v1256 = vunpack.c.l.b16 %v271
    %v1257 = vunpack.c.h.b16 %v271
    %v1258 = vunpack.c.l.b16 %v272
    %v1259 = vunpack.c.h.b16 %v272
    %v1260 = vunpack.c.l.b16 %v273
    %v1261 = vunpack.c.h.b16 %v273
    %v1262 = vunpack.c.l.b16 %v274
    %v1263 = vunpack.c.h.b16 %v274
    %v1264 = vunpack.c.l.b16 %v275
    %v1265 = vunpack.c.h.b16 %v275
    %v1266 = vunpack.c.l.b16 %v276
    %v1267 = vunpack.c.h.b16 %v276
    %v1268 = vunpack.c.l.b16 %v277
    %v1269 = vunpack.c.h.b16 %v277
    %v1270 = vunpack.c.l.b16 %v278
    %v1271 = vunpack.c.h.b16 %v278
    %v1272 = vunpack.c.l.b16 %v279
    %v1273 = vunpack.c.h.b16 %v279
    %v1274 = vunpack.c.l.b16 %v280
    %v1275 = vunpack.c.h.b16 %v280
    %v1276 = vunpack.c.l.b16 %v281
    %v1277 = vunpack.c.h.b16 %v281
    %v1278 = vunpack.c.l.b16 %v282
    %v1279 = vunpack.c.h.b16 %v282
    %v1280 = vunpack.c.l.b16 %v283
    %v1281 = vunpack.c.h.b16 %v283
    %v1282 = vunpack.c.l.b16 %v284
    %v1283 = vunpack.c.h.b16 %v284
    %v1284 = vunpack.c.l.b16 %v285
    %v1285 = vunpack.c.h.b16 %v285
    %v1286 = vunpack.c.l.b16 %v286
    %v1287 = vunpack.c.h.b16 %v286
    %v1288 = vunpack.c.l.b16 %v287
    %v1289 = vunpack.c.h.b16 %v287
    %v1290 = vunpack.c.l.b16 %v288
    %v1291 = vunpack.c.h.b16 %v288
    %v1292 = vunpack.c.l.b16 %v289
    %v1293 = vunpack.c.h.b16 %v289
    %v1294 = vunpack.c.l.b16 %v290
    %v1295 = vunpack.c.h.b16 %v290
    %v1296 = vunpack.c.l.b16 %v291
    %v1297 = vunpack.c.h.b16 %v291
    %v1298 = vunpack.c.l.b16 %v292
    %v1299 = vunpack.c.h.b16 %v292
    %v1300 = vunpack.c.l.b16 %v293
    %v1301 = vunpack.c.h.b16 %v293
    %v1302 = vunpack.c.l.b16 %v294
    %v1303 = vunpack.c.h.b16 %v294
    %v1304 = vunpack.c.l.b16 %v295
    %v1305 = vunpack.c.h.b16 %v295
    %v1306 = vunpack.c.l.b16 %v296
    %v1307 = vunpack.c.h.b16 %v296
    %v1308 = vunpack.c.l.b16 %v297
    %v1309 = vunpack.c.h.b16 %v297
    %v1310 = vunpack.c.l.b16 %v298
    %v1311 = vunpack.c.h.b16 %v298
    %v1312 = vunpack.c.l.b16 %v299
    %v1313 = vunpack.c.h.b16 %v299
    %v1314 = vunpack.c.l.b16 %v300
    %v1315 = vunpack.c.h.b16 %v300
    %v1316 = vunpack.c.l.b16 %v301
    %v1317 = vunpack.c.h.b16 %v301
    %v1318 = vunpack.c.l.b16 %v302
    %v1319 = vunpack.c.h.b16 %v302
    %v1320 = vunpack.c.l.b16 %v303
    %v1321 = vunpack.c.h.b16 %v303
    %v1322 = vunpack.c.l.b16 %v304
    %v1323 = vunpack.c.h.b16 %v304
    %v1324 = vunpack.c.l.b16 %v305
    %v1325 = vunpack.c.h.b16 %v305
    %v1326 = vunpack.c.l.b16 %v306
    %v1327 = vunpack.c.h.b16 %v306
    %v1328 = vunpack.c.l.b16 %v307
    %v1329 = vunpack.c.h.b16 %v307
    %v1330 = vunpack.c.l.b16 %v308
    %v1331 = vunpack.c.h.b16 %v308
    %v1332 = vunpack.c.l.b16 %v309
    %v1333 = vunpack.c.h.b16 %v309
    %v1334 = vunpack.c.l.b16 %v310
    %v1335 = vunpack.c.h.b16 %v310
    %v1336 = vunpack.c.l.b16 %v311
    %v1337 = vunpack.c.h.b16 %v311
    %v1338 = vunpack.c.l.b16 %v312
    %v1339 = vunpack.c.h.b16 %v312
    %v1340 = vunpack.c.l.b16 %v313
    %v1341 = vunpack.c.h.b16 %v313
    %v1342 = vunpack.c.l.b16 %v314
    %v1343 = vunpack.c.h.b16 %v314
    %v1344 = vunpack.c.l.b16 %v315
    %v1345 = vunpack.c.h.b16 %v315
    %v1346 = vunpack.c.l.b16 %v316
    %v1347 = vunpack.c.h.b16 %v316
    %v1348 = vunpack.c.l.b16 %v317
    %v1349 = vunpack.c.h.b16 %v317
    %v1350 = vunpack.c.l.b16 %v318
    %v1351 = vunpack.c.h.b16 %v318
    %v1352 = vunpack.c.l.b16 %v319
    %v1353 = vunpack.c.h.b16 %v319
    %v1354 = vunpack.c.l.b16 %v320
    %v1355 = vunpack.c.h.b16 %v320
    %v1356 = vunpack.c.l.b16 %v321
    %v1357 = vunpack.c.h.b16 %v321
    %v1358 = vunpack.c.l.b16 %v322
    %v1359 = vunpack.c.h.b16 %v322
    %v1360 = vunpack.c.l.b16 %v323
    %v1361 = vunpack.c.h.b16 %v323
    %v1362 = vunpack.c.l.b16 %v324
    %v1363 = vunpack.c.h.b16 %v324
    %v1364 = vunpack.c.l.b16 %v325
    %v1365 = vunpack.c.h.b16 %v325
    %v1366 = vunpack.c.l.b16 %v326
    %v1367 = vunpack.c.h.b16 %v326
    %v1368 = vunpack.c.l.b16 %v327
    %v1369 = vunpack.c.h.b16 %v327
    %v1370 = vunpack.c.l.b16 %v328
    %v1371 = vunpack.c.h.b16 %v328
    %v1372 = vunpack.c.l.b16 %v329
    %v1373 = vunpack.c.h.b16 %v329
    %v1374 = vunpack.c.l.b16 %v330
    %v1375 = vunpack.c.h.b16 %v330
    %v1376 = vunpack.c.l.b16 %v331
    %v1377 = vunpack.c.h.b16 %v331
    %v1378 = vunpack.c.l.b16 %v332
    %v1379 = vunpack.c.h.b16 %v332
    %v1380 = vunpack.c.l.b16 %v333
    %v1381 = vunpack.c.h.b16 %v333
    %v1382 = vunpack.c.l.b16 %v334
    %v1383 = vunpack.c.h.b16 %v334
    %v1384 = vunpack.c.l.b16 %v335
    %v1385 = vunpack.c.h.b16 %v335
    %v1386 = vunpack.c.l.b16 %v336
    %v1387 = vunpack.c.h.b16 %v336
    %v1388 = vunpack.c.l.b16 %v337
    %v1389 = vunpack.c.h.b16 %v337
    %v1390 = vunpack.c.l.b16 %v338
    %v1391 = vunpack.c.h.b16 %v338
    %v1392 = vunpack.c.l.b16 %v339
    %v1393 = vunpack.c.h.b16 %v339
    %v1394 = vunpack.c.l.b16 %v340
    %v1395 = vunpack.c.h.b16 %v340
    %v1396 = vunpack.c.l.b16 %v341
    %v1397 = vunpack.c.h.b16 %v341
    %v1398 = vunpack.c.l.b16 %v342
    %v1399 = vunpack.c.h.b16 %v342
    %v1400 = vunpack.c.l.b16 %v343
    %v1401 = vunpack.c.h.b16 %v343
    %v1402 = vunpack.c.l.b16 %v344
    %v1403 = vunpack.c.h.b16 %v344
    %v1404 = vunpack.c.l.b16 %v345
    %v1405 = vunpack.c.h.b16 %v345
    %v1406 = vunpack.c.l.b16 %v346
    %v1407 = vunpack.c.h.b16 %v346
    %v1408 = vunpack.c.l.b16 %v347
    %v1409 = vunpack.c.h.b16 %v347
    %v1410 = vunpack.c.l.b16 %v348
    %v1411 = vunpack.c.h.b16 %v348
    %v1412 = vunpack.c.l.b16 %v349
    %v1413 = vunpack.c.h.b16 %v349
    %v1414 = vunpack.c.l.b16 %v350
    %v1415 = vunpack.c.h.b16 %v350
    %v1416 = vunpack.c.l.b16 %v351
    %v1417 = vunpack.c.h.b16 %v351
    %v1418 = vunpack.c.l.b16 %v352
    %v1419 = vunpack.c.h.b16 %v352
    %v1420 = vunpack.c.l.b16 %v353
    %v1421 = vunpack.c.h.b16 %v353
    %v1422 = vunpack.c.l.b16 %v354
    %v1423 = vunpack.c.h.b16 %v354
    %v1424 = vunpack.c.l.b16 %v355
    %v1425 = vunpack.c.h.b16 %v355
    %v1426 = vunpack.c.l.b16 %v356
    %v1427 = vunpack.c.h.b16 %v356
    %v1428 = vunpack.c.l.b16 %v357
    %v1429 = vunpack.c.h.b16 %v357
    %v1430 = vunpack.c.l.b16 %v358
    %v1431 = vunpack.c.h.b16 %v358
    %v1432 = vunpack.c.l.b16 %v359
    %v1433 = vunpack.c.h.b16 %v359
    %v1434 = vunpack.c.l.b16 %v360
    %v1435 = vunpack.c.h.b16 %v360
    %v1436 = vunpack.c.l.b16 %v361
    %v1437 = vunpack.c.h.b16 %v361
    %v1438 = vunpack.c.l.b16 %v362
    %v1439 = vunpack.c.h.b16 %v362
    %v1440 = vunpack.c.l.b16 %v363
    %v1441 = vunpack.c.h.b16 %v363
    %v1442 = vunpack.c.l.b16 %v364
    %v1443 = vunpack.c.h.b16 %v364
    %v1444 = vunpack.c.l.b16 %v365
    %v1445 = vunpack.c.h.b16 %v365
    %v1446 = vunpack.c.l.b16 %v366
    %v1447 = vunpack.c.h.b16 %v366
    %v1448 = vunpack.c.l.b16 %v367
    %v1449 = vunpack.c.h.b16 %v367
    %v1450 = vunpack.c.l.b16 %v368
    %v1451 = vunpack.c.h.b16 %v368
    %v1452 = vunpack.c.l.b16 %v369
    %v1453 = vunpack.c.h.b16 %v369
    %v1454 = vunpack.c.l.b16 %v370
    %v1455 = vunpack.c.h.b16 %v370
    %v1456 = vunpack.c.l.b16 %v371
    %v1457 = vunpack.c.h.b16 %v371
    %v1458 = vunpack.c.l.b16 %v372
    %v1459 = vunpack.c.h.b16 %v372
    %v1460 = vunpack.c.l.b16 %v373
    %v1461 = vunpack.c.h.b16 %v373
    %v1462 = vunpack.c.l.b16 %v374
    %v1463 = vunpack.c.h.b16 %v374
    %v1464 = vunpack.c.l.b16 %v375
    %v1465 = vunpack.c.h.b16 %v375
    %v1466 = vunpack.c.l.b16 %v376
    %v1467 = vunpack.c.h.b16 %v376
    %v1468 = vunpack.c.l.b16 %v377
    %v1469 = vunpack.c.h.b16 %v377
    %v1470 = vunpack.c.l.b16 %v378
    %v1471 = vunpack.c.h.b16 %v378
    %v1472 = vunpack.c.l.b16 %v379
    %v1473 = vunpack.c.h.b16 %v379
    %v1474 = vunpack.c.l.b16 %v380
    %v1475 = vunpack.c.h.b16 %v380
    %v1476 = vunpack.c.l.b16 %v381
    %v1477 = vunpack.c.h.b16 %v381
    %v1478 = vunpack.c.l.b16 %v382
    %v1479 = vunpack.c.h.b16 %v382
    %v1480 = vunpack.c.l.b16 %v383
    %v1481 = vunpack.c.h.b16 %v383
    %v1482 = vunpack.c.l.b16 %v384
    %v1483 = vunpack.c.h.b16 %v384
    %v1484 = vunpack.c.l.b16 %v385
    %v1485 = vunpack.c.h.b16 %v385
    %v1486 = vunpack.c.l.b16 %v386
    %v1487 = vunpack.c.h.b16 %v386
    %v1488 = vunpack.c.l.b16 %v387
    %v1489 = vunpack.c.h.b16 %v387
    %v1490 = vunpack.c.l.b16 %v388
    %v1491 = vunpack.c.h.b16 %v388
    %v1492 = vunpack.c.l.b16 %v389
    %v1493 = vunpack.c.h.b16 %v389
    %v1494 = vunpack.c.l.b16 %v390
    %v1495 = vunpack.c.h.b16 %v390
    %v1496 = vunpack.c.l.b16 %v391
    %v1497 = vunpack.c.h.b16 %v391
    %v1498 = vunpack.c.l.b16 %v392
    %v1499 = vunpack.c.h.b16 %v392
    %v1500 = vunpack.c.l.b16 %v393
    %v1501 = vunpack.c.h.b16 %v393
    %v1502 = vunpack.c.l.b16 %v394
    %v1503 = vunpack.c.h.b16 %v394
    %v1504 = vunpack.c.l.b16 %v395
    %v1505 = vunpack.c.h.b16 %v395
    %v1506 = vunpack.c.l.b16 %v396
    %v1507 = vunpack.c.h.b16 %v396
    %v1508 = vunpack.c.l.b16 %v397
    %v1509 = vunpack.c.h.b16 %v397
    %v1510 = vunpack.c.l.b16 %v398
    %v1511 = vunpack.c.h.b16 %v398
    %v1512 = vunpack.c.l.b16 %v399
    %v1513 = vunpack.c.h.b16 %v399
    %v1514 = vunpack.c.l.b16 %v400
    %v1515 = vunpack.c.h.b16 %v400
    %v1516 = vunpack.c.l.b16 %v401
    %v1517 = vunpack.c.h.b16 %v401
    %v1518 = vunpack.c.l.b16 %v402
    %v1519 = vunpack.c.h.b16 %v402
    %v1520 = vunpack.c.l.b16 %v403
    %v1521 = vunpack.c.h.b16 %v403
    %v1522 = vunpack.c.l.b16 %v404
    %v1523 = vunpack.c.h.b16 %v404
    %v1524 = vunpack.c.l.b16 %v405
    %v1525 = vunpack.c.h.b16 %v405
    %v1526 = vunpack.c.l.b16 %v406
    %v1527 = vunpack.c.h.b16 %v406
    %v1528 = vunpack.c.l.b16 %v407
    %v1529 = vunpack.c.h.b16 %v407
    %v1530 = vunpack.c.l.b16 %v408
    %v1531 = vunpack.c.h.b16 %v408
    %v1532 = vunpack.c.l.b16 %v409
    %v1533 = vunpack.c.h.b16 %v409
    %v1534 = vunpack.c.l.b16 %v410
    %v1535 = vunpack.c.h.b16 %v410
    %v1536 = vunpack.c.l.b16 %v411
    %v1537 = vunpack.c.h.b16 %v411
    %v1538 = vunpack.c.l.b16 %v412
    %v1539 = vunpack.c.h.b16 %v412
    %v1540 = vunpack.c.l.b16 %v413
    %v1541 = vunpack.c.h.b16 %v413
    %v1542 = vunpack.c.l.b16 %v414
    %v1543 = vunpack.c.h.b16 %v414
    %v1544 = vunpack.c.l.b16 %v415
    %v1545 = vunpack.c.h.b16 %v415
    %v1546 = vunpack.c.l.b16 %v416
    %v1547 = vunpack.c.h.b16 %v416
    %v1548 = vunpack.c.l.b16 %v417
    %v1549 = vunpack.c.h.b16 %v417
    %v1550 = vunpack.c.l.b16 %v418
    %v1551 = vunpack.c.h.b16 %v418
    %v1552 = vunpack.c.l.b16 %v419
    %v1553 = vunpack.c.h.b16 %v419
    %v1554 = vunpack.c.l.b16 %v420
    %v1555 = vunpack.c.h.b16 %v420
    %v1556 = vunpack.c.l.b16 %v421
    %v1557 = vunpack.c.h.b16 %v421
    %v1558 = vpack.c.b16 %v988, %v982
    %v1559 = vpack.c.b16 %v989, %v983
    %v1560 = vpack.c.b16 %v990, %v984
    %v1561 = vpack.c.b16 %v991, %v985
    %v1562 = vpack.c.b16 %v992, %v986
    %v1563 = vpack.c.b16 %v993, %v987
    %v1564 = vpack.c.b16 %v1000, %v994
    %v1565 = vpack.c.b16 %v1001, %v995
    %v1566 = vpack.c.b16 %v1002, %v996
    %v1567 = vpack.c.b16 %v1003, %v997
    %v1568 = vpack.c.b16 %v1004, %v998
    %v1569 = vpack.c.b16 %v1005, %v999
    %v1570 = vpack.c.b16 %v1012, %v1006
    %v1571 = vpack.c.b16 %v1013, %v1007
    %v1572 = vpack.c.b16 %v1014, %v1008
    %v1573 = vpack.c.b16 %v1015, %v1009
    %v1574 = vpack.c.b16 %v1016, %v1010
    %v1575 = vpack.c.b16 %v1017, %v1011
    %v1576 = vpack.c.b16 %v1024, %v1018
    %v1577 = vpack.c.b16 %v1025, %v1019
    %v1578 = vpack.c.b16 %v1026, %v1020
    %v1579 = vpack.c.b16 %v1027, %v1021
    %v1580 = vpack.c.b16 %v1028, %v1022
    %v1581 = vpack.c.b16 %v1029, %v1023
    %v1582 = vpack.c.b16 %v1036, %v1030
    %v1583 = vpack.c.b16 %v1037, %v1031
    %v1584 = vpack.c.b16 %v1038, %v1032
    %v1585 = vpack.c.b16 %v1039, %v1033
    %v1586 = vpack.c.b16 %v1040, %v1034
    %v1587 = vpack.c.b16 %v1041, %v1035
    %v1588 = vpack.c.b16 %v1048, %v1042
    %v1589 = vpack.c.b16 %v1049, %v1043
    %v1590 = vpack.c.b16 %v1050, %v1044
    %v1591 = vpack.c.b16 %v1051, %v1045
    %v1592 = vpack.c.b16 %v1052, %v1046
    %v1593 = vpack.c.b16 %v1053, %v1047
    %v1594 = vpack.c.b16 %v1060, %v1054
    %v1595 = vpack.c.b16 %v1061, %v1055
    %v1596 = vpack.c.b16 %v1062, %v1056
    %v1597 = vpack.c.b16 %v1063, %v1057
    %v1598 = vpack.c.b16 %v1064, %v1058
    %v1599 = vpack.c.b16 %v1065, %v1059
    %v1600 = vpack.c.b16 %v1072, %v1066
    %v1601 = vpack.c.b16 %v1073, %v1067
    %v1602 = vpack.c.b16 %v1074, %v1068
    %v1603 = vpack.c.b16 %v1075, %v1069
    %v1604 = vpack.c.b16 %v1076, %v1070
    %v1605 = vpack.c.b16 %v1077, %v1071
    %v1606 = vpack.c.b16 %v1084, %v1078
    %v1607 = vpack.c.b16 %v1085, %v1079
    %v1608 = vpack.c.b16 %v1086, %v1080
    %v1609 = vpack.c.b16 %v1087, %v1081
    %v1610 = vpack.c.b16 %v1088, %v1082
    %v1611 = vpack.c.b16 %v1089, %v1083
    %v1612 = vpack.c.b16 %v1096, %v1090
    %v1613 = vpack.c.b16 %v1097, %v1091
    %v1614 = vpack.c.b16 %v1098, %v1092
    %v1615 = vpack.c.b16 %v1099, %v1093
    %v1616 = vpack.c.b16 %v1100, %v1094
    %v1617 = vpack.c.b16 %v1101, %v1095
    %v1618 = vpack.c.b16 %v1108, %v1102
    %v1619 = vpack.c.b16 %v1109, %v1103
    %v1620 = vpack.c.b16 %v1110, %v1104
    %v1621 = vpack.c.b16 %v1111, %v1105
    %v1622 = vpack.c.b16 %v1112, %v1106
    %v1623 = vpack.c.b16 %v1113, %v1107
    %v1624 = vpack.c.b16 %v1120, %v1114
    %v1625 = vpack.c.b16 %v1121, %v1115
    %v1626 = vpack.c.b16 %v1122, %v1116
    %v1627 = vpack.c.b16 %v1123, %v1117
    %v1628 = vpack.c.b16 %v1124, %v1118
    %v1629 = vpack.c.b16 %v1125, %v1119
    %v1630 = vpack.c.b16 %v1132, %v1126
    %v1631 = vpack.c.b16 %v1133, %v1127
    %v1632 = vpack.c.b16 %v1134, %v1128
    %v1633 = vpack.c.b16 %v1135, %v1129
    %v1634 = vpack.c.b16 %v1136, %v1130
    %v1635 = vpack.c.b16 %v1137, %v1131
    %v1636 = vpack.c.b16 %v1144, %v1138
    %v1637 = vpack.c.b16 %v1145, %v1139
    %v1638 = vpack.c.b16 %v1146, %v1140
    %v1639 = vpack.c.b16 %v1147, %v1141
    %v1640 = vpack.c.b16 %v1148, %v1142
    %v1641 = vpack.c.b16 %v1149, %v1143
    %v1642 = vpack.c.b16 %v1156, %v1150
    %v1643 = vpack.c.b16 %v1157, %v1151
    %v1644 = vpack.c.b16 %v1158, %v1152
    %v1645 = vpack.c.b16 %v1159, %v1153
    %v1646 = vpack.c.b16 %v1160, %v1154
    %v1647 = vpack.c.b16 %v1161, %v1155
    %v1648 = vpack.c.b16 %v1168, %v1162
    %v1649 = vpack.c.b16 %v1169, %v1163
    %v1650 = vpack.c.b16 %v1170, %v1164
    %v1651 = vpack.c.b16 %v1171, %v1165
    %v1652 = vpack.c.b16 %v1172, %v1166
    %v1653 = vpack.c.b16 %v1173, %v1167
    %v1654 = vpack.c.b16 %v1180, %v1174
    %v1655 = vpack.c.b16 %v1181, %v1175
    %v1656 = vpack.c.b16 %v1182, %v1176
    %v1657 = vpack.c.b16 %v1183, %v1177
    %v1658 = vpack.c.b16 %v1184, %v1178
    %v1659 = vpack.c.b16 %v1185, %v1179
    %v1660 = vpack.c.b16 %v1192, %v1186
    %v1661 = vpack.c.b16 %v1193, %v1187
    %v1662 = vpack.c.b16 %v1194, %v1188
    %v1663 = vpack.c.b16 %v1195, %v1189
    %v1664 = vpack.c.b16 %v1196, %v1190
    %v1665 = vpack.c.b16 %v1197, %v1191
    %v1666 = vpack.c.b16 %v1204, %v1198
    %v1667 = vpack.c.b16 %v1205, %v1199
    %v1668 = vpack.c.b16 %v1206, %v1200
    %v1669 = vpack.c.b16 %v1207, %v1201
    %v1670 = vpack.c.b16 %v1208, %v1202
    %v1671 = vpack.c.b16 %v1209, %v1203
    %v1672 = vpack.c.b16 %v1216, %v1210
    %v1673 = vpack.c.b16 %v1217, %v1211
    %v1674 = vpack.c.b16 %v1218, %v1212
    %v1675 = vpack.c.b16 %v1219, %v1213
    %v1676 = vpack.c.b16 %v1220, %v1214
    %v1677 = vpack.c.b16 %v1221, %v1215
    %v1678 = vpack.c.b16 %v1228, %v1222
    %v1679 = vpack.c.b16 %v1229, %v1223
    %v1680 = vpack.c.b16 %v1230, %v1224
    %v1681 = vpack.c.b16 %v1231, %v1225
    %v1682 = vpack.c.b16 %v1232, %v1226
    %v1683 = vpack.c.b16 %v1233, %v1227
    %v1684 = vpack.c.b16 %v1240, %v1234
    %v1685 = vpack.c.b16 %v1241, %v1235
    %v1686 = vpack.c.b16 %v1242, %v1236
    %v1687 = vpack.c.b16 %v1243, %v1237
    %v1688 = vpack.c.b16 %v1244, %v1238
    %v1689 = vpack.c.b16 %v1245, %v1239
    %v1690 = vpack.c.b16 %v1252, %v1246
    %v1691 = vpack.c.b16 %v1253, %v1247
    %v1692 = vpack.c.b16 %v1254, %v1248
    %v1693 = vpack.c.b16 %v1255, %v1249
    %v1694 = vpack.c.b16 %v1256, %v1250
    %v1695 = vpack.c.b16 %v1257, %v1251
    %v1696 = vpack.c.b16 %v1264, %v1258
    %v1697 = vpack.c.b16 %v1265, %v1259
    %v1698 = vpack.c.b16 %v1266, %v1260
    %v1699 = vpack.c.b16 %v1267, %v1261
    %v1700 = vpack.c.b16 %v1268, %v1262
    %v1701 = vpack.c.b16 %v1269, %v1263
    %v1702 = vpack.c.b16 %v1276, %v1270
    %v1703 = vpack.c.b16 %v1277, %v1271
    %v1704 = vpack.c.b16 %v1278, %v1272
    %v1705 = vpack.c.b16 %v1279, %v1273
    %v1706 = vpack.c.b16 %v1280, %v1274
    %v1707 = vpack.c.b16 %v1281, %v1275
    %v1708 = vpack.c.b16 %v1288, %v1282
    %v1709 = vpack.c.b16 %v1289, %v1283
    %v1710 = vpack.c.b16 %v1290, %v1284
    %v1711 = vpack.c.b16 %v1291, %v1285
    %v1712 = vpack.c.b16 %v1292, %v1286
    %v1713 = vpack.c.b16 %v1293, %v1287
    %v1714 = vpack.c.b16 %v1300, %v1294
    %v1715 = vpack.c.b16 %v1301, %v1295
    %v1716 = vpack.c.b16 %v1302, %v1296
    %v1717 = vpack.c.b16 %v1303, %v1297
    %v1718 = vpack.c.b16 %v1304, %v1298
    %v1719 = vpack.c.b16 %v1305, %v1299
    %v1720 = vpack.c.b16 %v1312, %v1306
    %v1721 = vpack.c.b16 %v1313, %v1307
    %v1722 = vpack.c.b16 %v1314, %v1308
    %v1723 = vpack.c.b16 %v1315, %v1309
    %v1724 = vpack.c.b16 %v1316, %v1310
    %v1725 = vpack.c.b16 %v1317, %v1311
    %v1726 = vpack.c.b16 %v1324, %v1318
    %v1727 = vpack.c.b16 %v1325, %v1319
    %v1728 = vpack.c.b16 %v1326, %v1320
    %v1729 = vpack.c.b16 %v1327, %v1321
    %v1730 = vpack.c.b16 %v1328, %v1322
    %v1731 = vpack.c.b16 %v1329, %v1323
    %v1732 = vpack.c.b16 %v1336, %v1330
    %v1733 = vpack.c.b16 %v1337, %v1331
    %v1734 = vpack.c.b16 %v1338, %v1332
    %v1735 = vpack.c.b16 %v1339, %v1333
    %v1736 = vpack.c.b16 %v1340, %v1334
    %v1737 = vpack.c.b16 %v1341, %v1335
    %v1738 = vpack.c.b16 %v1348, %v1342
    %v1739 = vpack.c.b16 %v1349, %v1343
    %v1740 = vpack.c.b16 %v1350, %v1344
    %v1741 = vpack.c.b16 %v1351, %v1345
    %v1742 = vpack.c.b16 %v1352, %v1346
    %v1743 = vpack.c.b16 %v1353, %v1347
    %v1744 = vpack.c.b16 %v1360, %v1354
    %v1745 = vpack.c.b16 %v1361, %v1355
    %v1746 = vpack.c.b16 %v1362, %v1356
    %v1747 = vpack.c.b16 %v1363, %v1357
    %v1748 = vpack.c.b16 %v1364, %v1358
    %v1749 = vpack.c.b16 %v1365, %v1359
    %v1750 = vpack.c.b16 %v1372, %v1366
    %v1751 = vpack.c.b16 %v1373, %v1367
    %v1752 = vpack.c.b16 %v1374, %v1368
    %v1753 = vpack.c.b16 %v1375, %v1369
    %v1754 = vpack.c.b16 %v1376, %v1370
    %v1755 = vpack.c.b16 %v1377, %v1371
    %v1756 = vpack.c.b16 %v1384, %v1378
    %v1757 = vpack.c.b16 %v1385, %v1379
    %v1758 = vpack.c.b16 %v1386, %v1380
    %v1759 = vpack.c.b16 %v1387, %v1381
    %v1760 = vpack.c.b16 %v1388, %v1382
    %v1761 = vpack.c.b16 %v1389, %v1383
    %v1762 = vpack.c.b16 %v1396, %v1390
    %v1763 = vpack.c.b16 %v1397, %v1391
    %v1764 = vpack.c.b16 %v1398, %v1392
    %v1765 = vpack.c.b16 %v1399, %v1393
    %v1766 = vpack.c.b16 %v1400, %v1394
    %v1767 = vpack.c.b16 %v1401, %v1395
    %v1768 = vpack.c.b16 %v1408, %v1402
    %v1769 = vpack.c.b16 %v1409, %v1403
    %v1770 = vpack.c.b16 %v1410, %v1404
    %v1771 = vpack.c.b16 %v1411, %v1405
    %v1772 = vpack.c.b16 %v1412, %v1406
    %v1773 = vpack.c.b16 %v1413, %v1407
    %v1774 = vpack.c.b16 %v1420, %v1414
    %v1775 = vpack.c.b16 %v1421, %v1415
    %v1776 = vpack.c.b16 %v1422, %v1416
    %v1777 = vpack.c.b16 %v1423, %v1417
    %v1778 = vpack.c.b16 %v1424, %v1418
    %v1779 = vpack.c.b16 %v1425, %v1419
    %v1780 = vpack.c.b16 %v1432, %v1426
    %v1781 = vpack.c.b16 %v1433, %v1427
    %v1782 = vpack.c.b16 %v1434, %v1428
    %v1783 = vpack.c.b16 %v1435, %v1429
    %v1784 = vpack.c.b16 %v1436, %v1430
    %v1785 = vpack.c.b16 %v1437, %v1431
    %v1786 = vpack.c.b16 %v1444, %v1438
    %v1787 = vpack.c.b16 %v1445, %v1439
    %v1788 = vpack.c.b16 %v1446, %v1440
    %v1789 = vpack.c.b16 %v1447, %v1441
    %v1790 = vpack.c.b16 %v1448, %v1442
    %v1791 = vpack.c.b16 %v1449, %v1443
    %v1792 = vpack.c.b16 %v1456, %v1450
    %v1793 = vpack.c.b16 %v1457, %v1451
    %v1794 = vpack.c.b16 %v1458, %v1452
    %v1795 = vpack.c.b16 %v1459, %v1453
    %v1796 = vpack.c.b16 %v1460, %v1454
    %v1797 = vpack.c.b16 %v1461, %v1455
    %v1798 = vpack.c.b16 %v1468, %v1462
    %v1799 = vpack.c.b16 %v1469, %v1463
    %v1800 = vpack.c.b16 %v1470, %v1464
    %v1801 = vpack.c.b16 %v1471, %v1465
    %v1802 = vpack.c.b16 %v1472, %v1466
    %v1803 = vpack.c.b16 %v1473, %v1467
    %v1804 = vpack.c.b16 %v1480, %v1474
    %v1805 = vpack.c.b16 %v1481, %v1475
    %v1806 = vpack.c.b16 %v1482, %v1476
    %v1807 = vpack.c.b16 %v1483, %v1477
    %v1808 = vpack.c.b16 %v1484, %v1478
    %v1809 = vpack.c.b16 %v1485, %v1479
    %v1810 = vpack.c.b16 %v1492, %v1486
    %v1811 = vpack.c.b16 %v1493, %v1487
    %v1812 = vpack.c.b16 %v1494, %v1488
    %v1813 = vpack.c.b16 %v1495, %v1489
    %v1814 = vpack.c.b16 %v1496, %v1490
    %v1815 = vpack.c.b16 %v1497, %v1491
    %v1816 = vpack.c.b16 %v1504, %v1498
    %v1817 = vpack.c.b16 %v1505, %v1499
    %v1818 = vpack.c.b16 %v1506, %v1500
    %v1819 = vpack.c.b16 %v1507, %v1501
    %v1820 = vpack.c.b16 %v1508, %v1502
    %v1821 = vpack.c.b16 %v1509, %v1503
    %v1822 = vpack.c.b16 %v1516, %v1510
    %v1823 = vpack.c.b16 %v1517, %v1511
    %v1824 = vpack.c.b16 %v1518, %v1512
    %v1825 = vpack.c.b16 %v1519, %v1513
    %v1826 = vpack.c.b16 %v1520, %v1514
    %v1827 = vpack.c.b16 %v1521, %v1515
    %v1828 = vpack.c.b16 %v1528, %v1522
    %v1829 = vpack.c.b16 %v1529, %v1523
    %v1830 = vpack.c.b16 %v1530, %v1524
    %v1831 = vpack.c.b16 %v1531, %v1525
    %v1832 = vpack.c.b16 %v1532, %v1526
    %v1833 = vpack.c.b16 %v1533, %v1527
    %v1834 = vpack.c.b16 %v1540, %v1534
    %v1835 = vpack.c.b16 %v1541, %v1535
    %v1836 = vpack.c.b16 %v1542, %v1536
    %v1837 = vpack.c.b16 %v1543, %v1537
    %v1838 = vpack.c.b16 %v1544, %v1538
    %v1839 = vpack.c.b16 %v1545, %v1539
    %v1840 = vpack.c.b16 %v1552, %v1546
    %v1841 = vpack.c.b16 %v1553, %v1547
    %v1842 = vpack.c.b16 %v1554, %v1548
    %v1843 = vpack.c.b16 %v1555, %v1549
    %v1844 = vpack.c.b16 %v1556, %v1550
    %v1845 = vpack.c.b16 %v1557, %v1551
    %2134 = vmatprep.subr.bf16.mxu0 %v1601
    %2135 = vmatpush1.bf16.msra.mxu0 %v1600
    %2136 = vmatprep.subr.bf16.mxu0 %v1595
    %2137 = vmatpush1.bf16.msra.mxu0 %v1594
    %2138 = vmatprep.subr.bf16.mxu0 %v1589
    %2139 = vmatpush1.bf16.msra.mxu0 %v1588
    %2140 = vmatprep.subr.bf16.mxu0 %v1583
    %2141 = vmatpush1.bf16.msra.mxu0 %v1582
    %2142 = vmatprep.subr.bf16.mxu0 %v1577
    %2143 = vmatpush1.bf16.msra.mxu0 %v1576
    %2144 = vmatprep.subr.bf16.mxu0 %v1571
    %2145 = vmatpush1.bf16.msra.mxu0 %v1570
    %2146 = vmatprep.subr.bf16.mxu0 %v1565
    %2147 = vmatpush1.bf16.msra.mxu0 %v1564
    %2148 = vmatprep.subr.bf16.mxu0 %v1559
    %2149 = vmatpush1.bf16.msra.mxu0 %v1558
    %2150 = vmatprep.subr.bf16.mxu0 %v1649
    %2151 = vmatpush2.bf16.msra.mxu0 %v1648
    %2152 = vmatprep.subr.bf16.mxu0 %v1643
    %2153 = vmatpush2.bf16.msra.mxu0 %v1642
    %2154 = vmatprep.subr.bf16.mxu0 %v1637
    %2155 = vmatpush2.bf16.msra.mxu0 %v1636
    %2156 = vmatprep.subr.bf16.mxu0 %v1631
    %2157 = vmatpush2.bf16.msra.mxu0 %v1630
    %2158 = vmatprep.subr.bf16.mxu0 %v1625
    %2159 = vmatpush2.bf16.msra.mxu0 %v1624
    %2160 = vmatprep.subr.bf16.mxu0 %v1619
    %2161 = vmatpush2.bf16.msra.mxu0 %v1618
    %2162 = vmatprep.subr.bf16.mxu0 %v1613
    %2163 = vmatpush2.bf16.msra.mxu0 %v1612
    %2164 = vmatprep.subr.bf16.mxu0 %v1607
    %2165 = vmatpush2.bf16.msra.mxu0 %v1606
    %2166 = vmatprep.mubr.bf16.mxu0 %v599
    %2167 = vmatmul.mubr.bf16.gmra.mxu0 %v598
    %v2168 = vpop.f32.mrf.mxu0
    %v2169 = vadd.f32 %v427, %v2168
    %v2170 = vpop.f32.mrf.mxu0
    %v2171 = vadd.f32 %v431, %v2170
    %v2172 = vpop.f32.mrf.mxu0
    %v2173 = vadd.f32 %v427, %v2172
    %v2174 = vpop.f32.mrf.mxu0
    %v2175 = vadd.f32 %v431, %v2174
    %2176 = vmatprep.mubr.bf16.mxu0 %v605
    %2177 = vmatmul.mubr.bf16.gmra.mxu0 %v604
    %v2178 = vpop.f32.mrf.mxu0
    %v2179 = vadd.f32 %v427, %v2178
    %v2180 = vpop.f32.mrf.mxu0
    %v2181 = vadd.f32 %v431, %v2180
    %v2182 = vpop.f32.mrf.mxu0
    %v2183 = vadd.f32 %v427, %v2182
    %v2184 = vpop.f32.mrf.mxu0
    %v2185 = vadd.f32 %v431, %v2184
    %2186 = vmatprep.mubr.bf16.mxu0 %v611
    %2187 = vmatmul.mubr.bf16.gmra.mxu0 %v610
    %v2188 = vpop.f32.mrf.mxu0
    %v2189 = vadd.f32 %v427, %v2188
    %v2190 = vpop.f32.mrf.mxu0
    %v2191 = vadd.f32 %v431, %v2190
    %v2192 = vpop.f32.mrf.mxu0
    %v2193 = vadd.f32 %v427, %v2192
    %v2194 = vpop.f32.mrf.mxu0
    %v2195 = vadd.f32 %v431, %v2194
    %2196 = vmatprep.mubr.bf16.mxu0 %v617
    %2197 = vmatmul.mubr.bf16.gmra.mxu0 %v616
    %v2198 = vpop.f32.mrf.mxu0
    %v2199 = vadd.f32 %v427, %v2198
    %v2200 = vpop.f32.mrf.mxu0
    %v2201 = vadd.f32 %v431, %v2200
    %v2202 = vpop.f32.mrf.mxu0
    %v2203 = vadd.f32 %v427, %v2202
    %v2204 = vpop.f32.mrf.mxu0
    %v2205 = vadd.f32 %v431, %v2204
    %2206 = vmatprep.mubr.bf16.mxu0 %v623
    %2207 = vmatmul.mubr.bf16.gmra.mxu0 %v622
    %v2208 = vpop.f32.mrf.mxu0
    %v2209 = vadd.f32 %v427, %v2208
    %v2210 = vpop.f32.mrf.mxu0
    %v2211 = vadd.f32 %v431, %v2210
    %v2212 = vpop.f32.mrf.mxu0
    %v2213 = vadd.f32 %v427, %v2212
    %v2214 = vpop.f32.mrf.mxu0
    %v2215 = vadd.f32 %v431, %v2214
    %2216 = vmatprep.mubr.bf16.mxu0 %v629
    %2217 = vmatmul.mubr.bf16.gmra.mxu0 %v628
    %v2218 = vpop.f32.mrf.mxu0
    %v2219 = vadd.f32 %v427, %v2218
    %v2220 = vpop.f32.mrf.mxu0
    %v2221 = vadd.f32 %v431, %v2220
    %v2222 = vpop.f32.mrf.mxu0
    %v2223 = vadd.f32 %v427, %v2222
    %v2224 = vpop.f32.mrf.mxu0
    %v2225 = vadd.f32 %v431, %v2224
    %2226 = vmatprep.mubr.bf16.mxu0 %v635
    %2227 = vmatmul.mubr.bf16.gmra.mxu0 %v634
    %v2228 = vpop.f32.mrf.mxu0
    %v2229 = vadd.f32 %v427, %v2228
    %v2230 = vpop.f32.mrf.mxu0
    %v2231 = vadd.f32 %v431, %v2230
    %v2232 = vpop.f32.mrf.mxu0
    %v2233 = vadd.f32 %v427, %v2232
    %v2234 = vpop.f32.mrf.mxu0
    %v2235 = vadd.f32 %v431, %v2234
    %2236 = vmatprep.mubr.bf16.mxu0 %v641
    %2237 = vmatmul.mubr.bf16.gmra.mxu0 %v640
    %v2238 = vpop.f32.mrf.mxu0
    %v2239 = vadd.f32 %v427, %v2238
    %v2240 = vpop.f32.mrf.mxu0
    %v2241 = vadd.f32 %v431, %v2240
    %v2242 = vpop.f32.mrf.mxu0
    %v2243 = vadd.f32 %v427, %v2242
    %v2244 = vpop.f32.mrf.mxu0
    %v2245 = vadd.f32 %v431, %v2244
    %2246 = vdwg.mxu0
    %2247 = vmatprep.subr.bf16.mxu0 %v1697
    %2248 = vmatpush1.bf16.msra.mxu0 %v1696
    %2249 = vmatprep.subr.bf16.mxu0 %v1691
    %2250 = vmatpush1.bf16.msra.mxu0 %v1690
    %2251 = vmatprep.subr.bf16.mxu0 %v1685
    %2252 = vmatpush1.bf16.msra.mxu0 %v1684
    %2253 = vmatprep.subr.bf16.mxu0 %v1679
    %2254 = vmatpush1.bf16.msra.mxu0 %v1678
    %2255 = vmatprep.subr.bf16.mxu0 %v1673
    %2256 = vmatpush1.bf16.msra.mxu0 %v1672
    %2257 = vmatprep.subr.bf16.mxu0 %v1667
    %2258 = vmatpush1.bf16.msra.mxu0 %v1666
    %2259 = vmatprep.subr.bf16.mxu0 %v1661
    %2260 = vmatpush1.bf16.msra.mxu0 %v1660
    %2261 = vmatprep.subr.bf16.mxu0 %v1655
    %2262 = vmatpush1.bf16.msra.mxu0 %v1654
    %2263 = vmatprep.subr.bf16.mxu0 %v1745
    %2264 = vmatpush2.bf16.msra.mxu0 %v1744
    %2265 = vmatprep.subr.bf16.mxu0 %v1739
    %2266 = vmatpush2.bf16.msra.mxu0 %v1738
    %2267 = vmatprep.subr.bf16.mxu0 %v1733
    %2268 = vmatpush2.bf16.msra.mxu0 %v1732
    %2269 = vmatprep.subr.bf16.mxu0 %v1727
    %2270 = vmatpush2.bf16.msra.mxu0 %v1726
    %2271 = vmatprep.subr.bf16.mxu0 %v1721
    %2272 = vmatpush2.bf16.msra.mxu0 %v1720
    %2273 = vmatprep.subr.bf16.mxu0 %v1715
    %2274 = vmatpush2.bf16.msra.mxu0 %v1714
    %2275 = vmatprep.subr.bf16.mxu0 %v1709
    %2276 = vmatpush2.bf16.msra.mxu0 %v1708
    %2277 = vmatprep.subr.bf16.mxu0 %v1703
    %2278 = vmatpush2.bf16.msra.mxu0 %v1702
    %2279 = vmatprep.mubr.bf16.mxu0 %v601
    %2280 = vmatmul.mubr.bf16.gmra.mxu0 %v600
    %v2281 = vpop.f32.mrf.mxu0
    %v2282 = vadd.f32 %v2169, %v2281
    %v2283 = vpop.f32.mrf.mxu0
    %v2284 = vadd.f32 %v2171, %v2283
    %v2285 = vpop.f32.mrf.mxu0
    %v2286 = vadd.f32 %v2173, %v2285
    %v2287 = vpop.f32.mrf.mxu0
    %v2288 = vadd.f32 %v2175, %v2287
    %2289 = vmatprep.mubr.bf16.mxu0 %v607
    %2290 = vmatmul.mubr.bf16.gmra.mxu0 %v606
    %v2291 = vpop.f32.mrf.mxu0
    %v2292 = vadd.f32 %v2179, %v2291
    %v2293 = vpop.f32.mrf.mxu0
    %v2294 = vadd.f32 %v2181, %v2293
    %v2295 = vpop.f32.mrf.mxu0
    %v2296 = vadd.f32 %v2183, %v2295
    %v2297 = vpop.f32.mrf.mxu0
    %v2298 = vadd.f32 %v2185, %v2297
    %2299 = vmatprep.mubr.bf16.mxu0 %v613
    %2300 = vmatmul.mubr.bf16.gmra.mxu0 %v612
    %v2301 = vpop.f32.mrf.mxu0
    %v2302 = vadd.f32 %v2189, %v2301
    %v2303 = vpop.f32.mrf.mxu0
    %v2304 = vadd.f32 %v2191, %v2303
    %v2305 = vpop.f32.mrf.mxu0
    %v2306 = vadd.f32 %v2193, %v2305
    %v2307 = vpop.f32.mrf.mxu0
    %v2308 = vadd.f32 %v2195, %v2307
    %2309 = vmatprep.mubr.bf16.mxu0 %v619
    %2310 = vmatmul.mubr.bf16.gmra.mxu0 %v618
    %v2311 = vpop.f32.mrf.mxu0
    %v2312 = vadd.f32 %v2199, %v2311
    %v2313 = vpop.f32.mrf.mxu0
    %v2314 = vadd.f32 %v2201, %v2313
    %v2315 = vpop.f32.mrf.mxu0
    %v2316 = vadd.f32 %v2203, %v2315
    %v2317 = vpop.f32.mrf.mxu0
    %v2318 = vadd.f32 %v2205, %v2317
    %2319 = vmatprep.mubr.bf16.mxu0 %v625
    %2320 = vmatmul.mubr.bf16.gmra.mxu0 %v624
    %v2321 = vpop.f32.mrf.mxu0
    %v2322 = vadd.f32 %v2209, %v2321
    %v2323 = vpop.f32.mrf.mxu0
    %v2324 = vadd.f32 %v2211, %v2323
    %v2325 = vpop.f32.mrf.mxu0
    %v2326 = vadd.f32 %v2213, %v2325
    %v2327 = vpop.f32.mrf.mxu0
    %v2328 = vadd.f32 %v2215, %v2327
    %2329 = vmatprep.mubr.bf16.mxu0 %v631
    %2330 = vmatmul.mubr.bf16.gmra.mxu0 %v630
    %v2331 = vpop.f32.mrf.mxu0
    %v2332 = vadd.f32 %v2219, %v2331
    %v2333 = vpop.f32.mrf.mxu0
    %v2334 = vadd.f32 %v2221, %v2333
    %v2335 = vpop.f32.mrf.mxu0
    %v2336 = vadd.f32 %v2223, %v2335
    %v2337 = vpop.f32.mrf.mxu0
    %v2338 = vadd.f32 %v2225, %v2337
    %2339 = vmatprep.mubr.bf16.mxu0 %v637
    %2340 = vmatmul.mubr.bf16.gmra.mxu0 %v636
    %v2341 = vpop.f32.mrf.mxu0
    %v2342 = vadd.f32 %v2229, %v2341
    %v2343 = vpop.f32.mrf.mxu0
    %v2344 = vadd.f32 %v2231, %v2343
    %v2345 = vpop.f32.mrf.mxu0
    %v2346 = vadd.f32 %v2233, %v2345
    %v2347 = vpop.f32.mrf.mxu0
    %v2348 = vadd.f32 %v2235, %v2347
    %2349 = vmatprep.mubr.bf16.mxu0 %v643
    %2350 = vmatmul.mubr.bf16.gmra.mxu0 %v642
    %v2351 = vpop.f32.mrf.mxu0
    %v2352 = vadd.f32 %v2239, %v2351
    %v2353 = vpop.f32.mrf.mxu0
    %v2354 = vadd.f32 %v2241, %v2353
    %v2355 = vpop.f32.mrf.mxu0
    %v2356 = vadd.f32 %v2243, %v2355
    %v2357 = vpop.f32.mrf.mxu0
    %v2358 = vadd.f32 %v2245, %v2357
    %2359 = vdwg.mxu0
    %2360 = vmatprep.subr.bf16.mxu0 %v1793
    %2361 = vmatpush1.bf16.msra.mxu0 %v1792
    %2362 = vmatprep.subr.bf16.mxu0 %v1787
    %2363 = vmatpush1.bf16.msra.mxu0 %v1786
    %2364 = vmatprep.subr.bf16.mxu0 %v1781
    %2365 = vmatpush1.bf16.msra.mxu0 %v1780
    %2366 = vmatprep.subr.bf16.mxu0 %v1775
    %2367 = vmatpush1.bf16.msra.mxu0 %v1774
    %2368 = vmatprep.subr.bf16.mxu0 %v1769
    %2369 = vmatpush1.bf16.msra.mxu0 %v1768
    %2370 = vmatprep.subr.bf16.mxu0 %v1763
    %2371 = vmatpush1.bf16.msra.mxu0 %v1762
    %2372 = vmatprep.subr.bf16.mxu0 %v1757
    %2373 = vmatpush1.bf16.msra.mxu0 %v1756
    %2374 = vmatprep.subr.bf16.mxu0 %v1751
    %2375 = vmatpush1.bf16.msra.mxu0 %v1750
    %2376 = vmatprep.subr.bf16.mxu0 %v1841
    %2377 = vmatpush2.bf16.msra.mxu0 %v1840
    %2378 = vmatprep.subr.bf16.mxu0 %v1835
    %2379 = vmatpush2.bf16.msra.mxu0 %v1834
    %2380 = vmatprep.subr.bf16.mxu0 %v1829
    %2381 = vmatpush2.bf16.msra.mxu0 %v1828
    %2382 = vmatprep.subr.bf16.mxu0 %v1823
    %2383 = vmatpush2.bf16.msra.mxu0 %v1822
    %2384 = vmatprep.subr.bf16.mxu0 %v1817
    %2385 = vmatpush2.bf16.msra.mxu0 %v1816
    %2386 = vmatprep.subr.bf16.mxu0 %v1811
    %2387 = vmatpush2.bf16.msra.mxu0 %v1810
    %2388 = vmatprep.subr.bf16.mxu0 %v1805
    %2389 = vmatpush2.bf16.msra.mxu0 %v1804
    %2390 = vmatprep.subr.bf16.mxu0 %v1799
    %2391 = vmatpush2.bf16.msra.mxu0 %v1798
    %2392 = vmatprep.mubr.bf16.mxu0 %v603
    %2393 = vmatmul.mubr.bf16.gmra.mxu0 %v602
    %v2394 = vpop.f32.mrf.mxu0
    %v2395 = vadd.f32 %v2282, %v2394
    %v2396 = vpop.f32.mrf.mxu0
    %v2397 = vadd.f32 %v2284, %v2396
    %v2398 = vpop.f32.mrf.mxu0
    %v2399 = vadd.f32 %v2286, %v2398
    %v2400 = vpop.f32.mrf.mxu0
    %v2401 = vadd.f32 %v2288, %v2400
    %2402 = vmatprep.mubr.bf16.mxu0 %v609
    %2403 = vmatmul.mubr.bf16.gmra.mxu0 %v608
    %v2404 = vpop.f32.mrf.mxu0
    %v2405 = vadd.f32 %v2292, %v2404
    %v2406 = vpop.f32.mrf.mxu0
    %v2407 = vadd.f32 %v2294, %v2406
    %v2408 = vpop.f32.mrf.mxu0
    %v2409 = vadd.f32 %v2296, %v2408
    %v2410 = vpop.f32.mrf.mxu0
    %v2411 = vadd.f32 %v2298, %v2410
    %2412 = vmatprep.mubr.bf16.mxu0 %v615
    %2413 = vmatmul.mubr.bf16.gmra.mxu0 %v614
    %v2414 = vpop.f32.mrf.mxu0
    %v2415 = vadd.f32 %v2302, %v2414
    %v2416 = vpop.f32.mrf.mxu0
    %v2417 = vadd.f32 %v2304, %v2416
    %v2418 = vpop.f32.mrf.mxu0
    %v2419 = vadd.f32 %v2306, %v2418
    %v2420 = vpop.f32.mrf.mxu0
    %v2421 = vadd.f32 %v2308, %v2420
    %2422 = vmatprep.mubr.bf16.mxu0 %v621
    %2423 = vmatmul.mubr.bf16.gmra.mxu0 %v620
    %v2424 = vpop.f32.mrf.mxu0
    %v2425 = vadd.f32 %v2312, %v2424
    %v2426 = vpop.f32.mrf.mxu0
    %v2427 = vadd.f32 %v2314, %v2426
    %v2428 = vpop.f32.mrf.mxu0
    %v2429 = vadd.f32 %v2316, %v2428
    %v2430 = vpop.f32.mrf.mxu0
    %v2431 = vadd.f32 %v2318, %v2430
    %2432 = vmatprep.mubr.bf16.mxu0 %v627
    %2433 = vmatmul.mubr.bf16.gmra.mxu0 %v626
    %v2434 = vpop.f32.mrf.mxu0
    %v2435 = vadd.f32 %v2322, %v2434
    %v2436 = vpop.f32.mrf.mxu0
    %v2437 = vadd.f32 %v2324, %v2436
    %v2438 = vpop.f32.mrf.mxu0
    %v2439 = vadd.f32 %v2326, %v2438
    %v2440 = vpop.f32.mrf.mxu0
    %v2441 = vadd.f32 %v2328, %v2440
    %2442 = vmatprep.mubr.bf16.mxu0 %v633
    %2443 = vmatmul.mubr.bf16.gmra.mxu0 %v632
    %v2444 = vpop.f32.mrf.mxu0
    %v2445 = vadd.f32 %v2332, %v2444
    %v2446 = vpop.f32.mrf.mxu0
    %v2447 = vadd.f32 %v2334, %v2446
    %v2448 = vpop.f32.mrf.mxu0
    %v2449 = vadd.f32 %v2336, %v2448
    %v2450 = vpop.f32.mrf.mxu0
    %v2451 = vadd.f32 %v2338, %v2450
    %2452 = vmatprep.mubr.bf16.mxu0 %v639
    %2453 = vmatmul.mubr.bf16.gmra.mxu0 %v638
    %v2454 = vpop.f32.mrf.mxu0
    %v2455 = vadd.f32 %v2342, %v2454
    %v2456 = vpop.f32.mrf.mxu0
    %v2457 = vadd.f32 %v2344, %v2456
    %v2458 = vpop.f32.mrf.mxu0
    %v2459 = vadd.f32 %v2346, %v2458
    %v2460 = vpop.f32.mrf.mxu0
    %v2461 = vadd.f32 %v2348, %v2460
    %2462 = vmatprep.mubr.bf16.mxu0 %v645
    %2463 = vmatmul.mubr.bf16.gmra.mxu0 %v644
    %v2464 = vpop.f32.mrf.mxu0
    %v2465 = vadd.f32 %v2352, %v2464
    %v2466 = vpop.f32.mrf.mxu0
    %v2467 = vadd.f32 %v2354, %v2466
    %v2468 = vpop.f32.mrf.mxu0
    %v2469 = vadd.f32 %v2356, %v2468
    %v2470 = vpop.f32.mrf.mxu0
    %v2471 = vadd.f32 %v2358, %v2470
    %2472 = vdwg.mxu0
    %2473 = vmatprep.subr.bf16.mxu0 %v1603
    %2474 = vmatpush1.bf16.msra.mxu0 %v1602
    %2475 = vmatprep.subr.bf16.mxu0 %v1597
    %2476 = vmatpush1.bf16.msra.mxu0 %v1596
    %2477 = vmatprep.subr.bf16.mxu0 %v1591
    %2478 = vmatpush1.bf16.msra.mxu0 %v1590
    %2479 = vmatprep.subr.bf16.mxu0 %v1585
    %2480 = vmatpush1.bf16.msra.mxu0 %v1584
    %2481 = vmatprep.subr.bf16.mxu0 %v1579
    %2482 = vmatpush1.bf16.msra.mxu0 %v1578
    %2483 = vmatprep.subr.bf16.mxu0 %v1573
    %2484 = vmatpush1.bf16.msra.mxu0 %v1572
    %2485 = vmatprep.subr.bf16.mxu0 %v1567
    %2486 = vmatpush1.bf16.msra.mxu0 %v1566
    %2487 = vmatprep.subr.bf16.mxu0 %v1561
    %2488 = vmatpush1.bf16.msra.mxu0 %v1560
    %2489 = vmatprep.subr.bf16.mxu0 %v1651
    %2490 = vmatpush2.bf16.msra.mxu0 %v1650
    %2491 = vmatprep.subr.bf16.mxu0 %v1645
    %2492 = vmatpush2.bf16.msra.mxu0 %v1644
    %2493 = vmatprep.subr.bf16.mxu0 %v1639
    %2494 = vmatpush2.bf16.msra.mxu0 %v1638
    %2495 = vmatprep.subr.bf16.mxu0 %v1633
    %2496 = vmatpush2.bf16.msra.mxu0 %v1632
    %2497 = vmatprep.subr.bf16.mxu0 %v1627
    %2498 = vmatpush2.bf16.msra.mxu0 %v1626
    %2499 = vmatprep.subr.bf16.mxu0 %v1621
    %2500 = vmatpush2.bf16.msra.mxu0 %v1620
    %2501 = vmatprep.subr.bf16.mxu0 %v1615
    %2502 = vmatpush2.bf16.msra.mxu0 %v1614
    %2503 = vmatprep.subr.bf16.mxu0 %v1609
    %2504 = vmatpush2.bf16.msra.mxu0 %v1608
    %2505 = vmatprep.mubr.bf16.mxu0 %v599
    %2506 = vmatmul.mubr.bf16.gmra.mxu0 %v598
    %v2507 = vpop.f32.mrf.mxu0
    %v2508 = vadd.f32 %v435, %v2507
    %v2509 = vpop.f32.mrf.mxu0
    %v2510 = vadd.f32 %v439, %v2509
    %v2511 = vpop.f32.mrf.mxu0
    %v2512 = vadd.f32 %v435, %v2511
    %v2513 = vpop.f32.mrf.mxu0
    %v2514 = vadd.f32 %v439, %v2513
    %2515 = vmatprep.mubr.bf16.mxu0 %v605
    %2516 = vmatmul.mubr.bf16.gmra.mxu0 %v604
    %v2517 = vpop.f32.mrf.mxu0
    %v2518 = vadd.f32 %v435, %v2517
    %v2519 = vpop.f32.mrf.mxu0
    %v2520 = vadd.f32 %v439, %v2519
    %v2521 = vpop.f32.mrf.mxu0
    %v2522 = vadd.f32 %v435, %v2521
    %v2523 = vpop.f32.mrf.mxu0
    %v2524 = vadd.f32 %v439, %v2523
    %2525 = vmatprep.mubr.bf16.mxu0 %v611
    %2526 = vmatmul.mubr.bf16.gmra.mxu0 %v610
    %v2527 = vpop.f32.mrf.mxu0
    %v2528 = vadd.f32 %v435, %v2527
    %v2529 = vpop.f32.mrf.mxu0
    %v2530 = vadd.f32 %v439, %v2529
    %v2531 = vpop.f32.mrf.mxu0
    %v2532 = vadd.f32 %v435, %v2531
    %v2533 = vpop.f32.mrf.mxu0
    %v2534 = vadd.f32 %v439, %v2533
    %2535 = vmatprep.mubr.bf16.mxu0 %v617
    %2536 = vmatmul.mubr.bf16.gmra.mxu0 %v616
    %v2537 = vpop.f32.mrf.mxu0
    %v2538 = vadd.f32 %v435, %v2537
    %v2539 = vpop.f32.mrf.mxu0
    %v2540 = vadd.f32 %v439, %v2539
    %v2541 = vpop.f32.mrf.mxu0
    %v2542 = vadd.f32 %v435, %v2541
    %v2543 = vpop.f32.mrf.mxu0
    %v2544 = vadd.f32 %v439, %v2543
    %2545 = vmatprep.mubr.bf16.mxu0 %v623
    %2546 = vmatmul.mubr.bf16.gmra.mxu0 %v622
    %v2547 = vpop.f32.mrf.mxu0
    %v2548 = vadd.f32 %v435, %v2547
    %v2549 = vpop.f32.mrf.mxu0
    %v2550 = vadd.f32 %v439, %v2549
    %v2551 = vpop.f32.mrf.mxu0
    %v2552 = vadd.f32 %v435, %v2551
    %v2553 = vpop.f32.mrf.mxu0
    %v2554 = vadd.f32 %v439, %v2553
    %2555 = vmatprep.mubr.bf16.mxu0 %v629
    %2556 = vmatmul.mubr.bf16.gmra.mxu0 %v628
    %v2557 = vpop.f32.mrf.mxu0
    %v2558 = vadd.f32 %v435, %v2557
    %v2559 = vpop.f32.mrf.mxu0
    %v2560 = vadd.f32 %v439, %v2559
    %v2561 = vpop.f32.mrf.mxu0
    %v2562 = vadd.f32 %v435, %v2561
    %v2563 = vpop.f32.mrf.mxu0
    %v2564 = vadd.f32 %v439, %v2563
    %2565 = vmatprep.mubr.bf16.mxu0 %v635
    %2566 = vmatmul.mubr.bf16.gmra.mxu0 %v634
    %v2567 = vpop.f32.mrf.mxu0
    %v2568 = vadd.f32 %v435, %v2567
    %v2569 = vpop.f32.mrf.mxu0
    %v2570 = vadd.f32 %v439, %v2569
    %v2571 = vpop.f32.mrf.mxu0
    %v2572 = vadd.f32 %v435, %v2571
    %v2573 = vpop.f32.mrf.mxu0
    %v2574 = vadd.f32 %v439, %v2573
    %2575 = vmatprep.mubr.bf16.mxu0 %v641
    %2576 = vmatmul.mubr.bf16.gmra.mxu0 %v640
    %v2577 = vpop.f32.mrf.mxu0
    %v2578 = vadd.f32 %v435, %v2577
    %v2579 = vpop.f32.mrf.mxu0
    %v2580 = vadd.f32 %v439, %v2579
    %v2581 = vpop.f32.mrf.mxu0
    %v2582 = vadd.f32 %v435, %v2581
    %v2583 = vpop.f32.mrf.mxu0
    %v2584 = vadd.f32 %v439, %v2583
    %2585 = vdwg.mxu0
    %2586 = vmatprep.subr.bf16.mxu0 %v1699
    %2587 = vmatpush1.bf16.msra.mxu0 %v1698
    %2588 = vmatprep.subr.bf16.mxu0 %v1693
    %2589 = vmatpush1.bf16.msra.mxu0 %v1692
    %2590 = vmatprep.subr.bf16.mxu0 %v1687
    %2591 = vmatpush1.bf16.msra.mxu0 %v1686
    %2592 = vmatprep.subr.bf16.mxu0 %v1681
    %2593 = vmatpush1.bf16.msra.mxu0 %v1680
    %2594 = vmatprep.subr.bf16.mxu0 %v1675
    %2595 = vmatpush1.bf16.msra.mxu0 %v1674
    %2596 = vmatprep.subr.bf16.mxu0 %v1669
    %2597 = vmatpush1.bf16.msra.mxu0 %v1668
    %2598 = vmatprep.subr.bf16.mxu0 %v1663
    %2599 = vmatpush1.bf16.msra.mxu0 %v1662
    %2600 = vmatprep.subr.bf16.mxu0 %v1657
    %2601 = vmatpush1.bf16.msra.mxu0 %v1656
    %2602 = vmatprep.subr.bf16.mxu0 %v1747
    %2603 = vmatpush2.bf16.msra.mxu0 %v1746
    %2604 = vmatprep.subr.bf16.mxu0 %v1741
    %2605 = vmatpush2.bf16.msra.mxu0 %v1740
    %2606 = vmatprep.subr.bf16.mxu0 %v1735
    %2607 = vmatpush2.bf16.msra.mxu0 %v1734
    %2608 = vmatprep.subr.bf16.mxu0 %v1729
    %2609 = vmatpush2.bf16.msra.mxu0 %v1728
    %2610 = vmatprep.subr.bf16.mxu0 %v1723
    %2611 = vmatpush2.bf16.msra.mxu0 %v1722
    %2612 = vmatprep.subr.bf16.mxu0 %v1717
    %2613 = vmatpush2.bf16.msra.mxu0 %v1716
    %2614 = vmatprep.subr.bf16.mxu0 %v1711
    %2615 = vmatpush2.bf16.msra.mxu0 %v1710
    %2616 = vmatprep.subr.bf16.mxu0 %v1705
    %2617 = vmatpush2.bf16.msra.mxu0 %v1704
    %2618 = vmatprep.mubr.bf16.mxu0 %v601
    %2619 = vmatmul.mubr.bf16.gmra.mxu0 %v600
    %v2620 = vpop.f32.mrf.mxu0
    %v2621 = vadd.f32 %v2508, %v2620
    %v2622 = vpop.f32.mrf.mxu0
    %v2623 = vadd.f32 %v2510, %v2622
    %v2624 = vpop.f32.mrf.mxu0
    %v2625 = vadd.f32 %v2512, %v2624
    %v2626 = vpop.f32.mrf.mxu0
    %v2627 = vadd.f32 %v2514, %v2626
    %2628 = vmatprep.mubr.bf16.mxu0 %v607
    %2629 = vmatmul.mubr.bf16.gmra.mxu0 %v606
    %v2630 = vpop.f32.mrf.mxu0
    %v2631 = vadd.f32 %v2518, %v2630
    %v2632 = vpop.f32.mrf.mxu0
    %v2633 = vadd.f32 %v2520, %v2632
    %v2634 = vpop.f32.mrf.mxu0
    %v2635 = vadd.f32 %v2522, %v2634
    %v2636 = vpop.f32.mrf.mxu0
    %v2637 = vadd.f32 %v2524, %v2636
    %2638 = vmatprep.mubr.bf16.mxu0 %v613
    %2639 = vmatmul.mubr.bf16.gmra.mxu0 %v612
    %v2640 = vpop.f32.mrf.mxu0
    %v2641 = vadd.f32 %v2528, %v2640
    %v2642 = vpop.f32.mrf.mxu0
    %v2643 = vadd.f32 %v2530, %v2642
    %v2644 = vpop.f32.mrf.mxu0
    %v2645 = vadd.f32 %v2532, %v2644
    %v2646 = vpop.f32.mrf.mxu0
    %v2647 = vadd.f32 %v2534, %v2646
    %2648 = vmatprep.mubr.bf16.mxu0 %v619
    %2649 = vmatmul.mubr.bf16.gmra.mxu0 %v618
    %v2650 = vpop.f32.mrf.mxu0
    %v2651 = vadd.f32 %v2538, %v2650
    %v2652 = vpop.f32.mrf.mxu0
    %v2653 = vadd.f32 %v2540, %v2652
    %v2654 = vpop.f32.mrf.mxu0
    %v2655 = vadd.f32 %v2542, %v2654
    %v2656 = vpop.f32.mrf.mxu0
    %v2657 = vadd.f32 %v2544, %v2656
    %2658 = vmatprep.mubr.bf16.mxu0 %v625
    %2659 = vmatmul.mubr.bf16.gmra.mxu0 %v624
    %v2660 = vpop.f32.mrf.mxu0
    %v2661 = vadd.f32 %v2548, %v2660
    %v2662 = vpop.f32.mrf.mxu0
    %v2663 = vadd.f32 %v2550, %v2662
    %v2664 = vpop.f32.mrf.mxu0
    %v2665 = vadd.f32 %v2552, %v2664
    %v2666 = vpop.f32.mrf.mxu0
    %v2667 = vadd.f32 %v2554, %v2666
    %2668 = vmatprep.mubr.bf16.mxu0 %v631
    %2669 = vmatmul.mubr.bf16.gmra.mxu0 %v630
    %v2670 = vpop.f32.mrf.mxu0
    %v2671 = vadd.f32 %v2558, %v2670
    %v2672 = vpop.f32.mrf.mxu0
    %v2673 = vadd.f32 %v2560, %v2672
    %v2674 = vpop.f32.mrf.mxu0
    %v2675 = vadd.f32 %v2562, %v2674
    %v2676 = vpop.f32.mrf.mxu0
    %v2677 = vadd.f32 %v2564, %v2676
    %2678 = vmatprep.mubr.bf16.mxu0 %v637
    %2679 = vmatmul.mubr.bf16.gmra.mxu0 %v636
    %v2680 = vpop.f32.mrf.mxu0
    %v2681 = vadd.f32 %v2568, %v2680
    %v2682 = vpop.f32.mrf.mxu0
    %v2683 = vadd.f32 %v2570, %v2682
    %v2684 = vpop.f32.mrf.mxu0
    %v2685 = vadd.f32 %v2572, %v2684
    %v2686 = vpop.f32.mrf.mxu0
    %v2687 = vadd.f32 %v2574, %v2686
    %2688 = vmatprep.mubr.bf16.mxu0 %v643
    %2689 = vmatmul.mubr.bf16.gmra.mxu0 %v642
    %v2690 = vpop.f32.mrf.mxu0
    %v2691 = vadd.f32 %v2578, %v2690
    %v2692 = vpop.f32.mrf.mxu0
    %v2693 = vadd.f32 %v2580, %v2692
    %v2694 = vpop.f32.mrf.mxu0
    %v2695 = vadd.f32 %v2582, %v2694
    %v2696 = vpop.f32.mrf.mxu0
    %v2697 = vadd.f32 %v2584, %v2696
    %2698 = vdwg.mxu0
    %2699 = vmatprep.subr.bf16.mxu0 %v1795
    %2700 = vmatpush1.bf16.msra.mxu0 %v1794
    %2701 = vmatprep.subr.bf16.mxu0 %v1789
    %2702 = vmatpush1.bf16.msra.mxu0 %v1788
    %2703 = vmatprep.subr.bf16.mxu0 %v1783
    %2704 = vmatpush1.bf16.msra.mxu0 %v1782
    %2705 = vmatprep.subr.bf16.mxu0 %v1777
    %2706 = vmatpush1.bf16.msra.mxu0 %v1776
    %2707 = vmatprep.subr.bf16.mxu0 %v1771
    %2708 = vmatpush1.bf16.msra.mxu0 %v1770
    %2709 = vmatprep.subr.bf16.mxu0 %v1765
    %2710 = vmatpush1.bf16.msra.mxu0 %v1764
    %2711 = vmatprep.subr.bf16.mxu0 %v1759
    %2712 = vmatpush1.bf16.msra.mxu0 %v1758
    %2713 = vmatprep.subr.bf16.mxu0 %v1753
    %2714 = vmatpush1.bf16.msra.mxu0 %v1752
    %2715 = vmatprep.subr.bf16.mxu0 %v1843
    %2716 = vmatpush2.bf16.msra.mxu0 %v1842
    %2717 = vmatprep.subr.bf16.mxu0 %v1837
    %2718 = vmatpush2.bf16.msra.mxu0 %v1836
    %2719 = vmatprep.subr.bf16.mxu0 %v1831
    %2720 = vmatpush2.bf16.msra.mxu0 %v1830
    %2721 = vmatprep.subr.bf16.mxu0 %v1825
    %2722 = vmatpush2.bf16.msra.mxu0 %v1824
    %2723 = vmatprep.subr.bf16.mxu0 %v1819
    %2724 = vmatpush2.bf16.msra.mxu0 %v1818
    %2725 = vmatprep.subr.bf16.mxu0 %v1813
    %2726 = vmatpush2.bf16.msra.mxu0 %v1812
    %2727 = vmatprep.subr.bf16.mxu0 %v1807
    %2728 = vmatpush2.bf16.msra.mxu0 %v1806
    %2729 = vmatprep.subr.bf16.mxu0 %v1801
    %2730 = vmatpush2.bf16.msra.mxu0 %v1800
    %2731 = vmatprep.mubr.bf16.mxu0 %v603
    %2732 = vmatmul.mubr.bf16.gmra.mxu0 %v602
    %v2733 = vpop.f32.mrf.mxu0
    %v2734 = vadd.f32 %v2621, %v2733
    %v2735 = vpop.f32.mrf.mxu0
    %v2736 = vadd.f32 %v2623, %v2735
    %v2737 = vpop.f32.mrf.mxu0
    %v2738 = vadd.f32 %v2625, %v2737
    %v2739 = vpop.f32.mrf.mxu0
    %v2740 = vadd.f32 %v2627, %v2739
    %2741 = vmatprep.mubr.bf16.mxu0 %v609
    %2742 = vmatmul.mubr.bf16.gmra.mxu0 %v608
    %v2743 = vpop.f32.mrf.mxu0
    %v2744 = vadd.f32 %v2631, %v2743
    %v2745 = vpop.f32.mrf.mxu0
    %v2746 = vadd.f32 %v2633, %v2745
    %v2747 = vpop.f32.mrf.mxu0
    %v2748 = vadd.f32 %v2635, %v2747
    %v2749 = vpop.f32.mrf.mxu0
    %v2750 = vadd.f32 %v2637, %v2749
    %2751 = vmatprep.mubr.bf16.mxu0 %v615
    %2752 = vmatmul.mubr.bf16.gmra.mxu0 %v614
    %v2753 = vpop.f32.mrf.mxu0
    %v2754 = vadd.f32 %v2641, %v2753
    %v2755 = vpop.f32.mrf.mxu0
    %v2756 = vadd.f32 %v2643, %v2755
    %v2757 = vpop.f32.mrf.mxu0
    %v2758 = vadd.f32 %v2645, %v2757
    %v2759 = vpop.f32.mrf.mxu0
    %v2760 = vadd.f32 %v2647, %v2759
    %2761 = vmatprep.mubr.bf16.mxu0 %v621
    %2762 = vmatmul.mubr.bf16.gmra.mxu0 %v620
    %v2763 = vpop.f32.mrf.mxu0
    %v2764 = vadd.f32 %v2651, %v2763
    %v2765 = vpop.f32.mrf.mxu0
    %v2766 = vadd.f32 %v2653, %v2765
    %v2767 = vpop.f32.mrf.mxu0
    %v2768 = vadd.f32 %v2655, %v2767
    %v2769 = vpop.f32.mrf.mxu0
    %v2770 = vadd.f32 %v2657, %v2769
    %2771 = vmatprep.mubr.bf16.mxu0 %v627
    %2772 = vmatmul.mubr.bf16.gmra.mxu0 %v626
    %v2773 = vpop.f32.mrf.mxu0
    %v2774 = vadd.f32 %v2661, %v2773
    %v2775 = vpop.f32.mrf.mxu0
    %v2776 = vadd.f32 %v2663, %v2775
    %v2777 = vpop.f32.mrf.mxu0
    %v2778 = vadd.f32 %v2665, %v2777
    %v2779 = vpop.f32.mrf.mxu0
    %v2780 = vadd.f32 %v2667, %v2779
    %2781 = vmatprep.mubr.bf16.mxu0 %v633
    %2782 = vmatmul.mubr.bf16.gmra.mxu0 %v632
    %v2783 = vpop.f32.mrf.mxu0
    %v2784 = vadd.f32 %v2671, %v2783
    %v2785 = vpop.f32.mrf.mxu0
    %v2786 = vadd.f32 %v2673, %v2785
    %v2787 = vpop.f32.mrf.mxu0
    %v2788 = vadd.f32 %v2675, %v2787
    %v2789 = vpop.f32.mrf.mxu0
    %v2790 = vadd.f32 %v2677, %v2789
    %2791 = vmatprep.mubr.bf16.mxu0 %v639
    %2792 = vmatmul.mubr.bf16.gmra.mxu0 %v638
    %v2793 = vpop.f32.mrf.mxu0
    %v2794 = vadd.f32 %v2681, %v2793
    %v2795 = vpop.f32.mrf.mxu0
    %v2796 = vadd.f32 %v2683, %v2795
    %v2797 = vpop.f32.mrf.mxu0
    %v2798 = vadd.f32 %v2685, %v2797
    %v2799 = vpop.f32.mrf.mxu0
    %v2800 = vadd.f32 %v2687, %v2799
    %2801 = vmatprep.mubr.bf16.mxu0 %v645
    %2802 = vmatmul.mubr.bf16.gmra.mxu0 %v644
    %v2803 = vpop.f32.mrf.mxu0
    %v2804 = vadd.f32 %v2691, %v2803
    %v2805 = vpop.f32.mrf.mxu0
    %v2806 = vadd.f32 %v2693, %v2805
    %v2807 = vpop.f32.mrf.mxu0
    %v2808 = vadd.f32 %v2695, %v2807
    %v2809 = vpop.f32.mrf.mxu0
    %v2810 = vadd.f32 %v2697, %v2809
    %2811 = vdwg.mxu0
    %2812 = vmatprep.subr.bf16.mxu0 %v1605
    %2813 = vmatpush1.bf16.msra.mxu0 %v1604
    %2814 = vmatprep.subr.bf16.mxu0 %v1599
    %2815 = vmatpush1.bf16.msra.mxu0 %v1598
    %2816 = vmatprep.subr.bf16.mxu0 %v1593
    %2817 = vmatpush1.bf16.msra.mxu0 %v1592
    %2818 = vmatprep.subr.bf16.mxu0 %v1587
    %2819 = vmatpush1.bf16.msra.mxu0 %v1586
    %2820 = vmatprep.subr.bf16.mxu0 %v1581
    %2821 = vmatpush1.bf16.msra.mxu0 %v1580
    %2822 = vmatprep.subr.bf16.mxu0 %v1575
    %2823 = vmatpush1.bf16.msra.mxu0 %v1574
    %2824 = vmatprep.subr.bf16.mxu0 %v1569
    %2825 = vmatpush1.bf16.msra.mxu0 %v1568
    %2826 = vmatprep.subr.bf16.mxu0 %v1563
    %2827 = vmatpush1.bf16.msra.mxu0 %v1562
    %2828 = vmatprep.subr.bf16.mxu0 %v1653
    %2829 = vmatpush2.bf16.msra.mxu0 %v1652
    %2830 = vmatprep.subr.bf16.mxu0 %v1647
    %2831 = vmatpush2.bf16.msra.mxu0 %v1646
    %2832 = vmatprep.subr.bf16.mxu0 %v1641
    %2833 = vmatpush2.bf16.msra.mxu0 %v1640
    %2834 = vmatprep.subr.bf16.mxu0 %v1635
    %2835 = vmatpush2.bf16.msra.mxu0 %v1634
    %2836 = vmatprep.subr.bf16.mxu0 %v1629
    %2837 = vmatpush2.bf16.msra.mxu0 %v1628
    %2838 = vmatprep.subr.bf16.mxu0 %v1623
    %2839 = vmatpush2.bf16.msra.mxu0 %v1622
    %2840 = vmatprep.subr.bf16.mxu0 %v1617
    %2841 = vmatpush2.bf16.msra.mxu0 %v1616
    %2842 = vmatprep.subr.bf16.mxu0 %v1611
    %2843 = vmatpush2.bf16.msra.mxu0 %v1610
    %2844 = vmatprep.mubr.bf16.mxu0 %v599
    %2845 = vmatmul.mubr.bf16.gmra.mxu0 %v598
    %v2846 = vpop.f32.mrf.mxu0
    %v2847 = vadd.f32 %v443, %v2846
    %v2848 = vpop.f32.mrf.mxu0
    %v2849 = vadd.f32 %v447, %v2848
    %v2850 = vpop.f32.mrf.mxu0
    %v2851 = vadd.f32 %v443, %v2850
    %v2852 = vpop.f32.mrf.mxu0
    %v2853 = vadd.f32 %v447, %v2852
    %2854 = vmatprep.mubr.bf16.mxu0 %v605
    %2855 = vmatmul.mubr.bf16.gmra.mxu0 %v604
    %v2856 = vpop.f32.mrf.mxu0
    %v2857 = vadd.f32 %v443, %v2856
    %v2858 = vpop.f32.mrf.mxu0
    %v2859 = vadd.f32 %v447, %v2858
    %v2860 = vpop.f32.mrf.mxu0
    %v2861 = vadd.f32 %v443, %v2860
    %v2862 = vpop.f32.mrf.mxu0
    %v2863 = vadd.f32 %v447, %v2862
    %2864 = vmatprep.mubr.bf16.mxu0 %v611
    %2865 = vmatmul.mubr.bf16.gmra.mxu0 %v610
    %v2866 = vpop.f32.mrf.mxu0
    %v2867 = vadd.f32 %v443, %v2866
    %v2868 = vpop.f32.mrf.mxu0
    %v2869 = vadd.f32 %v447, %v2868
    %v2870 = vpop.f32.mrf.mxu0
    %v2871 = vadd.f32 %v443, %v2870
    %v2872 = vpop.f32.mrf.mxu0
    %v2873 = vadd.f32 %v447, %v2872
    %2874 = vmatprep.mubr.bf16.mxu0 %v617
    %2875 = vmatmul.mubr.bf16.gmra.mxu0 %v616
    %v2876 = vpop.f32.mrf.mxu0
    %v2877 = vadd.f32 %v443, %v2876
    %v2878 = vpop.f32.mrf.mxu0
    %v2879 = vadd.f32 %v447, %v2878
    %v2880 = vpop.f32.mrf.mxu0
    %v2881 = vadd.f32 %v443, %v2880
    %v2882 = vpop.f32.mrf.mxu0
    %v2883 = vadd.f32 %v447, %v2882
    %2884 = vmatprep.mubr.bf16.mxu0 %v623
    %2885 = vmatmul.mubr.bf16.gmra.mxu0 %v622
    %v2886 = vpop.f32.mrf.mxu0
    %v2887 = vadd.f32 %v443, %v2886
    %v2888 = vpop.f32.mrf.mxu0
    %v2889 = vadd.f32 %v447, %v2888
    %v2890 = vpop.f32.mrf.mxu0
    %v2891 = vadd.f32 %v443, %v2890
    %v2892 = vpop.f32.mrf.mxu0
    %v2893 = vadd.f32 %v447, %v2892
    %2894 = vmatprep.mubr.bf16.mxu0 %v629
    %2895 = vmatmul.mubr.bf16.gmra.mxu0 %v628
    %v2896 = vpop.f32.mrf.mxu0
    %v2897 = vadd.f32 %v443, %v2896
    %v2898 = vpop.f32.mrf.mxu0
    %v2899 = vadd.f32 %v447, %v2898
    %v2900 = vpop.f32.mrf.mxu0
    %v2901 = vadd.f32 %v443, %v2900
    %v2902 = vpop.f32.mrf.mxu0
    %v2903 = vadd.f32 %v447, %v2902
    %2904 = vmatprep.mubr.bf16.mxu0 %v635
    %2905 = vmatmul.mubr.bf16.gmra.mxu0 %v634
    %v2906 = vpop.f32.mrf.mxu0
    %v2907 = vadd.f32 %v443, %v2906
    %v2908 = vpop.f32.mrf.mxu0
    %v2909 = vadd.f32 %v447, %v2908
    %v2910 = vpop.f32.mrf.mxu0
    %v2911 = vadd.f32 %v443, %v2910
    %v2912 = vpop.f32.mrf.mxu0
    %v2913 = vadd.f32 %v447, %v2912
    %2914 = vmatprep.mubr.bf16.mxu0 %v641
    %2915 = vmatmul.mubr.bf16.gmra.mxu0 %v640
    %v2916 = vpop.f32.mrf.mxu0
    %v2917 = vadd.f32 %v443, %v2916
    %v2918 = vpop.f32.mrf.mxu0
    %v2919 = vadd.f32 %v447, %v2918
    %v2920 = vpop.f32.mrf.mxu0
    %v2921 = vadd.f32 %v443, %v2920
    %v2922 = vpop.f32.mrf.mxu0
    %v2923 = vadd.f32 %v447, %v2922
    %2924 = vdwg.mxu0
    %2925 = vmatprep.subr.bf16.mxu0 %v1701
    %2926 = vmatpush1.bf16.msra.mxu0 %v1700
    %2927 = vmatprep.subr.bf16.mxu0 %v1695
    %2928 = vmatpush1.bf16.msra.mxu0 %v1694
    %2929 = vmatprep.subr.bf16.mxu0 %v1689
    %2930 = vmatpush1.bf16.msra.mxu0 %v1688
    %2931 = vmatprep.subr.bf16.mxu0 %v1683
    %2932 = vmatpush1.bf16.msra.mxu0 %v1682
    %2933 = vmatprep.subr.bf16.mxu0 %v1677
    %2934 = vmatpush1.bf16.msra.mxu0 %v1676
    %2935 = vmatprep.subr.bf16.mxu0 %v1671
    %2936 = vmatpush1.bf16.msra.mxu0 %v1670
    %2937 = vmatprep.subr.bf16.mxu0 %v1665
    %2938 = vmatpush1.bf16.msra.mxu0 %v1664
    %2939 = vmatprep.subr.bf16.mxu0 %v1659
    %2940 = vmatpush1.bf16.msra.mxu0 %v1658
    %2941 = vmatprep.subr.bf16.mxu0 %v1749
    %2942 = vmatpush2.bf16.msra.mxu0 %v1748
    %2943 = vmatprep.subr.bf16.mxu0 %v1743
    %2944 = vmatpush2.bf16.msra.mxu0 %v1742
    %2945 = vmatprep.subr.bf16.mxu0 %v1737
    %2946 = vmatpush2.bf16.msra.mxu0 %v1736
    %2947 = vmatprep.subr.bf16.mxu0 %v1731
    %2948 = vmatpush2.bf16.msra.mxu0 %v1730
    %2949 = vmatprep.subr.bf16.mxu0 %v1725
    %2950 = vmatpush2.bf16.msra.mxu0 %v1724
    %2951 = vmatprep.subr.bf16.mxu0 %v1719
    %2952 = vmatpush2.bf16.msra.mxu0 %v1718
    %2953 = vmatprep.subr.bf16.mxu0 %v1713
    %2954 = vmatpush2.bf16.msra.mxu0 %v1712
    %2955 = vmatprep.subr.bf16.mxu0 %v1707
    %2956 = vmatpush2.bf16.msra.mxu0 %v1706
    %2957 = vmatprep.mubr.bf16.mxu0 %v601
    %2958 = vmatmul.mubr.bf16.gmra.mxu0 %v600
    %v2959 = vpop.f32.mrf.mxu0
    %v2960 = vadd.f32 %v2847, %v2959
    %v2961 = vpop.f32.mrf.mxu0
    %v2962 = vadd.f32 %v2849, %v2961
    %v2963 = vpop.f32.mrf.mxu0
    %v2964 = vadd.f32 %v2851, %v2963
    %v2965 = vpop.f32.mrf.mxu0
    %v2966 = vadd.f32 %v2853, %v2965
    %2967 = vmatprep.mubr.bf16.mxu0 %v607
    %2968 = vmatmul.mubr.bf16.gmra.mxu0 %v606
    %v2969 = vpop.f32.mrf.mxu0
    %v2970 = vadd.f32 %v2857, %v2969
    %v2971 = vpop.f32.mrf.mxu0
    %v2972 = vadd.f32 %v2859, %v2971
    %v2973 = vpop.f32.mrf.mxu0
    %v2974 = vadd.f32 %v2861, %v2973
    %v2975 = vpop.f32.mrf.mxu0
    %v2976 = vadd.f32 %v2863, %v2975
    %2977 = vmatprep.mubr.bf16.mxu0 %v613
    %2978 = vmatmul.mubr.bf16.gmra.mxu0 %v612
    %v2979 = vpop.f32.mrf.mxu0
    %v2980 = vadd.f32 %v2867, %v2979
    %v2981 = vpop.f32.mrf.mxu0
    %v2982 = vadd.f32 %v2869, %v2981
    %v2983 = vpop.f32.mrf.mxu0
    %v2984 = vadd.f32 %v2871, %v2983
    %v2985 = vpop.f32.mrf.mxu0
    %v2986 = vadd.f32 %v2873, %v2985
    %2987 = vmatprep.mubr.bf16.mxu0 %v619
    %2988 = vmatmul.mubr.bf16.gmra.mxu0 %v618
    %v2989 = vpop.f32.mrf.mxu0
    %v2990 = vadd.f32 %v2877, %v2989
    %v2991 = vpop.f32.mrf.mxu0
    %v2992 = vadd.f32 %v2879, %v2991
    %v2993 = vpop.f32.mrf.mxu0
    %v2994 = vadd.f32 %v2881, %v2993
    %v2995 = vpop.f32.mrf.mxu0
    %v2996 = vadd.f32 %v2883, %v2995
    %2997 = vmatprep.mubr.bf16.mxu0 %v625
    %2998 = vmatmul.mubr.bf16.gmra.mxu0 %v624
    %v2999 = vpop.f32.mrf.mxu0
    %v3000 = vadd.f32 %v2887, %v2999
    %v3001 = vpop.f32.mrf.mxu0
    %v3002 = vadd.f32 %v2889, %v3001
    %v3003 = vpop.f32.mrf.mxu0
    %v3004 = vadd.f32 %v2891, %v3003
    %v3005 = vpop.f32.mrf.mxu0
    %v3006 = vadd.f32 %v2893, %v3005
    %3007 = vmatprep.mubr.bf16.mxu0 %v631
    %3008 = vmatmul.mubr.bf16.gmra.mxu0 %v630
    %v3009 = vpop.f32.mrf.mxu0
    %v3010 = vadd.f32 %v2897, %v3009
    %v3011 = vpop.f32.mrf.mxu0
    %v3012 = vadd.f32 %v2899, %v3011
    %v3013 = vpop.f32.mrf.mxu0
    %v3014 = vadd.f32 %v2901, %v3013
    %v3015 = vpop.f32.mrf.mxu0
    %v3016 = vadd.f32 %v2903, %v3015
    %3017 = vmatprep.mubr.bf16.mxu0 %v637
    %3018 = vmatmul.mubr.bf16.gmra.mxu0 %v636
    %v3019 = vpop.f32.mrf.mxu0
    %v3020 = vadd.f32 %v2907, %v3019
    %v3021 = vpop.f32.mrf.mxu0
    %v3022 = vadd.f32 %v2909, %v3021
    %v3023 = vpop.f32.mrf.mxu0
    %v3024 = vadd.f32 %v2911, %v3023
    %v3025 = vpop.f32.mrf.mxu0
    %v3026 = vadd.f32 %v2913, %v3025
    %3027 = vmatprep.mubr.bf16.mxu0 %v643
    %3028 = vmatmul.mubr.bf16.gmra.mxu0 %v642
    %v3029 = vpop.f32.mrf.mxu0
    %v3030 = vadd.f32 %v2917, %v3029
    %v3031 = vpop.f32.mrf.mxu0
    %v3032 = vadd.f32 %v2919, %v3031
    %v3033 = vpop.f32.mrf.mxu0
    %v3034 = vadd.f32 %v2921, %v3033
    %v3035 = vpop.f32.mrf.mxu0
    %v3036 = vadd.f32 %v2923, %v3035
    %3037 = vdwg.mxu0
    %3038 = vmatprep.subr.bf16.mxu0 %v1797
    %3039 = vmatpush1.bf16.msra.mxu0 %v1796
    %3040 = vmatprep.subr.bf16.mxu0 %v1791
    %3041 = vmatpush1.bf16.msra.mxu0 %v1790
    %3042 = vmatprep.subr.bf16.mxu0 %v1785
    %3043 = vmatpush1.bf16.msra.mxu0 %v1784
    %3044 = vmatprep.subr.bf16.mxu0 %v1779
    %3045 = vmatpush1.bf16.msra.mxu0 %v1778
    %3046 = vmatprep.subr.bf16.mxu0 %v1773
    %3047 = vmatpush1.bf16.msra.mxu0 %v1772
    %3048 = vmatprep.subr.bf16.mxu0 %v1767
    %3049 = vmatpush1.bf16.msra.mxu0 %v1766
    %3050 = vmatprep.subr.bf16.mxu0 %v1761
    %3051 = vmatpush1.bf16.msra.mxu0 %v1760
    %3052 = vmatprep.subr.bf16.mxu0 %v1755
    %3053 = vmatpush1.bf16.msra.mxu0 %v1754
    %3054 = vmatprep.subr.bf16.mxu0 %v1845
    %3055 = vmatpush2.bf16.msra.mxu0 %v1844
    %3056 = vmatprep.subr.bf16.mxu0 %v1839
    %3057 = vmatpush2.bf16.msra.mxu0 %v1838
    %3058 = vmatprep.subr.bf16.mxu0 %v1833
    %3059 = vmatpush2.bf16.msra.mxu0 %v1832
    %3060 = vmatprep.subr.bf16.mxu0 %v1827
    %3061 = vmatpush2.bf16.msra.mxu0 %v1826
    %3062 = vmatprep.subr.bf16.mxu0 %v1821
    %3063 = vmatpush2.bf16.msra.mxu0 %v1820
    %3064 = vmatprep.subr.bf16.mxu0 %v1815
    %3065 = vmatpush2.bf16.msra.mxu0 %v1814
    %3066 = vmatprep.subr.bf16.mxu0 %v1809
    %3067 = vmatpush2.bf16.msra.mxu0 %v1808
    %3068 = vmatprep.subr.bf16.mxu0 %v1803
    %3069 = vmatpush2.bf16.msra.mxu0 %v1802
    %3070 = vmatprep.mubr.bf16.mxu0 %v603
    %3071 = vmatmul.mubr.bf16.gmra.mxu0 %v602
    %v3072 = vpop.f32.mrf.mxu0
    %v3073 = vadd.f32 %v2960, %v3072
    %v3074 = vpop.f32.mrf.mxu0
    %v3075 = vadd.f32 %v2962, %v3074
    %v3076 = vpop.f32.mrf.mxu0
    %v3077 = vadd.f32 %v2964, %v3076
    %v3078 = vpop.f32.mrf.mxu0
    %v3079 = vadd.f32 %v2966, %v3078
    %3080 = vmatprep.mubr.bf16.mxu0 %v609
    %3081 = vmatmul.mubr.bf16.gmra.mxu0 %v608
    %v3082 = vpop.f32.mrf.mxu0
    %v3083 = vadd.f32 %v2970, %v3082
    %v3084 = vpop.f32.mrf.mxu0
    %v3085 = vadd.f32 %v2972, %v3084
    %v3086 = vpop.f32.mrf.mxu0
    %v3087 = vadd.f32 %v2974, %v3086
    %v3088 = vpop.f32.mrf.mxu0
    %v3089 = vadd.f32 %v2976, %v3088
    %3090 = vmatprep.mubr.bf16.mxu0 %v615
    %3091 = vmatmul.mubr.bf16.gmra.mxu0 %v614
    %v3092 = vpop.f32.mrf.mxu0
    %v3093 = vadd.f32 %v2980, %v3092
    %v3094 = vpop.f32.mrf.mxu0
    %v3095 = vadd.f32 %v2982, %v3094
    %v3096 = vpop.f32.mrf.mxu0
    %v3097 = vadd.f32 %v2984, %v3096
    %v3098 = vpop.f32.mrf.mxu0
    %v3099 = vadd.f32 %v2986, %v3098
    %3100 = vmatprep.mubr.bf16.mxu0 %v621
    %3101 = vmatmul.mubr.bf16.gmra.mxu0 %v620
    %v3102 = vpop.f32.mrf.mxu0
    %v3103 = vadd.f32 %v2990, %v3102
    %v3104 = vpop.f32.mrf.mxu0
    %v3105 = vadd.f32 %v2992, %v3104
    %v3106 = vpop.f32.mrf.mxu0
    %v3107 = vadd.f32 %v2994, %v3106
    %v3108 = vpop.f32.mrf.mxu0
    %v3109 = vadd.f32 %v2996, %v3108
    %3110 = vmatprep.mubr.bf16.mxu0 %v627
    %3111 = vmatmul.mubr.bf16.gmra.mxu0 %v626
    %v3112 = vpop.f32.mrf.mxu0
    %v3113 = vadd.f32 %v3000, %v3112
    %v3114 = vpop.f32.mrf.mxu0
    %v3115 = vadd.f32 %v3002, %v3114
    %v3116 = vpop.f32.mrf.mxu0
    %v3117 = vadd.f32 %v3004, %v3116
    %v3118 = vpop.f32.mrf.mxu0
    %v3119 = vadd.f32 %v3006, %v3118
    %3120 = vmatprep.mubr.bf16.mxu0 %v633
    %3121 = vmatmul.mubr.bf16.gmra.mxu0 %v632
    %v3122 = vpop.f32.mrf.mxu0
    %v3123 = vadd.f32 %v3010, %v3122
    %v3124 = vpop.f32.mrf.mxu0
    %v3125 = vadd.f32 %v3012, %v3124
    %v3126 = vpop.f32.mrf.mxu0
    %v3127 = vadd.f32 %v3014, %v3126
    %v3128 = vpop.f32.mrf.mxu0
    %v3129 = vadd.f32 %v3016, %v3128
    %3130 = vmatprep.mubr.bf16.mxu0 %v639
    %3131 = vmatmul.mubr.bf16.gmra.mxu0 %v638
    %v3132 = vpop.f32.mrf.mxu0
    %v3133 = vadd.f32 %v3020, %v3132
    %v3134 = vpop.f32.mrf.mxu0
    %v3135 = vadd.f32 %v3022, %v3134
    %v3136 = vpop.f32.mrf.mxu0
    %v3137 = vadd.f32 %v3024, %v3136
    %v3138 = vpop.f32.mrf.mxu0
    %v3139 = vadd.f32 %v3026, %v3138
    %3140 = vmatprep.mubr.bf16.mxu0 %v645
    %3141 = vmatmul.mubr.bf16.gmra.mxu0 %v644
    %v3142 = vpop.f32.mrf.mxu0
    %v3143 = vadd.f32 %v3030, %v3142
    %v3144 = vpop.f32.mrf.mxu0
    %v3145 = vadd.f32 %v3032, %v3144
    %v3146 = vpop.f32.mrf.mxu0
    %v3147 = vadd.f32 %v3034, %v3146
    %v3148 = vpop.f32.mrf.mxu0
    %v3149 = vadd.f32 %v3036, %v3148
    %3150 = vdwg.mxu0
    %v3151 = vtanh.pop %v2395
    %v3152 = vtanh.pop %v2397
    %v3153 = vtanh.pop %v2734
    %v3154 = vtanh.pop %v2736
    %v3155 = vtanh.pop %v3073
    %v3156 = vtanh.pop %v3075
    %v3157 = vtanh.pop %v2399
    %v3158 = vtanh.pop %v2401
    %v3159 = vtanh.pop %v2738
    %v3160 = vtanh.pop %v2740
    %v3161 = vtanh.pop %v3077
    %v3162 = vtanh.pop %v3079
    %v3163 = vtanh.pop %v2405
    %v3164 = vtanh.pop %v2407
    %v3165 = vtanh.pop %v2744
    %v3166 = vtanh.pop %v2746
    %v3167 = vtanh.pop %v3083
    %v3168 = vtanh.pop %v3085
    %v3169 = vtanh.pop %v2409
    %v3170 = vtanh.pop %v2411
    %v3171 = vtanh.pop %v2748
    %v3172 = vtanh.pop %v2750
    %v3173 = vtanh.pop %v3087
    %v3174 = vtanh.pop %v3089
    %v3175 = vtanh.pop %v2415
    %v3176 = vtanh.pop %v2417
    %v3177 = vtanh.pop %v2754
    %v3178 = vtanh.pop %v2756
    %v3179 = vtanh.pop %v3093
    %v3180 = vtanh.pop %v3095
    %v3181 = vtanh.pop %v2419
    %v3182 = vtanh.pop %v2421
    %v3183 = vtanh.pop %v2758
    %v3184 = vtanh.pop %v2760
    %v3185 = vtanh.pop %v3097
    %v3186 = vtanh.pop %v3099
    %v3187 = vtanh.pop %v2425
    %v3188 = vtanh.pop %v2427
    %v3189 = vtanh.pop %v2764
    %v3190 = vtanh.pop %v2766
    %v3191 = vtanh.pop %v3103
    %v3192 = vtanh.pop %v3105
    %v3193 = vtanh.pop %v2429
    %v3194 = vtanh.pop %v2431
    %v3195 = vtanh.pop %v2768
    %v3196 = vtanh.pop %v2770
    %v3197 = vtanh.pop %v3107
    %v3198 = vtanh.pop %v3109
    %v3199 = vtanh.pop %v2435
    %v3200 = vtanh.pop %v2437
    %v3201 = vtanh.pop %v2774
    %v3202 = vtanh.pop %v2776
    %v3203 = vtanh.pop %v3113
    %v3204 = vtanh.pop %v3115
    %v3205 = vtanh.pop %v2439
    %v3206 = vtanh.pop %v2441
    %v3207 = vtanh.pop %v2778
    %v3208 = vtanh.pop %v2780
    %v3209 = vtanh.pop %v3117
    %v3210 = vtanh.pop %v3119
    %v3211 = vtanh.pop %v2445
    %v3212 = vtanh.pop %v2447
    %v3213 = vtanh.pop %v2784
    %v3214 = vtanh.pop %v2786
    %v3215 = vtanh.pop %v3123
    %v3216 = vtanh.pop %v3125
    %v3217 = vtanh.pop %v2449
    %v3218 = vtanh.pop %v2451
    %v3219 = vtanh.pop %v2788
    %v3220 = vtanh.pop %v2790
    %v3221 = vtanh.pop %v3127
    %v3222 = vtanh.pop %v3129
    %v3223 = vtanh.pop %v2455
    %v3224 = vtanh.pop %v2457
    %v3225 = vtanh.pop %v2794
    %v3226 = vtanh.pop %v2796
    %v3227 = vtanh.pop %v3133
    %v3228 = vtanh.pop %v3135
    %v3229 = vtanh.pop %v2459
    %v3230 = vtanh.pop %v2461
    %v3231 = vtanh.pop %v2798
    %v3232 = vtanh.pop %v2800
    %v3233 = vtanh.pop %v3137
    %v3234 = vtanh.pop %v3139
    %v3235 = vtanh.pop %v2465
    %v3236 = vtanh.pop %v2467
    %v3237 = vtanh.pop %v2804
    %v3238 = vtanh.pop %v2806
    %v3239 = vtanh.pop %v3143
    %v3240 = vtanh.pop %v3145
    %v3241 = vtanh.pop %v2469
    %v3242 = vtanh.pop %v2471
    %v3243 = vtanh.pop %v2808
    %v3244 = vtanh.pop %v2810
    %v3245 = vtanh.pop %v3147
    %v3246 = vtanh.pop %v3149
    %v3247 = vpack.c.bf16 %v3157, %v3151
    %v3248 = vpack.c.bf16 %v3158, %v3152
    %v3249 = vpack.c.bf16 %v3159, %v3153
    %v3250 = vpack.c.bf16 %v3160, %v3154
    %v3251 = vpack.c.bf16 %v3161, %v3155
    %v3252 = vpack.c.bf16 %v3162, %v3156
    %v3253 = vpack.c.bf16 %v3169, %v3163
    %v3254 = vpack.c.bf16 %v3170, %v3164
    %v3255 = vpack.c.bf16 %v3171, %v3165
    %v3256 = vpack.c.bf16 %v3172, %v3166
    %v3257 = vpack.c.bf16 %v3173, %v3167
    %v3258 = vpack.c.bf16 %v3174, %v3168
    %v3259 = vpack.c.bf16 %v3181, %v3175
    %v3260 = vpack.c.bf16 %v3182, %v3176
    %v3261 = vpack.c.bf16 %v3183, %v3177
    %v3262 = vpack.c.bf16 %v3184, %v3178
    %v3263 = vpack.c.bf16 %v3185, %v3179
    %v3264 = vpack.c.bf16 %v3186, %v3180
    %v3265 = vpack.c.bf16 %v3193, %v3187
    %v3266 = vpack.c.bf16 %v3194, %v3188
    %v3267 = vpack.c.bf16 %v3195, %v3189
    %v3268 = vpack.c.bf16 %v3196, %v3190
    %v3269 = vpack.c.bf16 %v3197, %v3191
    %v3270 = vpack.c.bf16 %v3198, %v3192
    %v3271 = vpack.c.bf16 %v3205, %v3199
    %v3272 = vpack.c.bf16 %v3206, %v3200
    %v3273 = vpack.c.bf16 %v3207, %v3201
    %v3274 = vpack.c.bf16 %v3208, %v3202
    %v3275 = vpack.c.bf16 %v3209, %v3203
    %v3276 = vpack.c.bf16 %v3210, %v3204
    %v3277 = vpack.c.bf16 %v3217, %v3211
    %v3278 = vpack.c.bf16 %v3218, %v3212
    %v3279 = vpack.c.bf16 %v3219, %v3213
    %v3280 = vpack.c.bf16 %v3220, %v3214
    %v3281 = vpack.c.bf16 %v3221, %v3215
    %v3282 = vpack.c.bf16 %v3222, %v3216
    %v3283 = vpack.c.bf16 %v3229, %v3223
    %v3284 = vpack.c.bf16 %v3230, %v3224
    %v3285 = vpack.c.bf16 %v3231, %v3225
    %v3286 = vpack.c.bf16 %v3232, %v3226
    %v3287 = vpack.c.bf16 %v3233, %v3227
    %v3288 = vpack.c.bf16 %v3234, %v3228
    %v3289 = vpack.c.bf16 %v3241, %v3235
    %v3290 = vpack.c.bf16 %v3242, %v3236
    %v3291 = vpack.c.bf16 %v3243, %v3237
    %v3292 = vpack.c.bf16 %v3244, %v3238
    %v3293 = vpack.c.bf16 %v3245, %v3239
    %v3294 = vpack.c.bf16 %v3246, %v3240
    %v3295 = vld [vmem:[#allocation8] sm:$0xf]
    %v3296 = vld [vmem:[#allocation8 + $0x4] sm:$0xf]
    %v3297 = vld [vmem:[#allocation8 + $0x8] sm:$0xf]
    %v3298 = vld [vmem:[#allocation8 + $0xc] sm:$0xf]
    %v3299 = vld [vmem:[#allocation8 + $0x10] sm:$0xf]
    %v3300 = vld [vmem:[#allocation8 + $0x14] sm:$0xf]
    %v3301 = vld [vmem:[#allocation8 + $0x18] sm:$0xf]
    %v3302 = vld [vmem:[#allocation8 + $0x1c] sm:$0xf]
    %v3303 = vld [vmem:[#allocation8 + $0x20] sm:$0xf]
    %v3304 = vld [vmem:[#allocation8 + $0x24] sm:$0xf]
    %v3305 = vld [vmem:[#allocation8 + $0x28] sm:$0xf]
    %v3306 = vld [vmem:[#allocation8 + $0x2c] sm:$0xf]
    %v3307 = vld [vmem:[#allocation8 + $0x30] sm:$0xf]
    %v3308 = vld [vmem:[#allocation8 + $0x34] sm:$0xf]
    %v3309 = vld [vmem:[#allocation8 + $0x38] sm:$0xf]
    %v3310 = vld [vmem:[#allocation8 + $0x3c] sm:$0xf]
    %v3311 = vld [vmem:[#allocation8 + $0x40] sm:$0xf]
    %v3312 = vld [vmem:[#allocation8 + $0x44] sm:$0xf]
    %v3313 = vld [vmem:[#allocation8 + $0x48] sm:$0xf]
    %v3314 = vld [vmem:[#allocation8 + $0x4c] sm:$0xf]
    %v3315 = vld [vmem:[#allocation8 + $0x50] sm:$0xf]
    %v3316 = vld [vmem:[#allocation8 + $0x54] sm:$0xf]
    %v3317 = vld [vmem:[#allocation8 + $0x58] sm:$0xf]
    %v3318 = vld [vmem:[#allocation8 + $0x5c] sm:$0xf]
    %v3319 = vld [vmem:[#allocation8 + $0x60] sm:$0xf]
    %v3320 = vld [vmem:[#allocation8 + $0x64] sm:$0xf]
    %v3321 = vld [vmem:[#allocation8 + $0x68] sm:$0xf]
    %v3322 = vld [vmem:[#allocation8 + $0x6c] sm:$0xf]
    %v3323 = vld [vmem:[#allocation8 + $0x70] sm:$0xf]
    %v3324 = vld [vmem:[#allocation8 + $0x74] sm:$0xf]
    %v3325 = vld [vmem:[#allocation8 + $0x78] sm:$0xf]
    %v3326 = vld [vmem:[#allocation8 + $0x7c] sm:$0xf]
    %v3327 = vld [vmem:[#allocation8 + $0x80] sm:$0xf]
    %v3328 = vld [vmem:[#allocation8 + $0x84] sm:$0xf]
    %v3329 = vld [vmem:[#allocation8 + $0x88] sm:$0xf]
    %v3330 = vld [vmem:[#allocation8 + $0x8c] sm:$0xf]
    %v3331 = vld [vmem:[#allocation8 + $0x90] sm:$0xf]
    %v3332 = vld [vmem:[#allocation8 + $0x94] sm:$0xf]
    %v3333 = vld [vmem:[#allocation8 + $0x98] sm:$0xf]
    %v3334 = vld [vmem:[#allocation8 + $0x9c] sm:$0xf]
    %v3335 = vld [vmem:[#allocation8 + $0xa0] sm:$0xf]
    %v3336 = vld [vmem:[#allocation8 + $0xa4] sm:$0xf]
    %v3337 = vld [vmem:[#allocation8 + $0xa8] sm:$0xf]
    %v3338 = vld [vmem:[#allocation8 + $0xac] sm:$0xf]
    %v3339 = vld [vmem:[#allocation8 + $0xb0] sm:$0xf]
    %v3340 = vld [vmem:[#allocation8 + $0xb4] sm:$0xf]
    %v3341 = vld [vmem:[#allocation8 + $0xb8] sm:$0xf]
    %v3342 = vld [vmem:[#allocation8 + $0xbc] sm:$0xf]
    %v3343 = vld [vmem:[#allocation8 + $0xc0] sm:$0xf]
    %v3344 = vld [vmem:[#allocation8 + $0xc4] sm:$0xf]
    %v3345 = vld [vmem:[#allocation8 + $0xc8] sm:$0xf]
    %v3346 = vld [vmem:[#allocation8 + $0xcc] sm:$0xf]
    %v3347 = vld [vmem:[#allocation8 + $0xd0] sm:$0xf]
    %v3348 = vld [vmem:[#allocation8 + $0xd4] sm:$0xf]
    %v3349 = vld [vmem:[#allocation8 + $0xd8] sm:$0xf]
    %v3350 = vld [vmem:[#allocation8 + $0xdc] sm:$0xf]
    %v3351 = vld [vmem:[#allocation8 + $0xe0] sm:$0xf]
    %v3352 = vld [vmem:[#allocation8 + $0xe4] sm:$0xf]
    %v3353 = vld [vmem:[#allocation8 + $0xe8] sm:$0xf]
    %v3354 = vld [vmem:[#allocation8 + $0xec] sm:$0xf]
    %v3355 = vld [vmem:[#allocation8 + $0xf0] sm:$0xf]
    %v3356 = vld [vmem:[#allocation8 + $0xf4] sm:$0xf]
    %v3357 = vld [vmem:[#allocation8 + $0xf8] sm:$0xf]
    %v3358 = vld [vmem:[#allocation8 + $0xfc] sm:$0xf]
    %v3359 = vld [vmem:[#allocation8 + $0x100] sm:$0xf]
    %v3360 = vld [vmem:[#allocation8 + $0x104] sm:$0xf]
    %v3361 = vld [vmem:[#allocation8 + $0x108] sm:$0xf]
    %v3362 = vld [vmem:[#allocation8 + $0x10c] sm:$0xf]
    %v3363 = vld [vmem:[#allocation8 + $0x110] sm:$0xf]
    %v3364 = vld [vmem:[#allocation8 + $0x114] sm:$0xf]
    %v3365 = vld [vmem:[#allocation8 + $0x118] sm:$0xf]
    %v3366 = vld [vmem:[#allocation8 + $0x11c] sm:$0xf]
    %v3367 = vld [vmem:[#allocation8 + $0x120] sm:$0xf]
    %v3368 = vld [vmem:[#allocation8 + $0x124] sm:$0xf]
    %v3369 = vld [vmem:[#allocation8 + $0x128] sm:$0xf]
    %v3370 = vld [vmem:[#allocation8 + $0x12c] sm:$0xf]
    %v3371 = vld [vmem:[#allocation8 + $0x130] sm:$0xf]
    %v3372 = vld [vmem:[#allocation8 + $0x134] sm:$0xf]
    %v3373 = vld [vmem:[#allocation8 + $0x138] sm:$0xf]
    %v3374 = vld [vmem:[#allocation8 + $0x13c] sm:$0xf]
    %v3375 = vld [vmem:[#allocation8 + $0x140] sm:$0xf]
    %v3376 = vld [vmem:[#allocation8 + $0x144] sm:$0xf]
    %v3377 = vld [vmem:[#allocation8 + $0x148] sm:$0xf]
    %v3378 = vld [vmem:[#allocation8 + $0x14c] sm:$0xf]
    %v3379 = vld [vmem:[#allocation8 + $0x150] sm:$0xf]
    %v3380 = vld [vmem:[#allocation8 + $0x154] sm:$0xf]
    %v3381 = vld [vmem:[#allocation8 + $0x158] sm:$0xf]
    %v3382 = vld [vmem:[#allocation8 + $0x15c] sm:$0xf]
    %v3383 = vld [vmem:[#allocation8 + $0x160] sm:$0xf]
    %v3384 = vld [vmem:[#allocation8 + $0x164] sm:$0xf]
    %v3385 = vld [vmem:[#allocation8 + $0x168] sm:$0xf]
    %v3386 = vld [vmem:[#allocation8 + $0x16c] sm:$0xf]
    %v3387 = vld [vmem:[#allocation8 + $0x170] sm:$0xf]
    %v3388 = vld [vmem:[#allocation8 + $0x174] sm:$0xf]
    %v3389 = vld [vmem:[#allocation8 + $0x178] sm:$0xf]
    %v3390 = vld [vmem:[#allocation8 + $0x17c] sm:$0xf]
    %v3391 = vld [vmem:[#allocation10] sm:$0x1]
    %v3393 = vlaneseq
    %v3394 = vshrl.u32 %v3393, 7
    %v3395 = vsub.s32 0, %v3394
    %v3396 = vrot.slane %v3391, %v3395
    %v3494 = vunpack.c.l.b16 %v3295
    %v3495 = vunpack.c.l.b16 %v3296
    %v3496 = vunpack.c.l.b16 %v3297
    %v3497 = vunpack.c.l.b16 %v3298
    %v3498 = vunpack.c.l.b16 %v3299
    %v3499 = vunpack.c.l.b16 %v3300
    %v3500 = vunpack.c.l.b16 %v3301
    %v3501 = vunpack.c.l.b16 %v3302
    %v3502 = vunpack.c.l.b16 %v3303
    %v3503 = vunpack.c.l.b16 %v3304
    %v3504 = vunpack.c.l.b16 %v3305
    %v3505 = vunpack.c.l.b16 %v3306
    %v3506 = vunpack.c.l.b16 %v3307
    %v3507 = vunpack.c.l.b16 %v3308
    %v3508 = vunpack.c.l.b16 %v3309
    %v3509 = vunpack.c.l.b16 %v3310
    %v3510 = vunpack.c.l.b16 %v3311
    %v3511 = vunpack.c.l.b16 %v3312
    %v3512 = vunpack.c.l.b16 %v3313
    %v3513 = vunpack.c.l.b16 %v3314
    %v3514 = vunpack.c.l.b16 %v3315
    %v3515 = vunpack.c.l.b16 %v3316
    %v3516 = vunpack.c.l.b16 %v3317
    %v3517 = vunpack.c.l.b16 %v3318
    %v3518 = vunpack.c.l.b16 %v3319
    %v3519 = vunpack.c.l.b16 %v3320
    %v3520 = vunpack.c.l.b16 %v3321
    %v3521 = vunpack.c.l.b16 %v3322
    %v3522 = vunpack.c.l.b16 %v3323
    %v3523 = vunpack.c.l.b16 %v3324
    %v3524 = vunpack.c.l.b16 %v3325
    %v3525 = vunpack.c.l.b16 %v3326
    %v3526 = vunpack.c.l.b16 %v3327
    %v3527 = vunpack.c.l.b16 %v3328
    %v3528 = vunpack.c.l.b16 %v3329
    %v3529 = vunpack.c.l.b16 %v3330
    %v3530 = vunpack.c.l.b16 %v3331
    %v3531 = vunpack.c.l.b16 %v3332
    %v3532 = vunpack.c.l.b16 %v3333
    %v3533 = vunpack.c.l.b16 %v3334
    %v3534 = vunpack.c.l.b16 %v3335
    %v3535 = vunpack.c.l.b16 %v3336
    %v3536 = vunpack.c.l.b16 %v3337
    %v3537 = vunpack.c.l.b16 %v3338
    %v3538 = vunpack.c.l.b16 %v3339
    %v3539 = vunpack.c.l.b16 %v3340
    %v3540 = vunpack.c.l.b16 %v3341
    %v3541 = vunpack.c.l.b16 %v3342
    %v3542 = vunpack.c.l.b16 %v3343
    %v3543 = vunpack.c.l.b16 %v3344
    %v3544 = vunpack.c.l.b16 %v3345
    %v3545 = vunpack.c.l.b16 %v3346
    %v3546 = vunpack.c.l.b16 %v3347
    %v3547 = vunpack.c.l.b16 %v3348
    %v3548 = vunpack.c.l.b16 %v3349
    %v3549 = vunpack.c.l.b16 %v3350
    %v3550 = vunpack.c.l.b16 %v3351
    %v3551 = vunpack.c.l.b16 %v3352
    %v3552 = vunpack.c.l.b16 %v3353
    %v3553 = vunpack.c.l.b16 %v3354
    %v3554 = vunpack.c.l.b16 %v3355
    %v3555 = vunpack.c.l.b16 %v3356
    %v3556 = vunpack.c.l.b16 %v3357
    %v3557 = vunpack.c.l.b16 %v3358
    %v3558 = vunpack.c.l.b16 %v3359
    %v3559 = vunpack.c.l.b16 %v3360
    %v3560 = vunpack.c.l.b16 %v3361
    %v3561 = vunpack.c.l.b16 %v3362
    %v3562 = vunpack.c.l.b16 %v3363
    %v3563 = vunpack.c.l.b16 %v3364
    %v3564 = vunpack.c.l.b16 %v3365
    %v3565 = vunpack.c.l.b16 %v3366
    %v3566 = vunpack.c.l.b16 %v3367
    %v3567 = vunpack.c.l.b16 %v3368
    %v3568 = vunpack.c.l.b16 %v3369
    %v3569 = vunpack.c.l.b16 %v3370
    %v3570 = vunpack.c.l.b16 %v3371
    %v3571 = vunpack.c.l.b16 %v3372
    %v3572 = vunpack.c.l.b16 %v3373
    %v3573 = vunpack.c.l.b16 %v3374
    %v3574 = vunpack.c.l.b16 %v3375
    %v3575 = vunpack.c.l.b16 %v3376
    %v3576 = vunpack.c.l.b16 %v3377
    %v3577 = vunpack.c.l.b16 %v3378
    %v3578 = vunpack.c.l.b16 %v3379
    %v3579 = vunpack.c.l.b16 %v3380
    %v3580 = vunpack.c.l.b16 %v3381
    %v3581 = vunpack.c.l.b16 %v3382
    %v3582 = vunpack.c.l.b16 %v3383
    %v3583 = vunpack.c.l.b16 %v3384
    %v3584 = vunpack.c.l.b16 %v3385
    %v3585 = vunpack.c.l.b16 %v3386
    %v3586 = vunpack.c.l.b16 %v3387
    %v3587 = vunpack.c.l.b16 %v3388
    %v3588 = vunpack.c.l.b16 %v3389
    %v3589 = vunpack.c.l.b16 %v3390
    %v3590 = vpack.c.b16 %v3495, %v3494
    %v3591 = vpack.c.b16 %v3497, %v3496
    %v3592 = vpack.c.b16 %v3499, %v3498
    %v3593 = vpack.c.b16 %v3501, %v3500
    %v3594 = vpack.c.b16 %v3503, %v3502
    %v3595 = vpack.c.b16 %v3505, %v3504
    %v3596 = vpack.c.b16 %v3507, %v3506
    %v3597 = vpack.c.b16 %v3509, %v3508
    %v3598 = vpack.c.b16 %v3511, %v3510
    %v3599 = vpack.c.b16 %v3513, %v3512
    %v3600 = vpack.c.b16 %v3515, %v3514
    %v3601 = vpack.c.b16 %v3517, %v3516
    %v3602 = vpack.c.b16 %v3519, %v3518
    %v3603 = vpack.c.b16 %v3521, %v3520
    %v3604 = vpack.c.b16 %v3523, %v3522
    %v3605 = vpack.c.b16 %v3525, %v3524
    %v3606 = vpack.c.b16 %v3527, %v3526
    %v3607 = vpack.c.b16 %v3529, %v3528
    %v3608 = vpack.c.b16 %v3531, %v3530
    %v3609 = vpack.c.b16 %v3533, %v3532
    %v3610 = vpack.c.b16 %v3535, %v3534
    %v3611 = vpack.c.b16 %v3537, %v3536
    %v3612 = vpack.c.b16 %v3539, %v3538
    %v3613 = vpack.c.b16 %v3541, %v3540
    %v3614 = vpack.c.b16 %v3543, %v3542
    %v3615 = vpack.c.b16 %v3545, %v3544
    %v3616 = vpack.c.b16 %v3547, %v3546
    %v3617 = vpack.c.b16 %v3549, %v3548
    %v3618 = vpack.c.b16 %v3551, %v3550
    %v3619 = vpack.c.b16 %v3553, %v3552
    %v3620 = vpack.c.b16 %v3555, %v3554
    %v3621 = vpack.c.b16 %v3557, %v3556
    %v3622 = vpack.c.b16 %v3559, %v3558
    %v3623 = vpack.c.b16 %v3561, %v3560
    %v3624 = vpack.c.b16 %v3563, %v3562
    %v3625 = vpack.c.b16 %v3565, %v3564
    %v3626 = vpack.c.b16 %v3567, %v3566
    %v3627 = vpack.c.b16 %v3569, %v3568
    %v3628 = vpack.c.b16 %v3571, %v3570
    %v3629 = vpack.c.b16 %v3573, %v3572
    %v3630 = vpack.c.b16 %v3575, %v3574
    %v3631 = vpack.c.b16 %v3577, %v3576
    %v3632 = vpack.c.b16 %v3579, %v3578
    %v3633 = vpack.c.b16 %v3581, %v3580
    %v3634 = vpack.c.b16 %v3583, %v3582
    %v3635 = vpack.c.b16 %v3585, %v3584
    %v3636 = vpack.c.b16 %v3587, %v3586
    %v3637 = vpack.c.b16 %v3589, %v3588
    %3686 = vmatprep.subr.bf16.mxu0 0
    %3687 = vmatpush1.bf16.msra.mxu0 %v3597
    %3688 = vmatprep.subr.bf16.mxu0 0
    %3689 = vmatpush1.bf16.msra.mxu0 %v3596
    %3690 = vmatprep.subr.bf16.mxu0 0
    %3691 = vmatpush1.bf16.msra.mxu0 %v3595
    %3692 = vmatprep.subr.bf16.mxu0 0
    %3693 = vmatpush1.bf16.msra.mxu0 %v3594
    %3694 = vmatprep.subr.bf16.mxu0 0
    %3695 = vmatpush1.bf16.msra.mxu0 %v3593
    %3696 = vmatprep.subr.bf16.mxu0 0
    %3697 = vmatpush1.bf16.msra.mxu0 %v3592
    %3698 = vmatprep.subr.bf16.mxu0 0
    %3699 = vmatpush1.bf16.msra.mxu0 %v3591
    %3700 = vmatprep.subr.bf16.mxu0 0
    %3701 = vmatpush1.bf16.msra.mxu0 %v3590
    %3702 = vmatprep.subr.bf16.mxu0 0
    %3703 = vmatpush2.bf16.msra.mxu0 %v3605
    %3704 = vmatprep.subr.bf16.mxu0 0
    %3705 = vmatpush2.bf16.msra.mxu0 %v3604
    %3706 = vmatprep.subr.bf16.mxu0 0
    %3707 = vmatpush2.bf16.msra.mxu0 %v3603
    %3708 = vmatprep.subr.bf16.mxu0 0
    %3709 = vmatpush2.bf16.msra.mxu0 %v3602
    %3710 = vmatprep.subr.bf16.mxu0 0
    %3711 = vmatpush2.bf16.msra.mxu0 %v3601
    %3712 = vmatprep.subr.bf16.mxu0 0
    %3713 = vmatpush2.bf16.msra.mxu0 %v3600
    %3714 = vmatprep.subr.bf16.mxu0 0
    %3715 = vmatpush2.bf16.msra.mxu0 %v3599
    %3716 = vmatprep.subr.bf16.mxu0 0
    %3717 = vmatpush2.bf16.msra.mxu0 %v3598
    %3718 = vmatprep.mubr.bf16.mxu0 %v3248
    %3719 = vmatmul.mubr.bf16.gmra.mxu0 %v3247
    %v3720 = vpop.f32.mrf.mxu0
    %v3721 = vadd.f32 %v3396, %v3720
    %v3722 = vpop.f32.mrf.mxu0
    %v3723 = vpop.f32.mrf.mxu0
    %v3724 = vadd.f32 %v3396, %v3723
    %v3725 = vpop.f32.mrf.mxu0
    %3726 = vmatprep.mubr.bf16.mxu0 %v3254
    %3727 = vmatmul.mubr.bf16.gmra.mxu0 %v3253
    %v3728 = vpop.f32.mrf.mxu0
    %v3729 = vadd.f32 %v3396, %v3728
    %v3730 = vpop.f32.mrf.mxu0
    %v3731 = vpop.f32.mrf.mxu0
    %v3732 = vadd.f32 %v3396, %v3731
    %v3733 = vpop.f32.mrf.mxu0
    %3734 = vmatprep.mubr.bf16.mxu0 %v3260
    %3735 = vmatmul.mubr.bf16.gmra.mxu0 %v3259
    %v3736 = vpop.f32.mrf.mxu0
    %v3737 = vadd.f32 %v3396, %v3736
    %v3738 = vpop.f32.mrf.mxu0
    %v3739 = vpop.f32.mrf.mxu0
    %v3740 = vadd.f32 %v3396, %v3739
    %v3741 = vpop.f32.mrf.mxu0
    %3742 = vmatprep.mubr.bf16.mxu0 %v3266
    %3743 = vmatmul.mubr.bf16.gmra.mxu0 %v3265
    %v3744 = vpop.f32.mrf.mxu0
    %v3745 = vadd.f32 %v3396, %v3744
    %v3746 = vpop.f32.mrf.mxu0
    %v3747 = vpop.f32.mrf.mxu0
    %v3748 = vadd.f32 %v3396, %v3747
    %v3749 = vpop.f32.mrf.mxu0
    %3750 = vmatprep.mubr.bf16.mxu0 %v3272
    %3751 = vmatmul.mubr.bf16.gmra.mxu0 %v3271
    %v3752 = vpop.f32.mrf.mxu0
    %v3753 = vadd.f32 %v3396, %v3752
    %v3754 = vpop.f32.mrf.mxu0
    %v3755 = vpop.f32.mrf.mxu0
    %v3756 = vadd.f32 %v3396, %v3755
    %v3757 = vpop.f32.mrf.mxu0
    %3758 = vmatprep.mubr.bf16.mxu0 %v3278
    %3759 = vmatmul.mubr.bf16.gmra.mxu0 %v3277
    %v3760 = vpop.f32.mrf.mxu0
    %v3761 = vadd.f32 %v3396, %v3760
    %v3762 = vpop.f32.mrf.mxu0
    %v3763 = vpop.f32.mrf.mxu0
    %v3764 = vadd.f32 %v3396, %v3763
    %v3765 = vpop.f32.mrf.mxu0
    %3766 = vmatprep.mubr.bf16.mxu0 %v3284
    %3767 = vmatmul.mubr.bf16.gmra.mxu0 %v3283
    %v3768 = vpop.f32.mrf.mxu0
    %v3769 = vadd.f32 %v3396, %v3768
    %v3770 = vpop.f32.mrf.mxu0
    %v3771 = vpop.f32.mrf.mxu0
    %v3772 = vadd.f32 %v3396, %v3771
    %v3773 = vpop.f32.mrf.mxu0
    %3774 = vmatprep.mubr.bf16.mxu0 %v3290
    %3775 = vmatmul.mubr.bf16.gmra.mxu0 %v3289
    %v3776 = vpop.f32.mrf.mxu0
    %v3777 = vadd.f32 %v3396, %v3776
    %v3778 = vpop.f32.mrf.mxu0
    %v3779 = vpop.f32.mrf.mxu0
    %v3780 = vadd.f32 %v3396, %v3779
    %v3781 = vpop.f32.mrf.mxu0
    %3782 = vdwg.mxu0
    %3783 = vmatprep.subr.bf16.mxu0 0
    %3784 = vmatpush1.bf16.msra.mxu0 %v3613
    %3785 = vmatprep.subr.bf16.mxu0 0
    %3786 = vmatpush1.bf16.msra.mxu0 %v3612
    %3787 = vmatprep.subr.bf16.mxu0 0
    %3788 = vmatpush1.bf16.msra.mxu0 %v3611
    %3789 = vmatprep.subr.bf16.mxu0 0
    %3790 = vmatpush1.bf16.msra.mxu0 %v3610
    %3791 = vmatprep.subr.bf16.mxu0 0
    %3792 = vmatpush1.bf16.msra.mxu0 %v3609
    %3793 = vmatprep.subr.bf16.mxu0 0
    %3794 = vmatpush1.bf16.msra.mxu0 %v3608
    %3795 = vmatprep.subr.bf16.mxu0 0
    %3796 = vmatpush1.bf16.msra.mxu0 %v3607
    %3797 = vmatprep.subr.bf16.mxu0 0
    %3798 = vmatpush1.bf16.msra.mxu0 %v3606
    %3799 = vmatprep.subr.bf16.mxu0 0
    %3800 = vmatpush2.bf16.msra.mxu0 %v3621
    %3801 = vmatprep.subr.bf16.mxu0 0
    %3802 = vmatpush2.bf16.msra.mxu0 %v3620
    %3803 = vmatprep.subr.bf16.mxu0 0
    %3804 = vmatpush2.bf16.msra.mxu0 %v3619
    %3805 = vmatprep.subr.bf16.mxu0 0
    %3806 = vmatpush2.bf16.msra.mxu0 %v3618
    %3807 = vmatprep.subr.bf16.mxu0 0
    %3808 = vmatpush2.bf16.msra.mxu0 %v3617
    %3809 = vmatprep.subr.bf16.mxu0 0
    %3810 = vmatpush2.bf16.msra.mxu0 %v3616
    %3811 = vmatprep.subr.bf16.mxu0 0
    %3812 = vmatpush2.bf16.msra.mxu0 %v3615
    %3813 = vmatprep.subr.bf16.mxu0 0
    %3814 = vmatpush2.bf16.msra.mxu0 %v3614
    %3815 = vmatprep.mubr.bf16.mxu0 %v3250
    %3816 = vmatmul.mubr.bf16.gmra.mxu0 %v3249
    %v3817 = vpop.f32.mrf.mxu0
    %v3818 = vadd.f32 %v3721, %v3817
    %v3819 = vpop.f32.mrf.mxu0
    %v3820 = vpop.f32.mrf.mxu0
    %v3821 = vadd.f32 %v3724, %v3820
    %v3822 = vpop.f32.mrf.mxu0
    %3823 = vmatprep.mubr.bf16.mxu0 %v3256
    %3824 = vmatmul.mubr.bf16.gmra.mxu0 %v3255
    %v3825 = vpop.f32.mrf.mxu0
    %v3826 = vadd.f32 %v3729, %v3825
    %v3827 = vpop.f32.mrf.mxu0
    %v3828 = vpop.f32.mrf.mxu0
    %v3829 = vadd.f32 %v3732, %v3828
    %v3830 = vpop.f32.mrf.mxu0
    %3831 = vmatprep.mubr.bf16.mxu0 %v3262
    %3832 = vmatmul.mubr.bf16.gmra.mxu0 %v3261
    %v3833 = vpop.f32.mrf.mxu0
    %v3834 = vadd.f32 %v3737, %v3833
    %v3835 = vpop.f32.mrf.mxu0
    %v3836 = vpop.f32.mrf.mxu0
    %v3837 = vadd.f32 %v3740, %v3836
    %v3838 = vpop.f32.mrf.mxu0
    %3839 = vmatprep.mubr.bf16.mxu0 %v3268
    %3840 = vmatmul.mubr.bf16.gmra.mxu0 %v3267
    %v3841 = vpop.f32.mrf.mxu0
    %v3842 = vadd.f32 %v3745, %v3841
    %v3843 = vpop.f32.mrf.mxu0
    %v3844 = vpop.f32.mrf.mxu0
    %v3845 = vadd.f32 %v3748, %v3844
    %v3846 = vpop.f32.mrf.mxu0
    %3847 = vmatprep.mubr.bf16.mxu0 %v3274
    %3848 = vmatmul.mubr.bf16.gmra.mxu0 %v3273
    %v3849 = vpop.f32.mrf.mxu0
    %v3850 = vadd.f32 %v3753, %v3849
    %v3851 = vpop.f32.mrf.mxu0
    %v3852 = vpop.f32.mrf.mxu0
    %v3853 = vadd.f32 %v3756, %v3852
    %v3854 = vpop.f32.mrf.mxu0
    %3855 = vmatprep.mubr.bf16.mxu0 %v3280
    %3856 = vmatmul.mubr.bf16.gmra.mxu0 %v3279
    %v3857 = vpop.f32.mrf.mxu0
    %v3858 = vadd.f32 %v3761, %v3857
    %v3859 = vpop.f32.mrf.mxu0
    %v3860 = vpop.f32.mrf.mxu0
    %v3861 = vadd.f32 %v3764, %v3860
    %v3862 = vpop.f32.mrf.mxu0
    %3863 = vmatprep.mubr.bf16.mxu0 %v3286
    %3864 = vmatmul.mubr.bf16.gmra.mxu0 %v3285
    %v3865 = vpop.f32.mrf.mxu0
    %v3866 = vadd.f32 %v3769, %v3865
    %v3867 = vpop.f32.mrf.mxu0
    %v3868 = vpop.f32.mrf.mxu0
    %v3869 = vadd.f32 %v3772, %v3868
    %v3870 = vpop.f32.mrf.mxu0
    %3871 = vmatprep.mubr.bf16.mxu0 %v3292
    %3872 = vmatmul.mubr.bf16.gmra.mxu0 %v3291
    %v3873 = vpop.f32.mrf.mxu0
    %v3874 = vadd.f32 %v3777, %v3873
    %v3875 = vpop.f32.mrf.mxu0
    %v3876 = vpop.f32.mrf.mxu0
    %v3877 = vadd.f32 %v3780, %v3876
    %v3878 = vpop.f32.mrf.mxu0
    %3879 = vdwg.mxu0
    %3880 = vmatprep.subr.bf16.mxu0 0
    %3881 = vmatpush1.bf16.msra.mxu0 %v3629
    %3882 = vmatprep.subr.bf16.mxu0 0
    %3883 = vmatpush1.bf16.msra.mxu0 %v3628
    %3884 = vmatprep.subr.bf16.mxu0 0
    %3885 = vmatpush1.bf16.msra.mxu0 %v3627
    %3886 = vmatprep.subr.bf16.mxu0 0
    %3887 = vmatpush1.bf16.msra.mxu0 %v3626
    %3888 = vmatprep.subr.bf16.mxu0 0
    %3889 = vmatpush1.bf16.msra.mxu0 %v3625
    %3890 = vmatprep.subr.bf16.mxu0 0
    %3891 = vmatpush1.bf16.msra.mxu0 %v3624
    %3892 = vmatprep.subr.bf16.mxu0 0
    %3893 = vmatpush1.bf16.msra.mxu0 %v3623
    %3894 = vmatprep.subr.bf16.mxu0 0
    %3895 = vmatpush1.bf16.msra.mxu0 %v3622
    %3896 = vmatprep.subr.bf16.mxu0 0
    %3897 = vmatpush2.bf16.msra.mxu0 %v3637
    %3898 = vmatprep.subr.bf16.mxu0 0
    %3899 = vmatpush2.bf16.msra.mxu0 %v3636
    %3900 = vmatprep.subr.bf16.mxu0 0
    %3901 = vmatpush2.bf16.msra.mxu0 %v3635
    %3902 = vmatprep.subr.bf16.mxu0 0
    %3903 = vmatpush2.bf16.msra.mxu0 %v3634
    %3904 = vmatprep.subr.bf16.mxu0 0
    %3905 = vmatpush2.bf16.msra.mxu0 %v3633
    %3906 = vmatprep.subr.bf16.mxu0 0
    %3907 = vmatpush2.bf16.msra.mxu0 %v3632
    %3908 = vmatprep.subr.bf16.mxu0 0
    %3909 = vmatpush2.bf16.msra.mxu0 %v3631
    %3910 = vmatprep.subr.bf16.mxu0 0
    %3911 = vmatpush2.bf16.msra.mxu0 %v3630
    %3912 = vmatprep.mubr.bf16.mxu0 %v3252
    %3913 = vmatmul.mubr.bf16.gmra.mxu0 %v3251
    %v3914 = vpop.f32.mrf.mxu0
    %v3915 = vadd.f32 %v3818, %v3914
    %v3916 = vpop.f32.mrf.mxu0
    %v3917 = vpop.f32.mrf.mxu0
    %v3918 = vadd.f32 %v3821, %v3917
    %v3919 = vpop.f32.mrf.mxu0
    %3920 = vmatprep.mubr.bf16.mxu0 %v3258
    %3921 = vmatmul.mubr.bf16.gmra.mxu0 %v3257
    %v3922 = vpop.f32.mrf.mxu0
    %v3923 = vadd.f32 %v3826, %v3922
    %v3924 = vpop.f32.mrf.mxu0
    %v3925 = vpop.f32.mrf.mxu0
    %v3926 = vadd.f32 %v3829, %v3925
    %v3927 = vpop.f32.mrf.mxu0
    %3928 = vmatprep.mubr.bf16.mxu0 %v3264
    %3929 = vmatmul.mubr.bf16.gmra.mxu0 %v3263
    %v3930 = vpop.f32.mrf.mxu0
    %v3931 = vadd.f32 %v3834, %v3930
    %v3932 = vpop.f32.mrf.mxu0
    %v3933 = vpop.f32.mrf.mxu0
    %v3934 = vadd.f32 %v3837, %v3933
    %v3935 = vpop.f32.mrf.mxu0
    %3936 = vmatprep.mubr.bf16.mxu0 %v3270
    %3937 = vmatmul.mubr.bf16.gmra.mxu0 %v3269
    %v3938 = vpop.f32.mrf.mxu0
    %v3939 = vadd.f32 %v3842, %v3938
    %v3940 = vpop.f32.mrf.mxu0
    %v3941 = vpop.f32.mrf.mxu0
    %v3942 = vadd.f32 %v3845, %v3941
    %v3943 = vpop.f32.mrf.mxu0
    %3944 = vmatprep.mubr.bf16.mxu0 %v3276
    %3945 = vmatmul.mubr.bf16.gmra.mxu0 %v3275
    %v3946 = vpop.f32.mrf.mxu0
    %v3947 = vadd.f32 %v3850, %v3946
    %v3948 = vpop.f32.mrf.mxu0
    %v3949 = vpop.f32.mrf.mxu0
    %v3950 = vadd.f32 %v3853, %v3949
    %v3951 = vpop.f32.mrf.mxu0
    %3952 = vmatprep.mubr.bf16.mxu0 %v3282
    %3953 = vmatmul.mubr.bf16.gmra.mxu0 %v3281
    %v3954 = vpop.f32.mrf.mxu0
    %v3955 = vadd.f32 %v3858, %v3954
    %v3956 = vpop.f32.mrf.mxu0
    %v3957 = vpop.f32.mrf.mxu0
    %v3958 = vadd.f32 %v3861, %v3957
    %v3959 = vpop.f32.mrf.mxu0
    %3960 = vmatprep.mubr.bf16.mxu0 %v3288
    %3961 = vmatmul.mubr.bf16.gmra.mxu0 %v3287
    %v3962 = vpop.f32.mrf.mxu0
    %v3963 = vadd.f32 %v3866, %v3962
    %v3964 = vpop.f32.mrf.mxu0
    %v3965 = vpop.f32.mrf.mxu0
    %v3966 = vadd.f32 %v3869, %v3965
    %v3967 = vpop.f32.mrf.mxu0
    %3968 = vmatprep.mubr.bf16.mxu0 %v3294
    %3969 = vmatmul.mubr.bf16.gmra.mxu0 %v3293
    %v3970 = vpop.f32.mrf.mxu0
    %v3971 = vadd.f32 %v3874, %v3970
    %v3972 = vpop.f32.mrf.mxu0
    %v3973 = vpop.f32.mrf.mxu0
    %v3974 = vadd.f32 %v3877, %v3973
    %v3975 = vpop.f32.mrf.mxu0
    %3976 = vdwg.mxu0
    %3977 = vst [vmem:[#allocation11] sm:$0xff] %v3915
    %3978 = vst [vmem:[#allocation11 + $0x8] sm:$0xff] %v3918
    %3979 = vst [vmem:[#allocation11 + $0x10] sm:$0xff] %v3923
    %3980 = vst [vmem:[#allocation11 + $0x18] sm:$0xff] %v3926
    %3981 = vst [vmem:[#allocation11 + $0x20] sm:$0xff] %v3931
    %3982 = vst [vmem:[#allocation11 + $0x28] sm:$0xff] %v3934
    %3983 = vst [vmem:[#allocation11 + $0x30] sm:$0xff] %v3939
    %3984 = vst [vmem:[#allocation11 + $0x38] sm:$0xff] %v3942
    %3985 = vst [vmem:[#allocation11 + $0x40] sm:$0xff] %v3947
    %3986 = vst [vmem:[#allocation11 + $0x48] sm:$0xff] %v3950
    %3987 = vst [vmem:[#allocation11 + $0x50] sm:$0xff] %v3955
    %3988 = vst [vmem:[#allocation11 + $0x58] sm:$0xff] %v3958
    %3989 = vst [vmem:[#allocation11 + $0x60] sm:$0xff] %v3963
    %3990 = vst [vmem:[#allocation11 + $0x68] sm:$0xff] %v3966
    %3991 = vst [vmem:[#allocation11 + $0x70] sm:$0xff] %v3971
    %3992 = vst [vmem:[#allocation11 + $0x78] sm:$0xff] %v3974
    // Predicated region
    $region42: #{tpu_custom_call.1} parent=1 // pred_check
      _
    $region43: #{tpu_custom_call.1} parent=1 // pred_check_branch
      %3994 = sbr.rel (0) target = $region45
    $region44: #{tpu_custom_call.1} parent=1 // pred_region
      %s3996 = ssub.s32 2048, 2048
      %3997 = vsyncadd [#allocation4], %s3996
      %s3998 = sshll.u32 [#allocation11], 4
      %s3999 = int_to_ptr.vmem [resolvable:$true] %s3998
      %4004 = dma.vmem_to_hbm [thread:$0]  %s3999, 2048, %s5, [#allocation4], 128, 128, 8
    $region45: #{tpu_custom_call.1} parent=1 // pred_fallthru
      _
    // Predicated region
    $region46: #{tpu_custom_call.1} parent=1 // pred_check
      _
    $region47: #{tpu_custom_call.1} parent=1 // pred_check_branch
      %4006 = sbr.rel (0) target = $region49
    $region48: #{tpu_custom_call.1} parent=1 // pred_region
      %4007 = dma.done [#allocation4], 2048
    $region49: #{tpu_custom_call.1} parent=1 // pred_fallthru
      _
    %4008 = vsyncpa [#allocation3], 1
    %4009 = vsyncpa [#allocation6], 1
    %4010 = vsyncpa [#allocation9], 1
    %4011 = vsyncpa [#allocation4], 1

</llo_original>
